<compile_context>
chip_gen: v7x
topology: tpu7x:2x2x1
jax: 0.10.0
libtpu: 0.0.40
codegen_flags: <defaults>
</compile_context>

<pallas_src>
import functools

import jax
import jax.numpy as jnp
from jax.experimental import pallas as pl
from jax.experimental.pallas import tpu as pltpu


# ----------------------------------------------------------------------------
# Kernel 1: fused Conv3x3(pad=1) + bias + ReLU + MaxPool2x2 for one block.
#   One matmul over all 4 pool-window corners, then an aligned row-group max.
# ----------------------------------------------------------------------------

def _conv_pool_kernel(p_ref, w_ref, b_ref, o_ref, *, m):
    # p_ref: (4*m, 9*Cin) bf16 — corner-stacked im2col patches, rows ordered
    #        (corner, n, i, j) over the POOLED output grid.
    # w_ref: (9*Cin, Cout) bf16, b_ref: (1, Cout) f32, o_ref: (m, Cout) f32.
    y = jnp.dot(p_ref[...], w_ref[...], preferred_element_type=jnp.float32)
    y = jnp.maximum(y + b_ref[...], 0.0)
    # 2x2 maxpool == max over the 4 corner groups (m is a multiple of 8 -> aligned slices).
    o_ref[...] = jnp.maximum(jnp.maximum(y[0:m], y[m:2 * m]),
                             jnp.maximum(y[2 * m:3 * m], y[3 * m:4 * m]))


# ----------------------------------------------------------------------------
# Kernel 2: fused last conv block + GRU encoder (masked by length) + bilinear
#           + compare() scores.
# ----------------------------------------------------------------------------

def _gru_score_kernel(p4_ref, w4_ref, b4_ref, x_ref, len_ref,
                      wih_ref, whh_ref, bih_ref, bhh_ref, wb_ref, o_ref,
                      *, T, B, H, n_obj):
    # p4_ref: (4*B*n_obj, 9*Cin4) bf16 — last conv block's corner patches
    # w4_ref: (9*Cin4, F) bf16, b4_ref: (1, F) f32
    # x_ref:  (T*B, E) bf16 time-major embedded tokens
    # len_ref:(B, 1) int32 sequence lengths
    # wih_ref:(E, 3H) bf16, whh_ref:(H, 3H) bf16, biases (1, 3H) f32; gate order (r, z, n)
    # wb_ref: (H, F) bf16 bilinear weight (pre-transposed)
    # o_ref:  (B, n_obj) f32 scores

    # ---- last conv block (spatial 2x2 -> 1x1), features stay in VMEM ----
    m = B * n_obj
    y = jnp.dot(p4_ref[...], w4_ref[...], preferred_element_type=jnp.float32)
    y = jnp.maximum(y + b4_ref[...], 0.0)
    feats = jnp.maximum(jnp.maximum(y[0:m], y[m:2 * m]),
                        jnp.maximum(y[2 * m:3 * m], y[3 * m:4 * m]))      # (B*n_obj, F)

    # ---- GRU: hoisted input projection for ALL timesteps in one matmul ----
    xw = jnp.dot(x_ref[...], wih_ref[...],
                 preferred_element_type=jnp.float32) + bih_ref[...]       # (T*B, 3H) f32
    xw = xw.reshape(T, B, 3 * H)            # register value; leading-dim indexed per step

    whh = whh_ref[...]
    bhh = bhh_ref[...]
    lens = len_ref[...]                     # (B, 1) int32, loaded once

    h = jnp.zeros((B, H), jnp.float32)
    for t in range(T):                      # static unroll (T small & fixed)
        gx = xw[t]                          # (B, 3H) precomputed input gates
        gh = jnp.dot(h.astype(jnp.bfloat16), whh,
                     preferred_element_type=jnp.float32) + bhh
        r = jax.nn.sigmoid(gx[:, :H] + gh[:, :H])
        z = jax.nn.sigmoid(gx[:, H:2 * H] + gh[:, H:2 * H])
        n = jnp.tanh(gx[:, 2 * H:] + r * gh[:, 2 * H:])
        h_new = (1.0 - z) * n + z * h       # all gate math stays f32
        h = jnp.where(t < lens, h_new, h)   # freeze hidden past the true length

    # ---- score epilogue: lb = h @ Wb ; scores[b,j] = <feats[b,j], lb[b]> ----
    lb = jnp.dot(h.astype(jnp.bfloat16), wb_ref[...],
                 preferred_element_type=jnp.float32)                      # (B, F)
    feats3 = feats.reshape(B, n_obj, feats.shape[-1])                     # (B, n_obj, F)
    o_ref[...] = jnp.sum(feats3 * lb[:, None, :], axis=-1)                # (B, n_obj)


# ----------------------------------------------------------------------------
# Wrappers (layout plumbing in XLA glue, hot math in Pallas)
# ----------------------------------------------------------------------------

def _build_corner_patches(x):
    """x: (N, H, W, Cin) NHWC -> corner-stacked im2col (4*N*Ho*Wo, 9*Cin) bf16."""
    N, H, W, Cin = x.shape
    Ho, Wo = H // 2, W // 2
    M = N * Ho * Wo
    xp = jnp.pad(x, ((0, 0), (1, 1), (1, 1), (0, 0)))
    corners = []
    for a in range(2):
        for c in range(2):
            taps = [xp[:, a + dy:a + dy + H:2, c + dx:c + dx + W:2, :]
                    for dy in range(3) for dx in range(3)]
            corners.append(jnp.concatenate(taps, axis=-1).reshape(M, 9 * Cin))
    patches = jnp.concatenate(corners, axis=0).astype(jnp.bfloat16)       # (4*M, 9*Cin)
    return patches, M


def conv_pool_block(x, w, b):
    """Fused Conv3x3(pad=1)+bias+ReLU+MaxPool2x2.  x: (N, H, W, Cin) NHWC."""
    N, H, W, Cin = x.shape
    Cout = w.shape[-1]
    patches, M = _build_corner_patches(x)
    wmat = w.reshape(9 * Cin, Cout).astype(jnp.bfloat16)

    pooled = pl.pallas_call(
        functools.partial(_conv_pool_kernel, m=M),
        out_shape=jax.ShapeDtypeStruct((M, Cout), jnp.float32),
        in_specs=[pl.BlockSpec(memory_space=pltpu.MemorySpace.VMEM)] * 3,
        out_specs=pl.BlockSpec(memory_space=pltpu.MemorySpace.VMEM),
    )(patches, wmat, b)
    return pooled.reshape(N, H // 2, W // 2, Cout)


def ecg_listener_forward(params, feats, lang, lang_length):
    B, n_obj, C, H, W = feats.shape
    hid = params["d_model"]
    conv = params["conv"]

    # Image encoder: all blocks but the last as standalone fused conv-pool kernels.
    x = jnp.transpose(feats.reshape(B * n_obj, C, H, W), (0, 2, 3, 1))    # NCHW -> NHWC
    for (w, b) in conv[:-1]:
        x = conv_pool_block(x, w, b)
    # Last block is fused into the GRU/score kernel below (final spatial is 2x2 -> 1x1).
    w4, b4 = conv[-1]
    cin4 = w4.shape[2]
    p4, m4 = _build_corner_patches(x)                                     # (4*B*n_obj, 9*cin4)
    assert m4 == B * n_obj
    w4m = w4.reshape(9 * cin4, -1).astype(jnp.bfloat16)
    # TODO(synk): nn.Dropout(p) skipped — identity at inference time.

    _, T = lang.shape
    emb = jnp.take(params["embedding"], lang, axis=0)                     # (B, T, E)
    E = emb.shape[-1]
    x_seq = jnp.transpose(emb, (1, 0, 2)).reshape(T * B, E).astype(jnp.bfloat16)
    lens = lang_length.astype(jnp.int32).reshape(B, 1)                    # (requires len >= 1)

    kernel = functools.partial(_gru_score_kernel, T=T, B=B, H=hid, n_obj=n_obj)
    scores = pl.pallas_call(
        kernel,
        out_shape=jax.ShapeDtypeStruct((B, n_obj), jnp.float32),
        in_specs=[pl.BlockSpec(memory_space=pltpu.MemorySpace.VMEM)] * 10,
        out_specs=pl.BlockSpec(memory_space=pltpu.MemorySpace.VMEM),
    )(p4, w4m, b4, x_seq, lens,
      params["gru_wih"].astype(jnp.bfloat16), params["gru_whh"].astype(jnp.bfloat16),
      params["gru_bih"], params["gru_bhh"], params["bilinear"].astype(jnp.bfloat16))
    return scores


# ----------------------------------------------------------------------------
# Deterministic parameter construction
# ----------------------------------------------------------------------------

def make_params(key, *, in_channels=3, hidden_channels=32, n_blocks=4,
                vocabulary=10, embedding_size=16, d_model=32):
    keys = jax.random.split(key, 4 * n_blocks + 8)
    ki = iter(range(len(keys)))

    conv = []
    cin = in_channels
    for _ in range(n_blocks):
        w = 0.1 * jax.random.normal(keys[next(ki)], (3, 3, cin, hidden_channels), jnp.float32)
        b = 0.1 * jax.random.normal(keys[next(ki)], (1, hidden_channels), jnp.float32)
        conv.append((w, b))
        cin = hidden_channels
    feat_size = hidden_channels  # 16x16 spatial -> 1x1 after 4 pools

    num_emb = vocabulary + 3
    emb_table = 0.1 * jax.random.normal(keys[next(ki)], (num_emb, embedding_size), jnp.float32)

    # GRU weights, gate order (r, z, n), concatenated along the gate axis.
    gru_wih = 0.1 * jax.random.normal(keys[next(ki)], (embedding_size, 3 * d_model), jnp.float32)
    gru_whh = 0.1 * jax.random.normal(keys[next(ki)], (d_model, 3 * d_model), jnp.float32)
    gru_bih = 0.1 * jax.random.normal(keys[next(ki)], (1, 3 * d_model), jnp.float32)
    gru_bhh = 0.1 * jax.random.normal(keys[next(ki)], (1, 3 * d_model), jnp.float32)

    # nn.Linear(d_model, feat_size, bias=False), stored pre-transposed as (d_model, feat_size).
    bilinear = 0.1 * jax.random.normal(keys[next(ki)], (d_model, feat_size), jnp.float32)

    return {
        "conv": conv,
        "embedding": emb_table,
        "gru_wih": gru_wih,
        "gru_whh": gru_whh,
        "gru_bih": gru_bih,
        "gru_bhh": gru_bhh,
        "bilinear": bilinear,
        "d_model": d_model,
        "feat_size": feat_size,
    }


# ----------------------------------------------------------------------------
# Main
# ----------------------------------------------------------------------------

if __name__ == "__main__":
    key = jax.random.PRNGKey(0)
    k_params, k_feats, k_lang = jax.random.split(key, 3)

    B, n_obj, C, H, W = 2, 4, 3, 16, 16
    T = 8
    vocabulary, embedding_size, d_model = 10, 16, 32

    params = make_params(k_params, in_channels=C, hidden_channels=32, n_blocks=4,
                         vocabulary=vocabulary, embedding_size=embedding_size,
                         d_model=d_model)

    feats = jax.random.normal(k_feats, (B, n_obj, C, H, W), jnp.float32)   # NCHW per object
    lang = jax.random.randint(k_lang, (B, T), 0, vocabulary + 3, jnp.int32)
    lang_length = jnp.array([T, 5], dtype=jnp.int32)

    fwd = jax.jit(functools.partial(ecg_listener_forward, params))
    scores = fwd(feats, lang, lang_length)
    scores = jax.block_until_ready(scores)

    assert scores.shape == (B, n_obj), scores.shape
    assert scores.dtype == jnp.float32
    print("KERNEL_OK")
</pallas_src>

<mosaic_0001>
module attributes {stable_mosaic.version = 11 : i64} {
  func.func @_conv_pool_kernel(%arg0: memref<2048x27xbf16, #tpu.memory_space<vmem>>, %arg1: memref<27x32xbf16, #tpu.memory_space<vmem>>, %arg2: memref<1x32xf32, #tpu.memory_space<vmem>>, %arg3: memref<512x32xf32, #tpu.memory_space<vmem>>) attributes {dimension_semantics = [], scalar_prefetch = 0 : i64, scratch_operands = 0 : i64, tpu.core_type = #tpu.core_type<tc>} {
    %c0 = arith.constant 0 : index
    %c0_0 = arith.constant 0 : index
    %0 = vector.load %arg0[%c0, %c0_0] : memref<2048x27xbf16, #tpu.memory_space<vmem>>, vector<2048x27xbf16>
    %c0_1 = arith.constant 0 : index
    %c0_2 = arith.constant 0 : index
    %1 = vector.load %arg1[%c0_1, %c0_2] : memref<27x32xbf16, #tpu.memory_space<vmem>>, vector<27x32xbf16>
    %cst = arith.constant dense<0.000000e+00> : vector<2048x32xf32>
    %2 = tpu.matmul %0, %1, %cst {dimension_numbers = #tpu.dot_dimension_numbers<[1], [0], [0], [1], [0, 0, 1, 1], [], []>} : vector<2048x27xbf16>, vector<27x32xbf16>, vector<2048x32xf32> -> vector<2048x32xf32>
    %c0_3 = arith.constant 0 : index
    %c0_4 = arith.constant 0 : index
    %3 = vector.load %arg2[%c0_3, %c0_4] : memref<1x32xf32, #tpu.memory_space<vmem>>, vector<1x32xf32>
    %4 = vector.broadcast %3 : vector<1x32xf32> to vector<2048x32xf32>
    %5 = arith.addf %2, %4 : vector<2048x32xf32>
    %cst_5 = arith.constant 0.000000e+00 : f32
    %6 = vector.broadcast %cst_5 : f32 to vector<2048x32xf32>
    %7 = arith.maximumf %5, %6 : vector<2048x32xf32>
    %8 = vector.extract_strided_slice %7 {offsets = [0, 0], sizes = [512, 32], strides = [1, 1]} : vector<2048x32xf32> to vector<512x32xf32>
    %9 = vector.extract_strided_slice %7 {offsets = [512, 0], sizes = [512, 32], strides = [1, 1]} : vector<2048x32xf32> to vector<512x32xf32>
    %10 = arith.maximumf %8, %9 : vector<512x32xf32>
    %11 = vector.extract_strided_slice %7 {offsets = [1024, 0], sizes = [512, 32], strides = [1, 1]} : vector<2048x32xf32> to vector<512x32xf32>
    %12 = vector.extract_strided_slice %7 {offsets = [1536, 0], sizes = [512, 32], strides = [1, 1]} : vector<2048x32xf32> to vector<512x32xf32>
    %13 = arith.maximumf %11, %12 : vector<512x32xf32>
    %14 = arith.maximumf %10, %13 : vector<512x32xf32>
    %c0_6 = arith.constant 0 : index
    %c0_7 = arith.constant 0 : index
    %15 = vector.load %arg3[%c0_6, %c0_7] : memref<512x32xf32, #tpu.memory_space<vmem>>, vector<512x32xf32>
    tpu.vector_store %arg3[%c0_6, %c0_7], %14 {strides = array<i32>} : memref<512x32xf32, #tpu.memory_space<vmem>>, vector<512x32xf32>,
    return
  }
}

module attributes {stable_mosaic.version = 11 : i64} {
  func.func @_conv_pool_kernel(%arg0: memref<512x288xbf16, #tpu.memory_space<vmem>>, %arg1: memref<288x32xbf16, #tpu.memory_space<vmem>>, %arg2: memref<1x32xf32, #tpu.memory_space<vmem>>, %arg3: memref<128x32xf32, #tpu.memory_space<vmem>>) attributes {dimension_semantics = [], scalar_prefetch = 0 : i64, scratch_operands = 0 : i64, tpu.core_type = #tpu.core_type<tc>} {
    %c0 = arith.constant 0 : index
    %c0_0 = arith.constant 0 : index
    %0 = vector.load %arg0[%c0, %c0_0] : memref<512x288xbf16, #tpu.memory_space<vmem>>, vector<512x288xbf16>
    %c0_1 = arith.constant 0 : index
    %c0_2 = arith.constant 0 : index
    %1 = vector.load %arg1[%c0_1, %c0_2] : memref<288x32xbf16, #tpu.memory_space<vmem>>, vector<288x32xbf16>
    %cst = arith.constant dense<0.000000e+00> : vector<512x32xf32>
    %2 = tpu.matmul %0, %1, %cst {dimension_numbers = #tpu.dot_dimension_numbers<[1], [0], [0], [1], [0, 0, 1, 1], [], []>} : vector<512x288xbf16>, vector<288x32xbf16>, vector<512x32xf32> -> vector<512x32xf32>
    %c0_3 = arith.constant 0 : index
    %c0_4 = arith.constant 0 : index
    %3 = vector.load %arg2[%c0_3, %c0_4] : memref<1x32xf32, #tpu.memory_space<vmem>>, vector<1x32xf32>
    %4 = vector.broadcast %3 : vector<1x32xf32> to vector<512x32xf32>
    %5 = arith.addf %2, %4 : vector<512x32xf32>
    %cst_5 = arith.constant 0.000000e+00 : f32
    %6 = vector.broadcast %cst_5 : f32 to vector<512x32xf32>
    %7 = arith.maximumf %5, %6 : vector<512x32xf32>
    %8 = vector.extract_strided_slice %7 {offsets = [0, 0], sizes = [128, 32], strides = [1, 1]} : vector<512x32xf32> to vector<128x32xf32>
    %9 = vector.extract_strided_slice %7 {offsets = [128, 0], sizes = [128, 32], strides = [1, 1]} : vector<512x32xf32> to vector<128x32xf32>
    %10 = arith.maximumf %8, %9 : vector<128x32xf32>
    %11 = vector.extract_strided_slice %7 {offsets = [256, 0], sizes = [128, 32], strides = [1, 1]} : vector<512x32xf32> to vector<128x32xf32>
    %12 = vector.extract_strided_slice %7 {offsets = [384, 0], sizes = [128, 32], strides = [1, 1]} : vector<512x32xf32> to vector<128x32xf32>
    %13 = arith.maximumf %11, %12 : vector<128x32xf32>
    %14 = arith.maximumf %10, %13 : vector<128x32xf32>
    %c0_6 = arith.constant 0 : index
    %c0_7 = arith.constant 0 : index
    %15 = vector.load %arg3[%c0_6, %c0_7] : memref<128x32xf32, #tpu.memory_space<vmem>>, vector<128x32xf32>
    tpu.vector_store %arg3[%c0_6, %c0_7], %14 {strides = array<i32>} : memref<128x32xf32, #tpu.memory_space<vmem>>, vector<128x32xf32>,
    return
  }
}

module attributes {stable_mosaic.version = 11 : i64} {
  func.func @_conv_pool_kernel(%arg0: memref<128x288xbf16, #tpu.memory_space<vmem>>, %arg1: memref<288x32xbf16, #tpu.memory_space<vmem>>, %arg2: memref<1x32xf32, #tpu.memory_space<vmem>>, %arg3: memref<32x32xf32, #tpu.memory_space<vmem>>) attributes {dimension_semantics = [], scalar_prefetch = 0 : i64, scratch_operands = 0 : i64, tpu.core_type = #tpu.core_type<tc>} {
    %c0 = arith.constant 0 : index
    %c0_0 = arith.constant 0 : index
    %0 = vector.load %arg0[%c0, %c0_0] : memref<128x288xbf16, #tpu.memory_space<vmem>>, vector<128x288xbf16>
    %c0_1 = arith.constant 0 : index
    %c0_2 = arith.constant 0 : index
    %1 = vector.load %arg1[%c0_1, %c0_2] : memref<288x32xbf16, #tpu.memory_space<vmem>>, vector<288x32xbf16>
    %cst = arith.constant dense<0.000000e+00> : vector<128x32xf32>
    %2 = tpu.matmul %0, %1, %cst {dimension_numbers = #tpu.dot_dimension_numbers<[1], [0], [0], [1], [0, 0, 1, 1], [], []>} : vector<128x288xbf16>, vector<288x32xbf16>, vector<128x32xf32> -> vector<128x32xf32>
    %c0_3 = arith.constant 0 : index
    %c0_4 = arith.constant 0 : index
    %3 = vector.load %arg2[%c0_3, %c0_4] : memref<1x32xf32, #tpu.memory_space<vmem>>, vector<1x32xf32>
    %4 = vector.broadcast %3 : vector<1x32xf32> to vector<128x32xf32>
    %5 = arith.addf %2, %4 : vector<128x32xf32>
    %cst_5 = arith.constant 0.000000e+00 : f32
    %6 = vector.broadcast %cst_5 : f32 to vector<128x32xf32>
    %7 = arith.maximumf %5, %6 : vector<128x32xf32>
    %8 = vector.extract_strided_slice %7 {offsets = [0, 0], sizes = [32, 32], strides = [1, 1]} : vector<128x32xf32> to vector<32x32xf32>
    %9 = vector.extract_strided_slice %7 {offsets = [32, 0], sizes = [32, 32], strides = [1, 1]} : vector<128x32xf32> to vector<32x32xf32>
    %10 = arith.maximumf %8, %9 : vector<32x32xf32>
    %11 = vector.extract_strided_slice %7 {offsets = [64, 0], sizes = [32, 32], strides = [1, 1]} : vector<128x32xf32> to vector<32x32xf32>
    %12 = vector.extract_strided_slice %7 {offsets = [96, 0], sizes = [32, 32], strides = [1, 1]} : vector<128x32xf32> to vector<32x32xf32>
    %13 = arith.maximumf %11, %12 : vector<32x32xf32>
    %14 = arith.maximumf %10, %13 : vector<32x32xf32>
    %c0_6 = arith.constant 0 : index
    %c0_7 = arith.constant 0 : index
    %15 = vector.load %arg3[%c0_6, %c0_7] : memref<32x32xf32, #tpu.memory_space<vmem>>, vector<32x32xf32>
    tpu.vector_store %arg3[%c0_6, %c0_7], %14 {strides = array<i32>} : memref<32x32xf32, #tpu.memory_space<vmem>>, vector<32x32xf32>,
    return
  }
}

module attributes {stable_mosaic.version = 11 : i64} {
  func.func @_gru_score_kernel(%arg0: memref<32x288xbf16, #tpu.memory_space<vmem>>, %arg1: memref<288x32xbf16, #tpu.memory_space<vmem>>, %arg2: memref<1x32xf32, #tpu.memory_space<vmem>>, %arg3: memref<16x16xbf16, #tpu.memory_space<vmem>>, %arg4: memref<2x1xi32, #tpu.memory_space<vmem>>, %arg5: memref<16x96xbf16, #tpu.memory_space<vmem>>, %arg6: memref<32x96xbf16, #tpu.memory_space<vmem>>, %arg7: memref<1x96xf32, #tpu.memory_space<vmem>>, %arg8: memref<1x96xf32, #tpu.memory_space<vmem>>, %arg9: memref<32x32xbf16, #tpu.memory_space<vmem>>, %arg10: memref<2x4xf32, #tpu.memory_space<vmem>>) attributes {dimension_semantics = [], scalar_prefetch = 0 : i64, scratch_operands = 0 : i64, tpu.core_type = #tpu.core_type<tc>} {
    %c0 = arith.constant 0 : index
    %c0_0 = arith.constant 0 : index
    %0 = vector.load %arg0[%c0, %c0_0] : memref<32x288xbf16, #tpu.memory_space<vmem>>, vector<32x288xbf16>
    %c0_1 = arith.constant 0 : index
    %c0_2 = arith.constant 0 : index
    %1 = vector.load %arg1[%c0_1, %c0_2] : memref<288x32xbf16, #tpu.memory_space<vmem>>, vector<288x32xbf16>
    %cst = arith.constant dense<0.000000e+00> : vector<32x32xf32>
    %2 = tpu.matmul %0, %1, %cst {dimension_numbers = #tpu.dot_dimension_numbers<[1], [0], [0], [1], [0, 0, 1, 1], [], []>} : vector<32x288xbf16>, vector<288x32xbf16>, vector<32x32xf32> -> vector<32x32xf32>
    %c0_3 = arith.constant 0 : index
    %c0_4 = arith.constant 0 : index
    %3 = vector.load %arg2[%c0_3, %c0_4] : memref<1x32xf32, #tpu.memory_space<vmem>>, vector<1x32xf32>
    %4 = vector.broadcast %3 : vector<1x32xf32> to vector<32x32xf32>
    %5 = arith.addf %2, %4 : vector<32x32xf32>
    %cst_5 = arith.constant 0.000000e+00 : f32
    %6 = vector.broadcast %cst_5 : f32 to vector<32x32xf32>
    %7 = arith.maximumf %5, %6 : vector<32x32xf32>
    %8 = vector.extract_strided_slice %7 {offsets = [0, 0], sizes = [8, 32], strides = [1, 1]} : vector<32x32xf32> to vector<8x32xf32>
    %9 = vector.extract_strided_slice %7 {offsets = [8, 0], sizes = [8, 32], strides = [1, 1]} : vector<32x32xf32> to vector<8x32xf32>
    %10 = arith.maximumf %8, %9 : vector<8x32xf32>
    %11 = vector.extract_strided_slice %7 {offsets = [16, 0], sizes = [8, 32], strides = [1, 1]} : vector<32x32xf32> to vector<8x32xf32>
    %12 = vector.extract_strided_slice %7 {offsets = [24, 0], sizes = [8, 32], strides = [1, 1]} : vector<32x32xf32> to vector<8x32xf32>
    %13 = arith.maximumf %11, %12 : vector<8x32xf32>
    %14 = arith.maximumf %10, %13 : vector<8x32xf32>
    %c0_6 = arith.constant 0 : index
    %c0_7 = arith.constant 0 : index
    %15 = vector.load %arg3[%c0_6, %c0_7] : memref<16x16xbf16, #tpu.memory_space<vmem>>, vector<16x16xbf16>
    %c0_8 = arith.constant 0 : index
    %c0_9 = arith.constant 0 : index
    %16 = vector.load %arg5[%c0_8, %c0_9] : memref<16x96xbf16, #tpu.memory_space<vmem>>, vector<16x96xbf16>
    %cst_10 = arith.constant dense<0.000000e+00> : vector<16x96xf32>
    %17 = tpu.matmul %15, %16, %cst_10 {dimension_numbers = #tpu.dot_dimension_numbers<[1], [0], [0], [1], [0, 0, 1, 1], [], []>} : vector<16x16xbf16>, vector<16x96xbf16>, vector<16x96xf32> -> vector<16x96xf32>
    %c0_11 = arith.constant 0 : index
    %c0_12 = arith.constant 0 : index
    %18 = vector.load %arg7[%c0_11, %c0_12] : memref<1x96xf32, #tpu.memory_space<vmem>>, vector<1x96xf32>
    %19 = vector.broadcast %18 : vector<1x96xf32> to vector<16x96xf32>
    %20 = arith.addf %17, %19 : vector<16x96xf32>
    %21 = vector.shape_cast %20 : vector<16x96xf32> to vector<8x2x96xf32>
    %c0_13 = arith.constant 0 : index
    %c0_14 = arith.constant 0 : index
    %22 = vector.load %arg6[%c0_13, %c0_14] : memref<32x96xbf16, #tpu.memory_space<vmem>>, vector<32x96xbf16>
    %c0_15 = arith.constant 0 : index
    %c0_16 = arith.constant 0 : index
    %23 = vector.load %arg8[%c0_15, %c0_16] : memref<1x96xf32, #tpu.memory_space<vmem>>, vector<1x96xf32>
    %c0_17 = arith.constant 0 : index
    %c0_18 = arith.constant 0 : index
    %24 = vector.load %arg4[%c0_17, %c0_18] : memref<2x1xi32, #tpu.memory_space<vmem>>, vector<2x1xi32>
    %cst_19 = arith.constant 0.000000e+00 : f32
    %25 = vector.broadcast %cst_19 : f32 to vector<2x32xf32>
    %26 = vector.extract_strided_slice %21 {offsets = [0, 0, 0], sizes = [1, 2, 96], strides = [1, 1, 1]} : vector<8x2x96xf32> to vector<1x2x96xf32>
    %27 = vector.shape_cast %26 : vector<1x2x96xf32> to vector<2x96xf32>
    %28 = arith.truncf %25 : vector<2x32xf32> to vector<2x32xbf16>
    %cst_20 = arith.constant dense<0.000000e+00> : vector<2x96xf32>
    %29 = tpu.matmul %28, %22, %cst_20 {dimension_numbers = #tpu.dot_dimension_numbers<[1], [0], [0], [1], [0, 0, 1, 1], [], []>} : vector<2x32xbf16>, vector<32x96xbf16>, vector<2x96xf32> -> vector<2x96xf32>
    %30 = vector.broadcast %23 : vector<1x96xf32> to vector<2x96xf32>
    %31 = arith.addf %29, %30 : vector<2x96xf32>
    %32 = vector.extract_strided_slice %27 {offsets = [0, 0], sizes = [2, 32], strides = [1, 1]} : vector<2x96xf32> to vector<2x32xf32>
    %33 = vector.extract_strided_slice %31 {offsets = [0, 0], sizes = [2, 32], strides = [1, 1]} : vector<2x96xf32> to vector<2x32xf32>
    %34 = arith.addf %32, %33 : vector<2x32xf32>
    %35 = arith.negf %34 : vector<2x32xf32>
    %36 = math.exp %35 : vector<2x32xf32>
    %cst_21 = arith.constant 1.000000e+00 : f32
    %37 = vector.broadcast %cst_21 : f32 to vector<2x32xf32>
    %38 = arith.addf %37, %36 : vector<2x32xf32>
    %39 = arith.divf %37, %38 : vector<2x32xf32>
    %40 = vector.extract_strided_slice %27 {offsets = [0, 32], sizes = [2, 32], strides = [1, 1]} : vector<2x96xf32> to vector<2x32xf32>
    %41 = vector.extract_strided_slice %31 {offsets = [0, 32], sizes = [2, 32], strides = [1, 1]} : vector<2x96xf32> to vector<2x32xf32>
    %42 = arith.addf %40, %41 : vector<2x32xf32>
    %43 = arith.negf %42 : vector<2x32xf32>
    %44 = math.exp %43 : vector<2x32xf32>
    %cst_22 = arith.constant 1.000000e+00 : f32
    %45 = vector.broadcast %cst_22 : f32 to vector<2x32xf32>
    %46 = arith.addf %45, %44 : vector<2x32xf32>
    %47 = arith.divf %45, %46 : vector<2x32xf32>
    %48 = vector.extract_strided_slice %27 {offsets = [0, 64], sizes = [2, 32], strides = [1, 1]} : vector<2x96xf32> to vector<2x32xf32>
    %49 = vector.extract_strided_slice %31 {offsets = [0, 64], sizes = [2, 32], strides = [1, 1]} : vector<2x96xf32> to vector<2x32xf32>
    %50 = arith.mulf %39, %49 : vector<2x32xf32>
    %51 = arith.addf %48, %50 : vector<2x32xf32>
    %52 = math.tanh %51 : vector<2x32xf32>
    %cst_23 = arith.constant 1.000000e+00 : f32
    %53 = vector.broadcast %cst_23 : f32 to vector<2x32xf32>
    %54 = arith.subf %53, %47 : vector<2x32xf32>
    %55 = arith.mulf %54, %52 : vector<2x32xf32>
    %56 = arith.mulf %47, %25 : vector<2x32xf32>
    %57 = arith.addf %55, %56 : vector<2x32xf32>
    %c0_i32 = arith.constant 0 : i32
    %58 = vector.broadcast %c0_i32 : i32 to vector<2x1xi32>
    %59 = arith.cmpi sgt, %24, %58 : vector<2x1xi32>
    %60 = vector.shape_cast %59 : vector<2x1xi1> to vector<2x1xi1>
    %61 = vector.broadcast %60 : vector<2x1xi1> to vector<2x32xi1>
    %62 = arith.select %61, %57, %25 : vector<2x32xi1>, vector<2x32xf32>
    %63 = vector.extract_strided_slice %21 {offsets = [1, 0, 0], sizes = [1, 2, 96], strides = [1, 1, 1]} : vector<8x2x96xf32> to vector<1x2x96xf32>
    %64 = vector.shape_cast %63 : vector<1x2x96xf32> to vector<2x96xf32>
    %65 = arith.truncf %62 : vector<2x32xf32> to vector<2x32xbf16>
    %cst_24 = arith.constant dense<0.000000e+00> : vector<2x96xf32>
    %66 = tpu.matmul %65, %22, %cst_24 {dimension_numbers = #tpu.dot_dimension_numbers<[1], [0], [0], [1], [0, 0, 1, 1], [], []>} : vector<2x32xbf16>, vector<32x96xbf16>, vector<2x96xf32> -> vector<2x96xf32>
    %67 = vector.broadcast %23 : vector<1x96xf32> to vector<2x96xf32>
    %68 = arith.addf %66, %67 : vector<2x96xf32>
    %69 = vector.extract_strided_slice %64 {offsets = [0, 0], sizes = [2, 32], strides = [1, 1]} : vector<2x96xf32> to vector<2x32xf32>
    %70 = vector.extract_strided_slice %68 {offsets = [0, 0], sizes = [2, 32], strides = [1, 1]} : vector<2x96xf32> to vector<2x32xf32>
    %71 = arith.addf %69, %70 : vector<2x32xf32>
    %72 = arith.negf %71 : vector<2x32xf32>
    %73 = math.exp %72 : vector<2x32xf32>
    %cst_25 = arith.constant 1.000000e+00 : f32
    %74 = vector.broadcast %cst_25 : f32 to vector<2x32xf32>
    %75 = arith.addf %74, %73 : vector<2x32xf32>
    %76 = arith.divf %74, %75 : vector<2x32xf32>
    %77 = vector.extract_strided_slice %64 {offsets = [0, 32], sizes = [2, 32], strides = [1, 1]} : vector<2x96xf32> to vector<2x32xf32>
    %78 = vector.extract_strided_slice %68 {offsets = [0, 32], sizes = [2, 32], strides = [1, 1]} : vector<2x96xf32> to vector<2x32xf32>
    %79 = arith.addf %77, %78 : vector<2x32xf32>
    %80 = arith.negf %79 : vector<2x32xf32>
    %81 = math.exp %80 : vector<2x32xf32>
    %cst_26 = arith.constant 1.000000e+00 : f32
    %82 = vector.broadcast %cst_26 : f32 to vector<2x32xf32>
    %83 = arith.addf %82, %81 : vector<2x32xf32>
    %84 = arith.divf %82, %83 : vector<2x32xf32>
    %85 = vector.extract_strided_slice %64 {offsets = [0, 64], sizes = [2, 32], strides = [1, 1]} : vector<2x96xf32> to vector<2x32xf32>
    %86 = vector.extract_strided_slice %68 {offsets = [0, 64], sizes = [2, 32], strides = [1, 1]} : vector<2x96xf32> to vector<2x32xf32>
    %87 = arith.mulf %76, %86 : vector<2x32xf32>
    %88 = arith.addf %85, %87 : vector<2x32xf32>
    %89 = math.tanh %88 : vector<2x32xf32>
    %cst_27 = arith.constant 1.000000e+00 : f32
    %90 = vector.broadcast %cst_27 : f32 to vector<2x32xf32>
    %91 = arith.subf %90, %84 : vector<2x32xf32>
    %92 = arith.mulf %91, %89 : vector<2x32xf32>
    %93 = arith.mulf %84, %62 : vector<2x32xf32>
    %94 = arith.addf %92, %93 : vector<2x32xf32>
    %c1_i32 = arith.constant 1 : i32
    %95 = vector.broadcast %c1_i32 : i32 to vector<2x1xi32>
    %96 = arith.cmpi sgt, %24, %95 : vector<2x1xi32>
    %97 = vector.shape_cast %96 : vector<2x1xi1> to vector<2x1xi1>
    %98 = vector.broadcast %97 : vector<2x1xi1> to vector<2x32xi1>
    %99 = arith.select %98, %94, %62 : vector<2x32xi1>, vector<2x32xf32>
    %100 = vector.extract_strided_slice %21 {offsets = [2, 0, 0], sizes = [1, 2, 96], strides = [1, 1, 1]} : vector<8x2x96xf32> to vector<1x2x96xf32>
    %101 = vector.shape_cast %100 : vector<1x2x96xf32> to vector<2x96xf32>
    %102 = arith.truncf %99 : vector<2x32xf32> to vector<2x32xbf16>
    %cst_28 = arith.constant dense<0.000000e+00> : vector<2x96xf32>
    %103 = tpu.matmul %102, %22, %cst_28 {dimension_numbers = #tpu.dot_dimension_numbers<[1], [0], [0], [1], [0, 0, 1, 1], [], []>} : vector<2x32xbf16>, vector<32x96xbf16>, vector<2x96xf32> -> vector<2x96xf32>
    %104 = vector.broadcast %23 : vector<1x96xf32> to vector<2x96xf32>
    %105 = arith.addf %103, %104 : vector<2x96xf32>
    %106 = vector.extract_strided_slice %101 {offsets = [0, 0], sizes = [2, 32], strides = [1, 1]} : vector<2x96xf32> to vector<2x32xf32>
    %107 = vector.extract_strided_slice %105 {offsets = [0, 0], sizes = [2, 32], strides = [1, 1]} : vector<2x96xf32> to vector<2x32xf32>
    %108 = arith.addf %106, %107 : vector<2x32xf32>
    %109 = arith.negf %108 : vector<2x32xf32>
    %110 = math.exp %109 : vector<2x32xf32>
    %cst_29 = arith.constant 1.000000e+00 : f32
    %111 = vector.broadcast %cst_29 : f32 to vector<2x32xf32>
    %112 = arith.addf %111, %110 : vector<2x32xf32>
    %113 = arith.divf %111, %112 : vector<2x32xf32>
    %114 = vector.extract_strided_slice %101 {offsets = [0, 32], sizes = [2, 32], strides = [1, 1]} : vector<2x96xf32> to vector<2x32xf32>
    %115 = vector.extract_strided_slice %105 {offsets = [0, 32], sizes = [2, 32], strides = [1, 1]} : vector<2x96xf32> to vector<2x32xf32>
    %116 = arith.addf %114, %115 : vector<2x32xf32>
    %117 = arith.negf %116 : vector<2x32xf32>
    %118 = math.exp %117 : vector<2x32xf32>
    %cst_30 = arith.constant 1.000000e+00 : f32
    %119 = vector.broadcast %cst_30 : f32 to vector<2x32xf32>
    %120 = arith.addf %119, %118 : vector<2x32xf32>
    %121 = arith.divf %119, %120 : vector<2x32xf32>
    %122 = vector.extract_strided_slice %101 {offsets = [0, 64], sizes = [2, 32], strides = [1, 1]} : vector<2x96xf32> to vector<2x32xf32>
    %123 = vector.extract_strided_slice %105 {offsets = [0, 64], sizes = [2, 32], strides = [1, 1]} : vector<2x96xf32> to vector<2x32xf32>
    %124 = arith.mulf %113, %123 : vector<2x32xf32>
    %125 = arith.addf %122, %124 : vector<2x32xf32>
    %126 = math.tanh %125 : vector<2x32xf32>
    %cst_31 = arith.constant 1.000000e+00 : f32
    %127 = vector.broadcast %cst_31 : f32 to vector<2x32xf32>
    %128 = arith.subf %127, %121 : vector<2x32xf32>
    %129 = arith.mulf %128, %126 : vector<2x32xf32>
    %130 = arith.mulf %121, %99 : vector<2x32xf32>
    %131 = arith.addf %129, %130 : vector<2x32xf32>
    %c2_i32 = arith.constant 2 : i32
    %132 = vector.broadcast %c2_i32 : i32 to vector<2x1xi32>
    %133 = arith.cmpi sgt, %24, %132 : vector<2x1xi32>
    %134 = vector.shape_cast %133 : vector<2x1xi1> to vector<2x1xi1>
    %135 = vector.broadcast %134 : vector<2x1xi1> to vector<2x32xi1>
    %136 = arith.select %135, %131, %99 : vector<2x32xi1>, vector<2x32xf32>
    %137 = vector.extract_strided_slice %21 {offsets = [3, 0, 0], sizes = [1, 2, 96], strides = [1, 1, 1]} : vector<8x2x96xf32> to vector<1x2x96xf32>
    %138 = vector.shape_cast %137 : vector<1x2x96xf32> to vector<2x96xf32>
    %139 = arith.truncf %136 : vector<2x32xf32> to vector<2x32xbf16>
    %cst_32 = arith.constant dense<0.000000e+00> : vector<2x96xf32>
    %140 = tpu.matmul %139, %22, %cst_32 {dimension_numbers = #tpu.dot_dimension_numbers<[1], [0], [0], [1], [0, 0, 1, 1], [], []>} : vector<2x32xbf16>, vector<32x96xbf16>, vector<2x96xf32> -> vector<2x96xf32>
    %141 = vector.broadcast %23 : vector<1x96xf32> to vector<2x96xf32>
    %142 = arith.addf %140, %141 : vector<2x96xf32>
    %143 = vector.extract_strided_slice %138 {offsets = [0, 0], sizes = [2, 32], strides = [1, 1]} : vector<2x96xf32> to vector<2x32xf32>
    %144 = vector.extract_strided_slice %142 {offsets = [0, 0], sizes = [2, 32], strides = [1, 1]} : vector<2x96xf32> to vector<2x32xf32>
    %145 = arith.addf %143, %144 : vector<2x32xf32>
    %146 = arith.negf %145 : vector<2x32xf32>
    %147 = math.exp %146 : vector<2x32xf32>
    %cst_33 = arith.constant 1.000000e+00 : f32
    %148 = vector.broadcast %cst_33 : f32 to vector<2x32xf32>
    %149 = arith.addf %148, %147 : vector<2x32xf32>
    %150 = arith.divf %148, %149 : vector<2x32xf32>
    %151 = vector.extract_strided_slice %138 {offsets = [0, 32], sizes = [2, 32], strides = [1, 1]} : vector<2x96xf32> to vector<2x32xf32>
    %152 = vector.extract_strided_slice %142 {offsets = [0, 32], sizes = [2, 32], strides = [1, 1]} : vector<2x96xf32> to vector<2x32xf32>
    %153 = arith.addf %151, %152 : vector<2x32xf32>
    %154 = arith.negf %153 : vector<2x32xf32>
    %155 = math.exp %154 : vector<2x32xf32>
    %cst_34 = arith.constant 1.000000e+00 : f32
    %156 = vector.broadcast %cst_34 : f32 to vector<2x32xf32>
    %157 = arith.addf %156, %155 : vector<2x32xf32>
    %158 = arith.divf %156, %157 : vector<2x32xf32>
    %159 = vector.extract_strided_slice %138 {offsets = [0, 64], sizes = [2, 32], strides = [1, 1]} : vector<2x96xf32> to vector<2x32xf32>
    %160 = vector.extract_strided_slice %142 {offsets = [0, 64], sizes = [2, 32], strides = [1, 1]} : vector<2x96xf32> to vector<2x32xf32>
    %161 = arith.mulf %150, %160 : vector<2x32xf32>
    %162 = arith.addf %159, %161 : vector<2x32xf32>
    %163 = math.tanh %162 : vector<2x32xf32>
    %cst_35 = arith.constant 1.000000e+00 : f32
    %164 = vector.broadcast %cst_35 : f32 to vector<2x32xf32>
    %165 = arith.subf %164, %158 : vector<2x32xf32>
    %166 = arith.mulf %165, %163 : vector<2x32xf32>
    %167 = arith.mulf %158, %136 : vector<2x32xf32>
    %168 = arith.addf %166, %167 : vector<2x32xf32>
    %c3_i32 = arith.constant 3 : i32
    %169 = vector.broadcast %c3_i32 : i32 to vector<2x1xi32>
    %170 = arith.cmpi sgt, %24, %169 : vector<2x1xi32>
    %171 = vector.shape_cast %170 : vector<2x1xi1> to vector<2x1xi1>
    %172 = vector.broadcast %171 : vector<2x1xi1> to vector<2x32xi1>
    %173 = arith.select %172, %168, %136 : vector<2x32xi1>, vector<2x32xf32>
    %174 = vector.extract_strided_slice %21 {offsets = [4, 0, 0], sizes = [1, 2, 96], strides = [1, 1, 1]} : vector<8x2x96xf32> to vector<1x2x96xf32>
    %175 = vector.shape_cast %174 : vector<1x2x96xf32> to vector<2x96xf32>
    %176 = arith.truncf %173 : vector<2x32xf32> to vector<2x32xbf16>
    %cst_36 = arith.constant dense<0.000000e+00> : vector<2x96xf32>
    %177 = tpu.matmul %176, %22, %cst_36 {dimension_numbers = #tpu.dot_dimension_numbers<[1], [0], [0], [1], [0, 0, 1, 1], [], []>} : vector<2x32xbf16>, vector<32x96xbf16>, vector<2x96xf32> -> vector<2x96xf32>
    %178 = vector.broadcast %23 : vector<1x96xf32> to vector<2x96xf32>
    %179 = arith.addf %177, %178 : vector<2x96xf32>
    %180 = vector.extract_strided_slice %175 {offsets = [0, 0], sizes = [2, 32], strides = [1, 1]} : vector<2x96xf32> to vector<2x32xf32>
    %181 = vector.extract_strided_slice %179 {offsets = [0, 0], sizes = [2, 32], strides = [1, 1]} : vector<2x96xf32> to vector<2x32xf32>
    %182 = arith.addf %180, %181 : vector<2x32xf32>
    %183 = arith.negf %182 : vector<2x32xf32>
    %184 = math.exp %183 : vector<2x32xf32>
    %cst_37 = arith.constant 1.000000e+00 : f32
    %185 = vector.broadcast %cst_37 : f32 to vector<2x32xf32>
    %186 = arith.addf %185, %184 : vector<2x32xf32>
    %187 = arith.divf %185, %186 : vector<2x32xf32>
    %188 = vector.extract_strided_slice %175 {offsets = [0, 32], sizes = [2, 32], strides = [1, 1]} : vector<2x96xf32> to vector<2x32xf32>
    %189 = vector.extract_strided_slice %179 {offsets = [0, 32], sizes = [2, 32], strides = [1, 1]} : vector<2x96xf32> to vector<2x32xf32>
    %190 = arith.addf %188, %189 : vector<2x32xf32>
    %191 = arith.negf %190 : vector<2x32xf32>
    %192 = math.exp %191 : vector<2x32xf32>
    %cst_38 = arith.constant 1.000000e+00 : f32
    %193 = vector.broadcast %cst_38 : f32 to vector<2x32xf32>
    %194 = arith.addf %193, %192 : vector<2x32xf32>
    %195 = arith.divf %193, %194 : vector<2x32xf32>
    %196 = vector.extract_strided_slice %175 {offsets = [0, 64], sizes = [2, 32], strides = [1, 1]} : vector<2x96xf32> to vector<2x32xf32>
    %197 = vector.extract_strided_slice %179 {offsets = [0, 64], sizes = [2, 32], strides = [1, 1]} : vector<2x96xf32> to vector<2x32xf32>
    %198 = arith.mulf %187, %197 : vector<2x32xf32>
    %199 = arith.addf %196, %198 : vector<2x32xf32>
    %200 = math.tanh %199 : vector<2x32xf32>
    %cst_39 = arith.constant 1.000000e+00 : f32
    %201 = vector.broadcast %cst_39 : f32 to vector<2x32xf32>
    %202 = arith.subf %201, %195 : vector<2x32xf32>
    %203 = arith.mulf %202, %200 : vector<2x32xf32>
    %204 = arith.mulf %195, %173 : vector<2x32xf32>
    %205 = arith.addf %203, %204 : vector<2x32xf32>
    %c4_i32 = arith.constant 4 : i32
    %206 = vector.broadcast %c4_i32 : i32 to vector<2x1xi32>
    %207 = arith.cmpi sgt, %24, %206 : vector<2x1xi32>
    %208 = vector.shape_cast %207 : vector<2x1xi1> to vector<2x1xi1>
    %209 = vector.broadcast %208 : vector<2x1xi1> to vector<2x32xi1>
    %210 = arith.select %209, %205, %173 : vector<2x32xi1>, vector<2x32xf32>
    %211 = vector.extract_strided_slice %21 {offsets = [5, 0, 0], sizes = [1, 2, 96], strides = [1, 1, 1]} : vector<8x2x96xf32> to vector<1x2x96xf32>
    %212 = vector.shape_cast %211 : vector<1x2x96xf32> to vector<2x96xf32>
    %213 = arith.truncf %210 : vector<2x32xf32> to vector<2x32xbf16>
    %cst_40 = arith.constant dense<0.000000e+00> : vector<2x96xf32>
    %214 = tpu.matmul %213, %22, %cst_40 {dimension_numbers = #tpu.dot_dimension_numbers<[1], [0], [0], [1], [0, 0, 1, 1], [], []>} : vector<2x32xbf16>, vector<32x96xbf16>, vector<2x96xf32> -> vector<2x96xf32>
    %215 = vector.broadcast %23 : vector<1x96xf32> to vector<2x96xf32>
    %216 = arith.addf %214, %215 : vector<2x96xf32>
    %217 = vector.extract_strided_slice %212 {offsets = [0, 0], sizes = [2, 32], strides = [1, 1]} : vector<2x96xf32> to vector<2x32xf32>
    %218 = vector.extract_strided_slice %216 {offsets = [0, 0], sizes = [2, 32], strides = [1, 1]} : vector<2x96xf32> to vector<2x32xf32>
    %219 = arith.addf %217, %218 : vector<2x32xf32>
    %220 = arith.negf %219 : vector<2x32xf32>
    %221 = math.exp %220 : vector<2x32xf32>
    %cst_41 = arith.constant 1.000000e+00 : f32
    %222 = vector.broadcast %cst_41 : f32 to vector<2x32xf32>
    %223 = arith.addf %222, %221 : vector<2x32xf32>
    %224 = arith.divf %222, %223 : vector<2x32xf32>
    %225 = vector.extract_strided_slice %212 {offsets = [0, 32], sizes = [2, 32], strides = [1, 1]} : vector<2x96xf32> to vector<2x32xf32>
    %226 = vector.extract_strided_slice %216 {offsets = [0, 32], sizes = [2, 32], strides = [1, 1]} : vector<2x96xf32> to vector<2x32xf32>
    %227 = arith.addf %225, %226 : vector<2x32xf32>
    %228 = arith.negf %227 : vector<2x32xf32>
    %229 = math.exp %228 : vector<2x32xf32>
    %cst_42 = arith.constant 1.000000e+00 : f32
    %230 = vector.broadcast %cst_42 : f32 to vector<2x32xf32>
    %231 = arith.addf %230, %229 : vector<2x32xf32>
    %232 = arith.divf %230, %231 : vector<2x32xf32>
    %233 = vector.extract_strided_slice %212 {offsets = [0, 64], sizes = [2, 32], strides = [1, 1]} : vector<2x96xf32> to vector<2x32xf32>
    %234 = vector.extract_strided_slice %216 {offsets = [0, 64], sizes = [2, 32], strides = [1, 1]} : vector<2x96xf32> to vector<2x32xf32>
    %235 = arith.mulf %224, %234 : vector<2x32xf32>
    %236 = arith.addf %233, %235 : vector<2x32xf32>
    %237 = math.tanh %236 : vector<2x32xf32>
    %cst_43 = arith.constant 1.000000e+00 : f32
    %238 = vector.broadcast %cst_43 : f32 to vector<2x32xf32>
    %239 = arith.subf %238, %232 : vector<2x32xf32>
    %240 = arith.mulf %239, %237 : vector<2x32xf32>
    %241 = arith.mulf %232, %210 : vector<2x32xf32>
    %242 = arith.addf %240, %241 : vector<2x32xf32>
    %c5_i32 = arith.constant 5 : i32
    %243 = vector.broadcast %c5_i32 : i32 to vector<2x1xi32>
    %244 = arith.cmpi sgt, %24, %243 : vector<2x1xi32>
    %245 = vector.shape_cast %244 : vector<2x1xi1> to vector<2x1xi1>
    %246 = vector.broadcast %245 : vector<2x1xi1> to vector<2x32xi1>
    %247 = arith.select %246, %242, %210 : vector<2x32xi1>, vector<2x32xf32>
    %248 = vector.extract_strided_slice %21 {offsets = [6, 0, 0], sizes = [1, 2, 96], strides = [1, 1, 1]} : vector<8x2x96xf32> to vector<1x2x96xf32>
    %249 = vector.shape_cast %248 : vector<1x2x96xf32> to vector<2x96xf32>
    %250 = arith.truncf %247 : vector<2x32xf32> to vector<2x32xbf16>
    %cst_44 = arith.constant dense<0.000000e+00> : vector<2x96xf32>
    %251 = tpu.matmul %250, %22, %cst_44 {dimension_numbers = #tpu.dot_dimension_numbers<[1], [0], [0], [1], [0, 0, 1, 1], [], []>} : vector<2x32xbf16>, vector<32x96xbf16>, vector<2x96xf32> -> vector<2x96xf32>
    %252 = vector.broadcast %23 : vector<1x96xf32> to vector<2x96xf32>
    %253 = arith.addf %251, %252 : vector<2x96xf32>
    %254 = vector.extract_strided_slice %249 {offsets = [0, 0], sizes = [2, 32], strides = [1, 1]} : vector<2x96xf32> to vector<2x32xf32>
    %255 = vector.extract_strided_slice %253 {offsets = [0, 0], sizes = [2, 32], strides = [1, 1]} : vector<2x96xf32> to vector<2x32xf32>
    %256 = arith.addf %254, %255 : vector<2x32xf32>
    %257 = arith.negf %256 : vector<2x32xf32>
    %258 = math.exp %257 : vector<2x32xf32>
    %cst_45 = arith.constant 1.000000e+00 : f32
    %259 = vector.broadcast %cst_45 : f32 to vector<2x32xf32>
    %260 = arith.addf %259, %258 : vector<2x32xf32>
    %261 = arith.divf %259, %260 : vector<2x32xf32>
    %262 = vector.extract_strided_slice %249 {offsets = [0, 32], sizes = [2, 32], strides = [1, 1]} : vector<2x96xf32> to vector<2x32xf32>
    %263 = vector.extract_strided_slice %253 {offsets = [0, 32], sizes = [2, 32], strides = [1, 1]} : vector<2x96xf32> to vector<2x32xf32>
    %264 = arith.addf %262, %263 : vector<2x32xf32>
    %265 = arith.negf %264 : vector<2x32xf32>
    %266 = math.exp %265 : vector<2x32xf32>
    %cst_46 = arith.constant 1.000000e+00 : f32
    %267 = vector.broadcast %cst_46 : f32 to vector<2x32xf32>
    %268 = arith.addf %267, %266 : vector<2x32xf32>
    %269 = arith.divf %267, %268 : vector<2x32xf32>
    %270 = vector.extract_strided_slice %249 {offsets = [0, 64], sizes = [2, 32], strides = [1, 1]} : vector<2x96xf32> to vector<2x32xf32>
    %271 = vector.extract_strided_slice %253 {offsets = [0, 64], sizes = [2, 32], strides = [1, 1]} : vector<2x96xf32> to vector<2x32xf32>
    %272 = arith.mulf %261, %271 : vector<2x32xf32>
    %273 = arith.addf %270, %272 : vector<2x32xf32>
    %274 = math.tanh %273 : vector<2x32xf32>
    %cst_47 = arith.constant 1.000000e+00 : f32
    %275 = vector.broadcast %cst_47 : f32 to vector<2x32xf32>
    %276 = arith.subf %275, %269 : vector<2x32xf32>
    %277 = arith.mulf %276, %274 : vector<2x32xf32>
    %278 = arith.mulf %269, %247 : vector<2x32xf32>
    %279 = arith.addf %277, %278 : vector<2x32xf32>
    %c6_i32 = arith.constant 6 : i32
    %280 = vector.broadcast %c6_i32 : i32 to vector<2x1xi32>
    %281 = arith.cmpi sgt, %24, %280 : vector<2x1xi32>
    %282 = vector.shape_cast %281 : vector<2x1xi1> to vector<2x1xi1>
    %283 = vector.broadcast %282 : vector<2x1xi1> to vector<2x32xi1>
    %284 = arith.select %283, %279, %247 : vector<2x32xi1>, vector<2x32xf32>
    %285 = vector.extract_strided_slice %21 {offsets = [7, 0, 0], sizes = [1, 2, 96], strides = [1, 1, 1]} : vector<8x2x96xf32> to vector<1x2x96xf32>
    %286 = vector.shape_cast %285 : vector<1x2x96xf32> to vector<2x96xf32>
    %287 = arith.truncf %284 : vector<2x32xf32> to vector<2x32xbf16>
    %cst_48 = arith.constant dense<0.000000e+00> : vector<2x96xf32>
    %288 = tpu.matmul %287, %22, %cst_48 {dimension_numbers = #tpu.dot_dimension_numbers<[1], [0], [0], [1], [0, 0, 1, 1], [], []>} : vector<2x32xbf16>, vector<32x96xbf16>, vector<2x96xf32> -> vector<2x96xf32>
    %289 = vector.broadcast %23 : vector<1x96xf32> to vector<2x96xf32>
    %290 = arith.addf %288, %289 : vector<2x96xf32>
    %291 = vector.extract_strided_slice %286 {offsets = [0, 0], sizes = [2, 32], strides = [1, 1]} : vector<2x96xf32> to vector<2x32xf32>
    %292 = vector.extract_strided_slice %290 {offsets = [0, 0], sizes = [2, 32], strides = [1, 1]} : vector<2x96xf32> to vector<2x32xf32>
    %293 = arith.addf %291, %292 : vector<2x32xf32>
    %294 = arith.negf %293 : vector<2x32xf32>
    %295 = math.exp %294 : vector<2x32xf32>
    %cst_49 = arith.constant 1.000000e+00 : f32
    %296 = vector.broadcast %cst_49 : f32 to vector<2x32xf32>
    %297 = arith.addf %296, %295 : vector<2x32xf32>
    %298 = arith.divf %296, %297 : vector<2x32xf32>
    %299 = vector.extract_strided_slice %286 {offsets = [0, 32], sizes = [2, 32], strides = [1, 1]} : vector<2x96xf32> to vector<2x32xf32>
    %300 = vector.extract_strided_slice %290 {offsets = [0, 32], sizes = [2, 32], strides = [1, 1]} : vector<2x96xf32> to vector<2x32xf32>
    %301 = arith.addf %299, %300 : vector<2x32xf32>
    %302 = arith.negf %301 : vector<2x32xf32>
    %303 = math.exp %302 : vector<2x32xf32>
    %cst_50 = arith.constant 1.000000e+00 : f32
    %304 = vector.broadcast %cst_50 : f32 to vector<2x32xf32>
    %305 = arith.addf %304, %303 : vector<2x32xf32>
    %306 = arith.divf %304, %305 : vector<2x32xf32>
    %307 = vector.extract_strided_slice %286 {offsets = [0, 64], sizes = [2, 32], strides = [1, 1]} : vector<2x96xf32> to vector<2x32xf32>
    %308 = vector.extract_strided_slice %290 {offsets = [0, 64], sizes = [2, 32], strides = [1, 1]} : vector<2x96xf32> to vector<2x32xf32>
    %309 = arith.mulf %298, %308 : vector<2x32xf32>
    %310 = arith.addf %307, %309 : vector<2x32xf32>
    %311 = math.tanh %310 : vector<2x32xf32>
    %cst_51 = arith.constant 1.000000e+00 : f32
    %312 = vector.broadcast %cst_51 : f32 to vector<2x32xf32>
    %313 = arith.subf %312, %306 : vector<2x32xf32>
    %314 = arith.mulf %313, %311 : vector<2x32xf32>
    %315 = arith.mulf %306, %284 : vector<2x32xf32>
    %316 = arith.addf %314, %315 : vector<2x32xf32>
    %c7_i32 = arith.constant 7 : i32
    %317 = vector.broadcast %c7_i32 : i32 to vector<2x1xi32>
    %318 = arith.cmpi sgt, %24, %317 : vector<2x1xi32>
    %319 = vector.shape_cast %318 : vector<2x1xi1> to vector<2x1xi1>
    %320 = vector.broadcast %319 : vector<2x1xi1> to vector<2x32xi1>
    %321 = arith.select %320, %316, %284 : vector<2x32xi1>, vector<2x32xf32>
    %322 = arith.truncf %321 : vector<2x32xf32> to vector<2x32xbf16>
    %c0_52 = arith.constant 0 : index
    %c0_53 = arith.constant 0 : index
    %323 = vector.load %arg9[%c0_52, %c0_53] : memref<32x32xbf16, #tpu.memory_space<vmem>>, vector<32x32xbf16>
    %cst_54 = arith.constant dense<0.000000e+00> : vector<2x32xf32>
    %324 = tpu.matmul %322, %323, %cst_54 {dimension_numbers = #tpu.dot_dimension_numbers<[1], [0], [0], [1], [0, 0, 1, 1], [], []>} : vector<2x32xbf16>, vector<32x32xbf16>, vector<2x32xf32> -> vector<2x32xf32>
    %325 = vector.shape_cast %14 : vector<8x32xf32> to vector<2x4x32xf32>
    %326 = vector.shape_cast %324 : vector<2x32xf32> to vector<2x1x32xf32>
    %327 = vector.broadcast %326 : vector<2x1x32xf32> to vector<2x4x32xf32>
    %328 = arith.mulf %325, %327 : vector<2x4x32xf32>
    %cst_55 = arith.constant dense<0.000000e+00> : vector<2x4xf32>
    %329 = vector.multi_reduction <add>, %328, %cst_55 [2] : vector<2x4x32xf32> to vector<2x4xf32>
    %c0_56 = arith.constant 0 : index
    %c0_57 = arith.constant 0 : index
    %330 = vector.load %arg10[%c0_56, %c0_57] : memref<2x4xf32, #tpu.memory_space<vmem>>, vector<2x4xf32>
    tpu.vector_store %arg10[%c0_56, %c0_57], %329 {strides = array<i32>} : memref<2x4xf32, #tpu.memory_space<vmem>>, vector<2x4xf32>,
    return
  }
}

</mosaic_0001>

<llo_original>
// kernel: ecg_listener_forward.4
$region0: #{ecg_listener_forward.4}
  #allocation0 [shape = 'u32[]', space=smem, size = 0x4, offset = 0x4, fixed_abs, tag = 'smem constant byte address 0x4 - core index']
  #allocation1 [shape = 'u32[144,128]{1,0:T(1,128)}', space=vmem, size = 0x12000, scoped, tag = 'internal scratch']
  %s0 = inlined_call_operand.vmem [shape: bf16[2048,27], index: 0, kind: input, shape index: {}]
  %s1 = inlined_call_operand.vmem [shape: bf16[27,32], index: 1, kind: input, shape index: {}]
  %s2 = inlined_call_operand.vmem [shape: f32[1,32], index: 2, kind: input, shape index: {}]
  %s3 = inlined_call_operand.vmem [shape: f32[512,32], index: 3, kind: output, shape index: {}]
  %s4 = sld [smem:[#allocation0]]
  $region22: #{ecg_listener_forward.4} parent=0
    _
  %s6 = ssub.s32 1, %s4
  %s7 = scalar_select 0, %s6, %s4
  // Predicated region
  $region2: #{ecg_listener_forward.4} parent=0 // pred_check
    _
  $region3: #{ecg_listener_forward.4} parent=0 // pred_check_branch
    %9 = sbr.rel (0) target = $region5
  $region4: #{ecg_listener_forward.4} parent=0 // pred_region
    _
  $region5: #{ecg_listener_forward.4} parent=0 // pred_fallthru
    _
  // Predicated region
  $region6: #{ecg_listener_forward.4} parent=0 // pred_check
    _
  $region7: #{ecg_listener_forward.4} parent=0 // pred_check_branch
    %11 = sbr.rel (0) target = $region9
  $region8: #{ecg_listener_forward.4} parent=0 // pred_region
    _
  $region9: #{ecg_listener_forward.4} parent=0 // pred_fallthru
    _
  // Predicated region
  $region10: #{ecg_listener_forward.4} parent=0 // pred_check
    _
  $region11: #{ecg_listener_forward.4} parent=0 // pred_check_branch
    %13 = sbr.rel (0) target = $region13
  $region12: #{ecg_listener_forward.4} parent=0 // pred_region
    _
  $region13: #{ecg_listener_forward.4} parent=0 // pred_fallthru
    _
  %v15 = vld [vmem:[%s0] sm:$0xf]
  %v16 = vld [vmem:[%s0 + $0x4] sm:$0xf]
  %v17 = vld [vmem:[%s0 + $0x8] sm:$0xf]
  %v18 = vld [vmem:[%s0 + $0xc] sm:$0xf]
  %v19 = vld [vmem:[%s0 + $0x10] sm:$0xf]
  %v20 = vld [vmem:[%s0 + $0x14] sm:$0xf]
  %v21 = vld [vmem:[%s0 + $0x18] sm:$0xf]
  %v22 = vld [vmem:[%s0 + $0x1c] sm:$0xf]
  %v23 = vld [vmem:[%s0 + $0x20] sm:$0xf]
  %v24 = vld [vmem:[%s0 + $0x24] sm:$0xf]
  %v25 = vld [vmem:[%s0 + $0x28] sm:$0xf]
  %v26 = vld [vmem:[%s0 + $0x2c] sm:$0xf]
  %v27 = vld [vmem:[%s0 + $0x30] sm:$0xf]
  %v28 = vld [vmem:[%s0 + $0x34] sm:$0xf]
  %v29 = vld [vmem:[%s0 + $0x38] sm:$0xf]
  %v30 = vld [vmem:[%s0 + $0x3c] sm:$0xf]
  %v31 = vld [vmem:[%s0 + $0x40] sm:$0xf]
  %v32 = vld [vmem:[%s0 + $0x44] sm:$0xf]
  %v33 = vld [vmem:[%s0 + $0x48] sm:$0xf]
  %v34 = vld [vmem:[%s0 + $0x4c] sm:$0xf]
  %v35 = vld [vmem:[%s0 + $0x50] sm:$0xf]
  %v36 = vld [vmem:[%s0 + $0x54] sm:$0xf]
  %v37 = vld [vmem:[%s0 + $0x58] sm:$0xf]
  %v38 = vld [vmem:[%s0 + $0x5c] sm:$0xf]
  %v39 = vld [vmem:[%s0 + $0x60] sm:$0xf]
  %v40 = vld [vmem:[%s0 + $0x64] sm:$0xf]
  %v41 = vld [vmem:[%s0 + $0x68] sm:$0xf]
  %v42 = vld [vmem:[%s0 + $0x6c] sm:$0xf]
  %v43 = vld [vmem:[%s0 + $0x70] sm:$0xf]
  %v44 = vld [vmem:[%s0 + $0x74] sm:$0xf]
  %v45 = vld [vmem:[%s0 + $0x78] sm:$0xf]
  %v46 = vld [vmem:[%s0 + $0x7c] sm:$0xf]
  %v47 = vld [vmem:[%s0 + $0x80] sm:$0xf]
  %v48 = vld [vmem:[%s0 + $0x84] sm:$0xf]
  %v49 = vld [vmem:[%s0 + $0x88] sm:$0xf]
  %v50 = vld [vmem:[%s0 + $0x8c] sm:$0xf]
  %v51 = vld [vmem:[%s0 + $0x90] sm:$0xf]
  %v52 = vld [vmem:[%s0 + $0x94] sm:$0xf]
  %v53 = vld [vmem:[%s0 + $0x98] sm:$0xf]
  %v54 = vld [vmem:[%s0 + $0x9c] sm:$0xf]
  %v55 = vld [vmem:[%s0 + $0xa0] sm:$0xf]
  %v56 = vld [vmem:[%s0 + $0xa4] sm:$0xf]
  %v57 = vld [vmem:[%s0 + $0xa8] sm:$0xf]
  %v58 = vld [vmem:[%s0 + $0xac] sm:$0xf]
  %v59 = vld [vmem:[%s0 + $0xb0] sm:$0xf]
  %v60 = vld [vmem:[%s0 + $0xb4] sm:$0xf]
  %v61 = vld [vmem:[%s0 + $0xb8] sm:$0xf]
  %v62 = vld [vmem:[%s0 + $0xbc] sm:$0xf]
  %v63 = vld [vmem:[%s0 + $0xc0] sm:$0xf]
  %v64 = vld [vmem:[%s0 + $0xc4] sm:$0xf]
  %v65 = vld [vmem:[%s0 + $0xc8] sm:$0xf]
  %v66 = vld [vmem:[%s0 + $0xcc] sm:$0xf]
  %v67 = vld [vmem:[%s0 + $0xd0] sm:$0xf]
  %v68 = vld [vmem:[%s0 + $0xd4] sm:$0xf]
  %v69 = vld [vmem:[%s0 + $0xd8] sm:$0xf]
  %v70 = vld [vmem:[%s0 + $0xdc] sm:$0xf]
  %v71 = vld [vmem:[%s0 + $0xe0] sm:$0xf]
  %v72 = vld [vmem:[%s0 + $0xe4] sm:$0xf]
  %v73 = vld [vmem:[%s0 + $0xe8] sm:$0xf]
  %v74 = vld [vmem:[%s0 + $0xec] sm:$0xf]
  %v75 = vld [vmem:[%s0 + $0xf0] sm:$0xf]
  %v76 = vld [vmem:[%s0 + $0xf4] sm:$0xf]
  %v77 = vld [vmem:[%s0 + $0xf8] sm:$0xf]
  %v78 = vld [vmem:[%s0 + $0xfc] sm:$0xf]
  %v79 = vld [vmem:[%s0 + $0x100] sm:$0xf]
  %v80 = vld [vmem:[%s0 + $0x104] sm:$0xf]
  %v81 = vld [vmem:[%s0 + $0x108] sm:$0xf]
  %v82 = vld [vmem:[%s0 + $0x10c] sm:$0xf]
  %v83 = vld [vmem:[%s0 + $0x110] sm:$0xf]
  %v84 = vld [vmem:[%s0 + $0x114] sm:$0xf]
  %v85 = vld [vmem:[%s0 + $0x118] sm:$0xf]
  %v86 = vld [vmem:[%s0 + $0x11c] sm:$0xf]
  %v87 = vld [vmem:[%s0 + $0x120] sm:$0xf]
  %v88 = vld [vmem:[%s0 + $0x124] sm:$0xf]
  %v89 = vld [vmem:[%s0 + $0x128] sm:$0xf]
  %v90 = vld [vmem:[%s0 + $0x12c] sm:$0xf]
  %v91 = vld [vmem:[%s0 + $0x130] sm:$0xf]
  %v92 = vld [vmem:[%s0 + $0x134] sm:$0xf]
  %v93 = vld [vmem:[%s0 + $0x138] sm:$0xf]
  %v94 = vld [vmem:[%s0 + $0x13c] sm:$0xf]
  %v95 = vld [vmem:[%s0 + $0x140] sm:$0xf]
  %v96 = vld [vmem:[%s0 + $0x144] sm:$0xf]
  %v97 = vld [vmem:[%s0 + $0x148] sm:$0xf]
  %v98 = vld [vmem:[%s0 + $0x14c] sm:$0xf]
  %v99 = vld [vmem:[%s0 + $0x150] sm:$0xf]
  %v100 = vld [vmem:[%s0 + $0x154] sm:$0xf]
  %v101 = vld [vmem:[%s0 + $0x158] sm:$0xf]
  %v102 = vld [vmem:[%s0 + $0x15c] sm:$0xf]
  %v103 = vld [vmem:[%s0 + $0x160] sm:$0xf]
  %v104 = vld [vmem:[%s0 + $0x164] sm:$0xf]
  %v105 = vld [vmem:[%s0 + $0x168] sm:$0xf]
  %v106 = vld [vmem:[%s0 + $0x16c] sm:$0xf]
  %v107 = vld [vmem:[%s0 + $0x170] sm:$0xf]
  %v108 = vld [vmem:[%s0 + $0x174] sm:$0xf]
  %v109 = vld [vmem:[%s0 + $0x178] sm:$0xf]
  %v110 = vld [vmem:[%s0 + $0x17c] sm:$0xf]
  %v111 = vld [vmem:[%s0 + $0x180] sm:$0xf]
  %v112 = vld [vmem:[%s0 + $0x184] sm:$0xf]
  %v113 = vld [vmem:[%s0 + $0x188] sm:$0xf]
  %v114 = vld [vmem:[%s0 + $0x18c] sm:$0xf]
  %v115 = vld [vmem:[%s0 + $0x190] sm:$0xf]
  %v116 = vld [vmem:[%s0 + $0x194] sm:$0xf]
  %v117 = vld [vmem:[%s0 + $0x198] sm:$0xf]
  %v118 = vld [vmem:[%s0 + $0x19c] sm:$0xf]
  %v119 = vld [vmem:[%s0 + $0x1a0] sm:$0xf]
  %v120 = vld [vmem:[%s0 + $0x1a4] sm:$0xf]
  %v121 = vld [vmem:[%s0 + $0x1a8] sm:$0xf]
  %v122 = vld [vmem:[%s0 + $0x1ac] sm:$0xf]
  %v123 = vld [vmem:[%s0 + $0x1b0] sm:$0xf]
  %v124 = vld [vmem:[%s0 + $0x1b4] sm:$0xf]
  %v125 = vld [vmem:[%s0 + $0x1b8] sm:$0xf]
  %v126 = vld [vmem:[%s0 + $0x1bc] sm:$0xf]
  %v127 = vld [vmem:[%s0 + $0x1c0] sm:$0xf]
  %v128 = vld [vmem:[%s0 + $0x1c4] sm:$0xf]
  %v129 = vld [vmem:[%s0 + $0x1c8] sm:$0xf]
  %v130 = vld [vmem:[%s0 + $0x1cc] sm:$0xf]
  %v131 = vld [vmem:[%s0 + $0x1d0] sm:$0xf]
  %v132 = vld [vmem:[%s0 + $0x1d4] sm:$0xf]
  %v133 = vld [vmem:[%s0 + $0x1d8] sm:$0xf]
  %v134 = vld [vmem:[%s0 + $0x1dc] sm:$0xf]
  %v135 = vld [vmem:[%s0 + $0x1e0] sm:$0xf]
  %v136 = vld [vmem:[%s0 + $0x1e4] sm:$0xf]
  %v137 = vld [vmem:[%s0 + $0x1e8] sm:$0xf]
  %v138 = vld [vmem:[%s0 + $0x1ec] sm:$0xf]
  %v139 = vld [vmem:[%s0 + $0x1f0] sm:$0xf]
  %v140 = vld [vmem:[%s0 + $0x1f4] sm:$0xf]
  %v141 = vld [vmem:[%s0 + $0x1f8] sm:$0xf]
  %v142 = vld [vmem:[%s0 + $0x1fc] sm:$0xf]
  %v143 = vld [vmem:[%s0 + $0x200] sm:$0xf]
  %v144 = vld [vmem:[%s0 + $0x204] sm:$0xf]
  %v145 = vld [vmem:[%s0 + $0x208] sm:$0xf]
  %v146 = vld [vmem:[%s0 + $0x20c] sm:$0xf]
  %v147 = vld [vmem:[%s0 + $0x210] sm:$0xf]
  %v148 = vld [vmem:[%s0 + $0x214] sm:$0xf]
  %v149 = vld [vmem:[%s0 + $0x218] sm:$0xf]
  %v150 = vld [vmem:[%s0 + $0x21c] sm:$0xf]
  %v151 = vld [vmem:[%s0 + $0x220] sm:$0xf]
  %v152 = vld [vmem:[%s0 + $0x224] sm:$0xf]
  %v153 = vld [vmem:[%s0 + $0x228] sm:$0xf]
  %v154 = vld [vmem:[%s0 + $0x22c] sm:$0xf]
  %v155 = vld [vmem:[%s0 + $0x230] sm:$0xf]
  %v156 = vld [vmem:[%s0 + $0x234] sm:$0xf]
  %v157 = vld [vmem:[%s0 + $0x238] sm:$0xf]
  %v158 = vld [vmem:[%s0 + $0x23c] sm:$0xf]
  %v159 = vld [vmem:[%s0 + $0x240] sm:$0xf]
  %v160 = vld [vmem:[%s0 + $0x244] sm:$0xf]
  %v161 = vld [vmem:[%s0 + $0x248] sm:$0xf]
  %v162 = vld [vmem:[%s0 + $0x24c] sm:$0xf]
  %v163 = vld [vmem:[%s0 + $0x250] sm:$0xf]
  %v164 = vld [vmem:[%s0 + $0x254] sm:$0xf]
  %v165 = vld [vmem:[%s0 + $0x258] sm:$0xf]
  %v166 = vld [vmem:[%s0 + $0x25c] sm:$0xf]
  %v167 = vld [vmem:[%s0 + $0x260] sm:$0xf]
  %v168 = vld [vmem:[%s0 + $0x264] sm:$0xf]
  %v169 = vld [vmem:[%s0 + $0x268] sm:$0xf]
  %v170 = vld [vmem:[%s0 + $0x26c] sm:$0xf]
  %v171 = vld [vmem:[%s0 + $0x270] sm:$0xf]
  %v172 = vld [vmem:[%s0 + $0x274] sm:$0xf]
  %v173 = vld [vmem:[%s0 + $0x278] sm:$0xf]
  %v174 = vld [vmem:[%s0 + $0x27c] sm:$0xf]
  %v175 = vld [vmem:[%s0 + $0x280] sm:$0xf]
  %v176 = vld [vmem:[%s0 + $0x284] sm:$0xf]
  %v177 = vld [vmem:[%s0 + $0x288] sm:$0xf]
  %v178 = vld [vmem:[%s0 + $0x28c] sm:$0xf]
  %v179 = vld [vmem:[%s0 + $0x290] sm:$0xf]
  %v180 = vld [vmem:[%s0 + $0x294] sm:$0xf]
  %v181 = vld [vmem:[%s0 + $0x298] sm:$0xf]
  %v182 = vld [vmem:[%s0 + $0x29c] sm:$0xf]
  %v183 = vld [vmem:[%s0 + $0x2a0] sm:$0xf]
  %v184 = vld [vmem:[%s0 + $0x2a4] sm:$0xf]
  %v185 = vld [vmem:[%s0 + $0x2a8] sm:$0xf]
  %v186 = vld [vmem:[%s0 + $0x2ac] sm:$0xf]
  %v187 = vld [vmem:[%s0 + $0x2b0] sm:$0xf]
  %v188 = vld [vmem:[%s0 + $0x2b4] sm:$0xf]
  %v189 = vld [vmem:[%s0 + $0x2b8] sm:$0xf]
  %v190 = vld [vmem:[%s0 + $0x2bc] sm:$0xf]
  %v191 = vld [vmem:[%s0 + $0x2c0] sm:$0xf]
  %v192 = vld [vmem:[%s0 + $0x2c4] sm:$0xf]
  %v193 = vld [vmem:[%s0 + $0x2c8] sm:$0xf]
  %v194 = vld [vmem:[%s0 + $0x2cc] sm:$0xf]
  %v195 = vld [vmem:[%s0 + $0x2d0] sm:$0xf]
  %v196 = vld [vmem:[%s0 + $0x2d4] sm:$0xf]
  %v197 = vld [vmem:[%s0 + $0x2d8] sm:$0xf]
  %v198 = vld [vmem:[%s0 + $0x2dc] sm:$0xf]
  %v199 = vld [vmem:[%s0 + $0x2e0] sm:$0xf]
  %v200 = vld [vmem:[%s0 + $0x2e4] sm:$0xf]
  %v201 = vld [vmem:[%s0 + $0x2e8] sm:$0xf]
  %v202 = vld [vmem:[%s0 + $0x2ec] sm:$0xf]
  %v203 = vld [vmem:[%s0 + $0x2f0] sm:$0xf]
  %v204 = vld [vmem:[%s0 + $0x2f4] sm:$0xf]
  %v205 = vld [vmem:[%s0 + $0x2f8] sm:$0xf]
  %v206 = vld [vmem:[%s0 + $0x2fc] sm:$0xf]
  %v207 = vld [vmem:[%s0 + $0x300] sm:$0xf]
  %v208 = vld [vmem:[%s0 + $0x304] sm:$0xf]
  %v209 = vld [vmem:[%s0 + $0x308] sm:$0xf]
  %v210 = vld [vmem:[%s0 + $0x30c] sm:$0xf]
  %v211 = vld [vmem:[%s0 + $0x310] sm:$0xf]
  %v212 = vld [vmem:[%s0 + $0x314] sm:$0xf]
  %v213 = vld [vmem:[%s0 + $0x318] sm:$0xf]
  %v214 = vld [vmem:[%s0 + $0x31c] sm:$0xf]
  %v215 = vld [vmem:[%s0 + $0x320] sm:$0xf]
  %v216 = vld [vmem:[%s0 + $0x324] sm:$0xf]
  %v217 = vld [vmem:[%s0 + $0x328] sm:$0xf]
  %v218 = vld [vmem:[%s0 + $0x32c] sm:$0xf]
  %v219 = vld [vmem:[%s0 + $0x330] sm:$0xf]
  %v220 = vld [vmem:[%s0 + $0x334] sm:$0xf]
  %v221 = vld [vmem:[%s0 + $0x338] sm:$0xf]
  %v222 = vld [vmem:[%s0 + $0x33c] sm:$0xf]
  %v223 = vld [vmem:[%s0 + $0x340] sm:$0xf]
  %v224 = vld [vmem:[%s0 + $0x344] sm:$0xf]
  %v225 = vld [vmem:[%s0 + $0x348] sm:$0xf]
  %v226 = vld [vmem:[%s0 + $0x34c] sm:$0xf]
  %v227 = vld [vmem:[%s0 + $0x350] sm:$0xf]
  %v228 = vld [vmem:[%s0 + $0x354] sm:$0xf]
  %v229 = vld [vmem:[%s0 + $0x358] sm:$0xf]
  %v230 = vld [vmem:[%s0 + $0x35c] sm:$0xf]
  %v231 = vld [vmem:[%s0 + $0x360] sm:$0xf]
  %v232 = vld [vmem:[%s0 + $0x364] sm:$0xf]
  %v233 = vld [vmem:[%s0 + $0x368] sm:$0xf]
  %v234 = vld [vmem:[%s0 + $0x36c] sm:$0xf]
  %v235 = vld [vmem:[%s0 + $0x370] sm:$0xf]
  %v236 = vld [vmem:[%s0 + $0x374] sm:$0xf]
  %v237 = vld [vmem:[%s0 + $0x378] sm:$0xf]
  %v238 = vld [vmem:[%s0 + $0x37c] sm:$0xf]
  %v239 = vld [vmem:[%s0 + $0x380] sm:$0xf]
  %v240 = vld [vmem:[%s0 + $0x384] sm:$0xf]
  %v241 = vld [vmem:[%s0 + $0x388] sm:$0xf]
  %v242 = vld [vmem:[%s0 + $0x38c] sm:$0xf]
  %v243 = vld [vmem:[%s0 + $0x390] sm:$0xf]
  %v244 = vld [vmem:[%s0 + $0x394] sm:$0xf]
  %v245 = vld [vmem:[%s0 + $0x398] sm:$0xf]
  %v246 = vld [vmem:[%s0 + $0x39c] sm:$0xf]
  %v247 = vld [vmem:[%s0 + $0x3a0] sm:$0xf]
  %v248 = vld [vmem:[%s0 + $0x3a4] sm:$0xf]
  %v249 = vld [vmem:[%s0 + $0x3a8] sm:$0xf]
  %v250 = vld [vmem:[%s0 + $0x3ac] sm:$0xf]
  %v251 = vld [vmem:[%s0 + $0x3b0] sm:$0xf]
  %v252 = vld [vmem:[%s0 + $0x3b4] sm:$0xf]
  %v253 = vld [vmem:[%s0 + $0x3b8] sm:$0xf]
  %v254 = vld [vmem:[%s0 + $0x3bc] sm:$0xf]
  %v255 = vld [vmem:[%s0 + $0x3c0] sm:$0xf]
  %v256 = vld [vmem:[%s0 + $0x3c4] sm:$0xf]
  %v257 = vld [vmem:[%s0 + $0x3c8] sm:$0xf]
  %v258 = vld [vmem:[%s0 + $0x3cc] sm:$0xf]
  %v259 = vld [vmem:[%s0 + $0x3d0] sm:$0xf]
  %v260 = vld [vmem:[%s0 + $0x3d4] sm:$0xf]
  %v261 = vld [vmem:[%s0 + $0x3d8] sm:$0xf]
  %v262 = vld [vmem:[%s0 + $0x3dc] sm:$0xf]
  %v263 = vld [vmem:[%s0 + $0x3e0] sm:$0xf]
  %v264 = vld [vmem:[%s0 + $0x3e4] sm:$0xf]
  %v265 = vld [vmem:[%s0 + $0x3e8] sm:$0xf]
  %v266 = vld [vmem:[%s0 + $0x3ec] sm:$0xf]
  %v267 = vld [vmem:[%s0 + $0x3f0] sm:$0xf]
  %v268 = vld [vmem:[%s0 + $0x3f4] sm:$0xf]
  %v269 = vld [vmem:[%s0 + $0x3f8] sm:$0xf]
  %v270 = vld [vmem:[%s0 + $0x3fc] sm:$0xf]
  %v271 = vld [vmem:[%s1] sm:$0xf]
  %v272 = vld [vmem:[%s1 + $0x4] sm:$0xf]
  %v273 = vld [vmem:[%s1 + $0x8] sm:$0xf]
  %v274 = vld [vmem:[%s1 + $0xc] sm:$0x3]
  %v275 = vld [vmem:[%s2] sm:$0x1]
  %v277 = vlaneseq
  %v278 = vshrl.u32 %v277, 7
  %v279 = vsub.s32 0, %v278
  %v280 = vrot.slane %v275, %v279
  %v538 = vunpack.c.l.b16 %v15
  %v539 = vunpack.c.l.b16 %v16
  %v540 = vunpack.c.l.b16 %v17
  %v541 = vunpack.c.l.b16 %v18
  %v542 = vunpack.c.l.b16 %v19
  %v543 = vunpack.c.l.b16 %v20
  %v544 = vunpack.c.l.b16 %v21
  %v545 = vunpack.c.l.b16 %v22
  %v546 = vunpack.c.l.b16 %v23
  %v547 = vunpack.c.l.b16 %v24
  %v548 = vunpack.c.l.b16 %v25
  %v549 = vunpack.c.l.b16 %v26
  %v550 = vunpack.c.l.b16 %v27
  %v551 = vunpack.c.l.b16 %v28
  %v552 = vunpack.c.l.b16 %v29
  %v553 = vunpack.c.l.b16 %v30
  %v554 = vunpack.c.l.b16 %v31
  %v555 = vunpack.c.l.b16 %v32
  %v556 = vunpack.c.l.b16 %v33
  %v557 = vunpack.c.l.b16 %v34
  %v558 = vunpack.c.l.b16 %v35
  %v559 = vunpack.c.l.b16 %v36
  %v560 = vunpack.c.l.b16 %v37
  %v561 = vunpack.c.l.b16 %v38
  %v562 = vunpack.c.l.b16 %v39
  %v563 = vunpack.c.l.b16 %v40
  %v564 = vunpack.c.l.b16 %v41
  %v565 = vunpack.c.l.b16 %v42
  %v566 = vunpack.c.l.b16 %v43
  %v567 = vunpack.c.l.b16 %v44
  %v568 = vunpack.c.l.b16 %v45
  %v569 = vunpack.c.l.b16 %v46
  %v570 = vunpack.c.l.b16 %v47
  %v571 = vunpack.c.l.b16 %v48
  %v572 = vunpack.c.l.b16 %v49
  %v573 = vunpack.c.l.b16 %v50
  %v574 = vunpack.c.l.b16 %v51
  %v575 = vunpack.c.l.b16 %v52
  %v576 = vunpack.c.l.b16 %v53
  %v577 = vunpack.c.l.b16 %v54
  %v578 = vunpack.c.l.b16 %v55
  %v579 = vunpack.c.l.b16 %v56
  %v580 = vunpack.c.l.b16 %v57
  %v581 = vunpack.c.l.b16 %v58
  %v582 = vunpack.c.l.b16 %v59
  %v583 = vunpack.c.l.b16 %v60
  %v584 = vunpack.c.l.b16 %v61
  %v585 = vunpack.c.l.b16 %v62
  %v586 = vunpack.c.l.b16 %v63
  %v587 = vunpack.c.l.b16 %v64
  %v588 = vunpack.c.l.b16 %v65
  %v589 = vunpack.c.l.b16 %v66
  %v590 = vunpack.c.l.b16 %v67
  %v591 = vunpack.c.l.b16 %v68
  %v592 = vunpack.c.l.b16 %v69
  %v593 = vunpack.c.l.b16 %v70
  %v594 = vunpack.c.l.b16 %v71
  %v595 = vunpack.c.l.b16 %v72
  %v596 = vunpack.c.l.b16 %v73
  %v597 = vunpack.c.l.b16 %v74
  %v598 = vunpack.c.l.b16 %v75
  %v599 = vunpack.c.l.b16 %v76
  %v600 = vunpack.c.l.b16 %v77
  %v601 = vunpack.c.l.b16 %v78
  %v602 = vunpack.c.l.b16 %v79
  %v603 = vunpack.c.l.b16 %v80
  %v604 = vunpack.c.l.b16 %v81
  %v605 = vunpack.c.l.b16 %v82
  %v606 = vunpack.c.l.b16 %v83
  %v607 = vunpack.c.l.b16 %v84
  %v608 = vunpack.c.l.b16 %v85
  %v609 = vunpack.c.l.b16 %v86
  %v610 = vunpack.c.l.b16 %v87
  %v611 = vunpack.c.l.b16 %v88
  %v612 = vunpack.c.l.b16 %v89
  %v613 = vunpack.c.l.b16 %v90
  %v614 = vunpack.c.l.b16 %v91
  %v615 = vunpack.c.l.b16 %v92
  %v616 = vunpack.c.l.b16 %v93
  %v617 = vunpack.c.l.b16 %v94
  %v618 = vunpack.c.l.b16 %v95
  %v619 = vunpack.c.l.b16 %v96
  %v620 = vunpack.c.l.b16 %v97
  %v621 = vunpack.c.l.b16 %v98
  %v622 = vunpack.c.l.b16 %v99
  %v623 = vunpack.c.l.b16 %v100
  %v624 = vunpack.c.l.b16 %v101
  %v625 = vunpack.c.l.b16 %v102
  %v626 = vunpack.c.l.b16 %v103
  %v627 = vunpack.c.l.b16 %v104
  %v628 = vunpack.c.l.b16 %v105
  %v629 = vunpack.c.l.b16 %v106
  %v630 = vunpack.c.l.b16 %v107
  %v631 = vunpack.c.l.b16 %v108
  %v632 = vunpack.c.l.b16 %v109
  %v633 = vunpack.c.l.b16 %v110
  %v634 = vunpack.c.l.b16 %v111
  %v635 = vunpack.c.l.b16 %v112
  %v636 = vunpack.c.l.b16 %v113
  %v637 = vunpack.c.l.b16 %v114
  %v638 = vunpack.c.l.b16 %v115
  %v639 = vunpack.c.l.b16 %v116
  %v640 = vunpack.c.l.b16 %v117
  %v641 = vunpack.c.l.b16 %v118
  %v642 = vunpack.c.l.b16 %v119
  %v643 = vunpack.c.l.b16 %v120
  %v644 = vunpack.c.l.b16 %v121
  %v645 = vunpack.c.l.b16 %v122
  %v646 = vunpack.c.l.b16 %v123
  %v647 = vunpack.c.l.b16 %v124
  %v648 = vunpack.c.l.b16 %v125
  %v649 = vunpack.c.l.b16 %v126
  %v650 = vunpack.c.l.b16 %v127
  %v651 = vunpack.c.l.b16 %v128
  %v652 = vunpack.c.l.b16 %v129
  %v653 = vunpack.c.l.b16 %v130
  %v654 = vunpack.c.l.b16 %v131
  %v655 = vunpack.c.l.b16 %v132
  %v656 = vunpack.c.l.b16 %v133
  %v657 = vunpack.c.l.b16 %v134
  %v658 = vunpack.c.l.b16 %v135
  %v659 = vunpack.c.l.b16 %v136
  %v660 = vunpack.c.l.b16 %v137
  %v661 = vunpack.c.l.b16 %v138
  %v662 = vunpack.c.l.b16 %v139
  %v663 = vunpack.c.l.b16 %v140
  %v664 = vunpack.c.l.b16 %v141
  %v665 = vunpack.c.l.b16 %v142
  %v666 = vunpack.c.l.b16 %v143
  %v667 = vunpack.c.l.b16 %v144
  %v668 = vunpack.c.l.b16 %v145
  %v669 = vunpack.c.l.b16 %v146
  %v670 = vunpack.c.l.b16 %v147
  %v671 = vunpack.c.l.b16 %v148
  %v672 = vunpack.c.l.b16 %v149
  %v673 = vunpack.c.l.b16 %v150
  %v674 = vunpack.c.l.b16 %v151
  %v675 = vunpack.c.l.b16 %v152
  %v676 = vunpack.c.l.b16 %v153
  %v677 = vunpack.c.l.b16 %v154
  %v678 = vunpack.c.l.b16 %v155
  %v679 = vunpack.c.l.b16 %v156
  %v680 = vunpack.c.l.b16 %v157
  %v681 = vunpack.c.l.b16 %v158
  %v682 = vunpack.c.l.b16 %v159
  %v683 = vunpack.c.l.b16 %v160
  %v684 = vunpack.c.l.b16 %v161
  %v685 = vunpack.c.l.b16 %v162
  %v686 = vunpack.c.l.b16 %v163
  %v687 = vunpack.c.l.b16 %v164
  %v688 = vunpack.c.l.b16 %v165
  %v689 = vunpack.c.l.b16 %v166
  %v690 = vunpack.c.l.b16 %v167
  %v691 = vunpack.c.l.b16 %v168
  %v692 = vunpack.c.l.b16 %v169
  %v693 = vunpack.c.l.b16 %v170
  %v694 = vunpack.c.l.b16 %v171
  %v695 = vunpack.c.l.b16 %v172
  %v696 = vunpack.c.l.b16 %v173
  %v697 = vunpack.c.l.b16 %v174
  %v698 = vunpack.c.l.b16 %v175
  %v699 = vunpack.c.l.b16 %v176
  %v700 = vunpack.c.l.b16 %v177
  %v701 = vunpack.c.l.b16 %v178
  %v702 = vunpack.c.l.b16 %v179
  %v703 = vunpack.c.l.b16 %v180
  %v704 = vunpack.c.l.b16 %v181
  %v705 = vunpack.c.l.b16 %v182
  %v706 = vunpack.c.l.b16 %v183
  %v707 = vunpack.c.l.b16 %v184
  %v708 = vunpack.c.l.b16 %v185
  %v709 = vunpack.c.l.b16 %v186
  %v710 = vunpack.c.l.b16 %v187
  %v711 = vunpack.c.l.b16 %v188
  %v712 = vunpack.c.l.b16 %v189
  %v713 = vunpack.c.l.b16 %v190
  %v714 = vunpack.c.l.b16 %v191
  %v715 = vunpack.c.l.b16 %v192
  %v716 = vunpack.c.l.b16 %v193
  %v717 = vunpack.c.l.b16 %v194
  %v718 = vunpack.c.l.b16 %v195
  %v719 = vunpack.c.l.b16 %v196
  %v720 = vunpack.c.l.b16 %v197
  %v721 = vunpack.c.l.b16 %v198
  %v722 = vunpack.c.l.b16 %v199
  %v723 = vunpack.c.l.b16 %v200
  %v724 = vunpack.c.l.b16 %v201
  %v725 = vunpack.c.l.b16 %v202
  %v726 = vunpack.c.l.b16 %v203
  %v727 = vunpack.c.l.b16 %v204
  %v728 = vunpack.c.l.b16 %v205
  %v729 = vunpack.c.l.b16 %v206
  %v730 = vunpack.c.l.b16 %v207
  %v731 = vunpack.c.l.b16 %v208
  %v732 = vunpack.c.l.b16 %v209
  %v733 = vunpack.c.l.b16 %v210
  %v734 = vunpack.c.l.b16 %v211
  %v735 = vunpack.c.l.b16 %v212
  %v736 = vunpack.c.l.b16 %v213
  %v737 = vunpack.c.l.b16 %v214
  %v738 = vunpack.c.l.b16 %v215
  %v739 = vunpack.c.l.b16 %v216
  %v740 = vunpack.c.l.b16 %v217
  %v741 = vunpack.c.l.b16 %v218
  %v742 = vunpack.c.l.b16 %v219
  %v743 = vunpack.c.l.b16 %v220
  %v744 = vunpack.c.l.b16 %v221
  %v745 = vunpack.c.l.b16 %v222
  %v746 = vunpack.c.l.b16 %v223
  %v747 = vunpack.c.l.b16 %v224
  %v748 = vunpack.c.l.b16 %v225
  %v749 = vunpack.c.l.b16 %v226
  %v750 = vunpack.c.l.b16 %v227
  %v751 = vunpack.c.l.b16 %v228
  %v752 = vunpack.c.l.b16 %v229
  %v753 = vunpack.c.l.b16 %v230
  %v754 = vunpack.c.l.b16 %v231
  %v755 = vunpack.c.l.b16 %v232
  %v756 = vunpack.c.l.b16 %v233
  %v757 = vunpack.c.l.b16 %v234
  %v758 = vunpack.c.l.b16 %v235
  %v759 = vunpack.c.l.b16 %v236
  %v760 = vunpack.c.l.b16 %v237
  %v761 = vunpack.c.l.b16 %v238
  %v762 = vunpack.c.l.b16 %v239
  %v763 = vunpack.c.l.b16 %v240
  %v764 = vunpack.c.l.b16 %v241
  %v765 = vunpack.c.l.b16 %v242
  %v766 = vunpack.c.l.b16 %v243
  %v767 = vunpack.c.l.b16 %v244
  %v768 = vunpack.c.l.b16 %v245
  %v769 = vunpack.c.l.b16 %v246
  %v770 = vunpack.c.l.b16 %v247
  %v771 = vunpack.c.l.b16 %v248
  %v772 = vunpack.c.l.b16 %v249
  %v773 = vunpack.c.l.b16 %v250
  %v774 = vunpack.c.l.b16 %v251
  %v775 = vunpack.c.l.b16 %v252
  %v776 = vunpack.c.l.b16 %v253
  %v777 = vunpack.c.l.b16 %v254
  %v778 = vunpack.c.l.b16 %v255
  %v779 = vunpack.c.l.b16 %v256
  %v780 = vunpack.c.l.b16 %v257
  %v781 = vunpack.c.l.b16 %v258
  %v782 = vunpack.c.l.b16 %v259
  %v783 = vunpack.c.l.b16 %v260
  %v784 = vunpack.c.l.b16 %v261
  %v785 = vunpack.c.l.b16 %v262
  %v786 = vunpack.c.l.b16 %v263
  %v787 = vunpack.c.l.b16 %v264
  %v788 = vunpack.c.l.b16 %v265
  %v789 = vunpack.c.l.b16 %v266
  %v790 = vunpack.c.l.b16 %v267
  %v791 = vunpack.c.l.b16 %v268
  %v792 = vunpack.c.l.b16 %v269
  %v793 = vunpack.c.l.b16 %v270
  %v794 = vpack.c.b16 %v539, %v538
  %v795 = vpack.c.b16 %v541, %v540
  %v796 = vpack.c.b16 %v543, %v542
  %v797 = vpack.c.b16 %v545, %v544
  %v798 = vpack.c.b16 %v547, %v546
  %v799 = vpack.c.b16 %v549, %v548
  %v800 = vpack.c.b16 %v551, %v550
  %v801 = vpack.c.b16 %v553, %v552
  %v802 = vpack.c.b16 %v555, %v554
  %v803 = vpack.c.b16 %v557, %v556
  %v804 = vpack.c.b16 %v559, %v558
  %v805 = vpack.c.b16 %v561, %v560
  %v806 = vpack.c.b16 %v563, %v562
  %v807 = vpack.c.b16 %v565, %v564
  %v808 = vpack.c.b16 %v567, %v566
  %v809 = vpack.c.b16 %v569, %v568
  %v810 = vpack.c.b16 %v571, %v570
  %v811 = vpack.c.b16 %v573, %v572
  %v812 = vpack.c.b16 %v575, %v574
  %v813 = vpack.c.b16 %v577, %v576
  %v814 = vpack.c.b16 %v579, %v578
  %v815 = vpack.c.b16 %v581, %v580
  %v816 = vpack.c.b16 %v583, %v582
  %v817 = vpack.c.b16 %v585, %v584
  %v818 = vpack.c.b16 %v587, %v586
  %v819 = vpack.c.b16 %v589, %v588
  %v820 = vpack.c.b16 %v591, %v590
  %v821 = vpack.c.b16 %v593, %v592
  %v822 = vpack.c.b16 %v595, %v594
  %v823 = vpack.c.b16 %v597, %v596
  %v824 = vpack.c.b16 %v599, %v598
  %v825 = vpack.c.b16 %v601, %v600
  %v826 = vpack.c.b16 %v603, %v602
  %v827 = vpack.c.b16 %v605, %v604
  %v828 = vpack.c.b16 %v607, %v606
  %v829 = vpack.c.b16 %v609, %v608
  %v830 = vpack.c.b16 %v611, %v610
  %v831 = vpack.c.b16 %v613, %v612
  %v832 = vpack.c.b16 %v615, %v614
  %v833 = vpack.c.b16 %v617, %v616
  %v834 = vpack.c.b16 %v619, %v618
  %v835 = vpack.c.b16 %v621, %v620
  %v836 = vpack.c.b16 %v623, %v622
  %v837 = vpack.c.b16 %v625, %v624
  %v838 = vpack.c.b16 %v627, %v626
  %v839 = vpack.c.b16 %v629, %v628
  %v840 = vpack.c.b16 %v631, %v630
  %v841 = vpack.c.b16 %v633, %v632
  %v842 = vpack.c.b16 %v635, %v634
  %v843 = vpack.c.b16 %v637, %v636
  %v844 = vpack.c.b16 %v639, %v638
  %v845 = vpack.c.b16 %v641, %v640
  %v846 = vpack.c.b16 %v643, %v642
  %v847 = vpack.c.b16 %v645, %v644
  %v848 = vpack.c.b16 %v647, %v646
  %v849 = vpack.c.b16 %v649, %v648
  %v850 = vpack.c.b16 %v651, %v650
  %v851 = vpack.c.b16 %v653, %v652
  %v852 = vpack.c.b16 %v655, %v654
  %v853 = vpack.c.b16 %v657, %v656
  %v854 = vpack.c.b16 %v659, %v658
  %v855 = vpack.c.b16 %v661, %v660
  %v856 = vpack.c.b16 %v663, %v662
  %v857 = vpack.c.b16 %v665, %v664
  %v858 = vpack.c.b16 %v667, %v666
  %v859 = vpack.c.b16 %v669, %v668
  %v860 = vpack.c.b16 %v671, %v670
  %v861 = vpack.c.b16 %v673, %v672
  %v862 = vpack.c.b16 %v675, %v674
  %v863 = vpack.c.b16 %v677, %v676
  %v864 = vpack.c.b16 %v679, %v678
  %v865 = vpack.c.b16 %v681, %v680
  %v866 = vpack.c.b16 %v683, %v682
  %v867 = vpack.c.b16 %v685, %v684
  %v868 = vpack.c.b16 %v687, %v686
  %v869 = vpack.c.b16 %v689, %v688
  %v870 = vpack.c.b16 %v691, %v690
  %v871 = vpack.c.b16 %v693, %v692
  %v872 = vpack.c.b16 %v695, %v694
  %v873 = vpack.c.b16 %v697, %v696
  %v874 = vpack.c.b16 %v699, %v698
  %v875 = vpack.c.b16 %v701, %v700
  %v876 = vpack.c.b16 %v703, %v702
  %v877 = vpack.c.b16 %v705, %v704
  %v878 = vpack.c.b16 %v707, %v706
  %v879 = vpack.c.b16 %v709, %v708
  %v880 = vpack.c.b16 %v711, %v710
  %v881 = vpack.c.b16 %v713, %v712
  %v882 = vpack.c.b16 %v715, %v714
  %v883 = vpack.c.b16 %v717, %v716
  %v884 = vpack.c.b16 %v719, %v718
  %v885 = vpack.c.b16 %v721, %v720
  %v886 = vpack.c.b16 %v723, %v722
  %v887 = vpack.c.b16 %v725, %v724
  %v888 = vpack.c.b16 %v727, %v726
  %v889 = vpack.c.b16 %v729, %v728
  %v890 = vpack.c.b16 %v731, %v730
  %v891 = vpack.c.b16 %v733, %v732
  %v892 = vpack.c.b16 %v735, %v734
  %v893 = vpack.c.b16 %v737, %v736
  %v894 = vpack.c.b16 %v739, %v738
  %v895 = vpack.c.b16 %v741, %v740
  %v896 = vpack.c.b16 %v743, %v742
  %v897 = vpack.c.b16 %v745, %v744
  %v898 = vpack.c.b16 %v747, %v746
  %v899 = vpack.c.b16 %v749, %v748
  %v900 = vpack.c.b16 %v751, %v750
  %v901 = vpack.c.b16 %v753, %v752
  %v902 = vpack.c.b16 %v755, %v754
  %v903 = vpack.c.b16 %v757, %v756
  %v904 = vpack.c.b16 %v759, %v758
  %v905 = vpack.c.b16 %v761, %v760
  %v906 = vpack.c.b16 %v763, %v762
  %v907 = vpack.c.b16 %v765, %v764
  %v908 = vpack.c.b16 %v767, %v766
  %v909 = vpack.c.b16 %v769, %v768
  %v910 = vpack.c.b16 %v771, %v770
  %v911 = vpack.c.b16 %v773, %v772
  %v912 = vpack.c.b16 %v775, %v774
  %v913 = vpack.c.b16 %v777, %v776
  %v914 = vpack.c.b16 %v779, %v778
  %v915 = vpack.c.b16 %v781, %v780
  %v916 = vpack.c.b16 %v783, %v782
  %v917 = vpack.c.b16 %v785, %v784
  %v918 = vpack.c.b16 %v787, %v786
  %v919 = vpack.c.b16 %v789, %v788
  %v920 = vpack.c.b16 %v791, %v790
  %v921 = vpack.c.b16 %v793, %v792
  %v926 = vunpack.c.l.b16 %v271
  %v927 = vunpack.c.l.b16 %v272
  %v928 = vunpack.c.l.b16 %v273
  %v929 = vunpack.c.l.b16 %v274
  %v930 = vpack.c.b16 %v927, %v926
  %v931 = vpack.c.b16 %v929, %v928
  %vm933 = vcmask 220160
  %v935 = vsel %vm933, %v794, 0
  %v938 = vsel %vm933, %v795, 0
  %v941 = vsel %vm933, %v796, 0
  %v944 = vsel %vm933, %v797, 0
  %v947 = vsel %vm933, %v798, 0
  %v950 = vsel %vm933, %v799, 0
  %v953 = vsel %vm933, %v800, 0
  %v956 = vsel %vm933, %v801, 0
  %v959 = vsel %vm933, %v802, 0
  %v962 = vsel %vm933, %v803, 0
  %v965 = vsel %vm933, %v804, 0
  %v968 = vsel %vm933, %v805, 0
  %v971 = vsel %vm933, %v806, 0
  %v974 = vsel %vm933, %v807, 0
  %v977 = vsel %vm933, %v808, 0
  %v980 = vsel %vm933, %v809, 0
  %v983 = vsel %vm933, %v810, 0
  %v986 = vsel %vm933, %v811, 0
  %v989 = vsel %vm933, %v812, 0
  %v992 = vsel %vm933, %v813, 0
  %v995 = vsel %vm933, %v814, 0
  %v998 = vsel %vm933, %v815, 0
  %v1001 = vsel %vm933, %v816, 0
  %v1004 = vsel %vm933, %v817, 0
  %v1007 = vsel %vm933, %v818, 0
  %v1010 = vsel %vm933, %v819, 0
  %v1013 = vsel %vm933, %v820, 0
  %v1016 = vsel %vm933, %v821, 0
  %v1019 = vsel %vm933, %v822, 0
  %v1022 = vsel %vm933, %v823, 0
  %v1025 = vsel %vm933, %v824, 0
  %v1028 = vsel %vm933, %v825, 0
  %v1031 = vsel %vm933, %v826, 0
  %v1034 = vsel %vm933, %v827, 0
  %v1037 = vsel %vm933, %v828, 0
  %v1040 = vsel %vm933, %v829, 0
  %v1043 = vsel %vm933, %v830, 0
  %v1046 = vsel %vm933, %v831, 0
  %v1049 = vsel %vm933, %v832, 0
  %v1052 = vsel %vm933, %v833, 0
  %v1055 = vsel %vm933, %v834, 0
  %v1058 = vsel %vm933, %v835, 0
  %v1061 = vsel %vm933, %v836, 0
  %v1064 = vsel %vm933, %v837, 0
  %v1067 = vsel %vm933, %v838, 0
  %v1070 = vsel %vm933, %v839, 0
  %v1073 = vsel %vm933, %v840, 0
  %v1076 = vsel %vm933, %v841, 0
  %v1079 = vsel %vm933, %v842, 0
  %v1082 = vsel %vm933, %v843, 0
  %v1085 = vsel %vm933, %v844, 0
  %v1088 = vsel %vm933, %v845, 0
  %v1091 = vsel %vm933, %v846, 0
  %v1094 = vsel %vm933, %v847, 0
  %v1097 = vsel %vm933, %v848, 0
  %v1100 = vsel %vm933, %v849, 0
  %v1103 = vsel %vm933, %v850, 0
  %v1106 = vsel %vm933, %v851, 0
  %v1109 = vsel %vm933, %v852, 0
  %v1112 = vsel %vm933, %v853, 0
  %v1115 = vsel %vm933, %v854, 0
  %v1118 = vsel %vm933, %v855, 0
  %v1121 = vsel %vm933, %v856, 0
  %v1124 = vsel %vm933, %v857, 0
  %v1127 = vsel %vm933, %v858, 0
  %v1130 = vsel %vm933, %v859, 0
  %v1133 = vsel %vm933, %v860, 0
  %v1136 = vsel %vm933, %v861, 0
  %v1139 = vsel %vm933, %v862, 0
  %v1142 = vsel %vm933, %v863, 0
  %v1145 = vsel %vm933, %v864, 0
  %v1148 = vsel %vm933, %v865, 0
  %v1151 = vsel %vm933, %v866, 0
  %v1154 = vsel %vm933, %v867, 0
  %v1157 = vsel %vm933, %v868, 0
  %v1160 = vsel %vm933, %v869, 0
  %v1163 = vsel %vm933, %v870, 0
  %v1166 = vsel %vm933, %v871, 0
  %v1169 = vsel %vm933, %v872, 0
  %v1172 = vsel %vm933, %v873, 0
  %v1175 = vsel %vm933, %v874, 0
  %v1178 = vsel %vm933, %v875, 0
  %v1181 = vsel %vm933, %v876, 0
  %v1184 = vsel %vm933, %v877, 0
  %v1187 = vsel %vm933, %v878, 0
  %v1190 = vsel %vm933, %v879, 0
  %v1193 = vsel %vm933, %v880, 0
  %v1196 = vsel %vm933, %v881, 0
  %v1199 = vsel %vm933, %v882, 0
  %v1202 = vsel %vm933, %v883, 0
  %v1205 = vsel %vm933, %v884, 0
  %v1208 = vsel %vm933, %v885, 0
  %v1211 = vsel %vm933, %v886, 0
  %v1214 = vsel %vm933, %v887, 0
  %v1217 = vsel %vm933, %v888, 0
  %v1220 = vsel %vm933, %v889, 0
  %v1223 = vsel %vm933, %v890, 0
  %v1226 = vsel %vm933, %v891, 0
  %v1229 = vsel %vm933, %v892, 0
  %v1232 = vsel %vm933, %v893, 0
  %v1235 = vsel %vm933, %v894, 0
  %v1238 = vsel %vm933, %v895, 0
  %v1241 = vsel %vm933, %v896, 0
  %v1244 = vsel %vm933, %v897, 0
  %v1247 = vsel %vm933, %v898, 0
  %v1250 = vsel %vm933, %v899, 0
  %v1253 = vsel %vm933, %v900, 0
  %v1256 = vsel %vm933, %v901, 0
  %v1259 = vsel %vm933, %v902, 0
  %v1262 = vsel %vm933, %v903, 0
  %v1265 = vsel %vm933, %v904, 0
  %v1268 = vsel %vm933, %v905, 0
  %v1271 = vsel %vm933, %v906, 0
  %v1274 = vsel %vm933, %v907, 0
  %v1277 = vsel %vm933, %v908, 0
  %v1280 = vsel %vm933, %v909, 0
  %v1283 = vsel %vm933, %v910, 0
  %v1286 = vsel %vm933, %v911, 0
  %v1289 = vsel %vm933, %v912, 0
  %v1292 = vsel %vm933, %v913, 0
  %v1295 = vsel %vm933, %v914, 0
  %v1298 = vsel %vm933, %v915, 0
  %v1301 = vsel %vm933, %v916, 0
  %v1304 = vsel %vm933, %v917, 0
  %v1307 = vsel %vm933, %v918, 0
  %v1310 = vsel %vm933, %v919, 0
  %v1313 = vsel %vm933, %v920, 0
  %v1316 = vsel %vm933, %v921, 0
  %vm1318 = vcmask 1044480
  %vm1319 = vcmask 1045504
  %v1320 = vsel %vm1318, 4294967295, 65535
  %v1321 = vsel %vm1319, %v1320, 0
  %v1323 = vand.u32 %v931, %v1321
  %1325 = vmatprep.subr.bf16.mxu0 0
  %1326 = vmatpush1.bf16.msra.mxu0 %v930
  %1327 = vmatprep.subr.bf16.mxu0 0
  %1328 = vmatpush1.bf16.msra.mxu0 %v1323
  %1329 = vmatprep.subr.bf16.mxu0 0
  %1330 = vmatpush1.bf16.msra.mxu0 0
  %1331 = vmatprep.subr.bf16.mxu0 0
  %1332 = vmatpush1.bf16.msra.mxu0 0
  %1333 = vmatprep.subr.bf16.mxu0 0
  %1334 = vmatpush1.bf16.msra.mxu0 0
  %1335 = vmatprep.subr.bf16.mxu0 0
  %1336 = vmatpush1.bf16.msra.mxu0 0
  %1337 = vmatprep.subr.bf16.mxu0 0
  %1338 = vmatpush1.bf16.msra.mxu0 0
  %1339 = vmatprep.subr.bf16.mxu0 0
  %1340 = vmatpush1.bf16.msra.mxu0 0
  %1341 = vmatprep.subr.bf16.mxu0 0
  %1342 = vmatpush1.bf16.msra.mxu0 0
  %1343 = vmatprep.subr.bf16.mxu0 0
  %1344 = vmatpush1.bf16.msra.mxu0 0
  %1345 = vmatprep.subr.bf16.mxu0 0
  %1346 = vmatpush1.bf16.msra.mxu0 0
  %1347 = vmatprep.subr.bf16.mxu0 0
  %1348 = vmatpush1.bf16.msra.mxu0 0
  %1349 = vmatprep.subr.bf16.mxu0 0
  %1350 = vmatpush1.bf16.msra.mxu0 0
  %1351 = vmatprep.subr.bf16.mxu0 0
  %1352 = vmatpush1.bf16.msra.mxu0 0
  %1353 = vmatprep.subr.bf16.mxu0 0
  %1354 = vmatpush1.bf16.msra.mxu0 0
  %1355 = vmatprep.subr.bf16.mxu0 0
  %1356 = vmatpush1.bf16.msra.mxu0 0
  %1357 = vmatprep.mubr.bf16.mxu0 0
  %1358 = vmatmul.mubr.bf16.gmra.mrb[0].mxu0 %v935
  %v1359 = vpop.f32.mrb[0].mxu0
  %v1360 = vadd.f32 %v280, %v1359
  %v1361 = vpop.f32.mrb[0].mxu0
  %v1362 = vpop.f32.mrb[0].mxu0
  %v1363 = vadd.f32 %v280, %v1362
  %v1364 = vpop.f32.mrb[0].mxu0
  %1365 = vmatprep.mubr.bf16.mxu0 0
  %1366 = vmatmul.mubr.bf16.gmra.mrb[0].mxu0 %v938
  %v1367 = vpop.f32.mrb[0].mxu0
  %v1368 = vadd.f32 %v280, %v1367
  %v1369 = vpop.f32.mrb[0].mxu0
  %v1370 = vpop.f32.mrb[0].mxu0
  %v1371 = vadd.f32 %v280, %v1370
  %v1372 = vpop.f32.mrb[0].mxu0
  %1373 = vmatprep.mubr.bf16.mxu0 0
  %1374 = vmatmul.mubr.bf16.gmra.mrb[0].mxu0 %v941
  %v1375 = vpop.f32.mrb[0].mxu0
  %v1376 = vadd.f32 %v280, %v1375
  %v1377 = vpop.f32.mrb[0].mxu0
  %v1378 = vpop.f32.mrb[0].mxu0
  %v1379 = vadd.f32 %v280, %v1378
  %v1380 = vpop.f32.mrb[0].mxu0
  %1381 = vmatprep.mubr.bf16.mxu0 0
  %1382 = vmatmul.mubr.bf16.gmra.mrb[0].mxu0 %v944
  %v1383 = vpop.f32.mrb[0].mxu0
  %v1384 = vadd.f32 %v280, %v1383
  %v1385 = vpop.f32.mrb[0].mxu0
  %v1386 = vpop.f32.mrb[0].mxu0
  %v1387 = vadd.f32 %v280, %v1386
  %v1388 = vpop.f32.mrb[0].mxu0
  %1389 = vmatprep.mubr.bf16.mxu0 0
  %1390 = vmatmul.mubr.bf16.gmra.mrb[0].mxu0 %v947
  %v1391 = vpop.f32.mrb[0].mxu0
  %v1392 = vadd.f32 %v280, %v1391
  %v1393 = vpop.f32.mrb[0].mxu0
  %v1394 = vpop.f32.mrb[0].mxu0
  %v1395 = vadd.f32 %v280, %v1394
  %v1396 = vpop.f32.mrb[0].mxu0
  %1397 = vmatprep.mubr.bf16.mxu0 0
  %1398 = vmatmul.mubr.bf16.gmra.mrb[0].mxu0 %v950
  %v1399 = vpop.f32.mrb[0].mxu0
  %v1400 = vadd.f32 %v280, %v1399
  %v1401 = vpop.f32.mrb[0].mxu0
  %v1402 = vpop.f32.mrb[0].mxu0
  %v1403 = vadd.f32 %v280, %v1402
  %v1404 = vpop.f32.mrb[0].mxu0
  %1405 = vmatprep.mubr.bf16.mxu0 0
  %1406 = vmatmul.mubr.bf16.gmra.mrb[0].mxu0 %v953
  %v1407 = vpop.f32.mrb[0].mxu0
  %v1408 = vadd.f32 %v280, %v1407
  %v1409 = vpop.f32.mrb[0].mxu0
  %v1410 = vpop.f32.mrb[0].mxu0
  %v1411 = vadd.f32 %v280, %v1410
  %v1412 = vpop.f32.mrb[0].mxu0
  %1413 = vmatprep.mubr.bf16.mxu0 0
  %1414 = vmatmul.mubr.bf16.gmra.mrb[0].mxu0 %v956
  %v1415 = vpop.f32.mrb[0].mxu0
  %v1416 = vadd.f32 %v280, %v1415
  %v1417 = vpop.f32.mrb[0].mxu0
  %v1418 = vpop.f32.mrb[0].mxu0
  %v1419 = vadd.f32 %v280, %v1418
  %v1420 = vpop.f32.mrb[0].mxu0
  %1421 = vmatprep.mubr.bf16.mxu0 0
  %1422 = vmatmul.mubr.bf16.gmra.mrb[0].mxu0 %v959
  %v1423 = vpop.f32.mrb[0].mxu0
  %v1424 = vadd.f32 %v280, %v1423
  %v1425 = vpop.f32.mrb[0].mxu0
  %v1426 = vpop.f32.mrb[0].mxu0
  %v1427 = vadd.f32 %v280, %v1426
  %v1428 = vpop.f32.mrb[0].mxu0
  %1429 = vmatprep.mubr.bf16.mxu0 0
  %1430 = vmatmul.mubr.bf16.gmra.mrb[0].mxu0 %v962
  %v1431 = vpop.f32.mrb[0].mxu0
  %v1432 = vadd.f32 %v280, %v1431
  %v1433 = vpop.f32.mrb[0].mxu0
  %v1434 = vpop.f32.mrb[0].mxu0
  %v1435 = vadd.f32 %v280, %v1434
  %v1436 = vpop.f32.mrb[0].mxu0
  %1437 = vmatprep.mubr.bf16.mxu0 0
  %1438 = vmatmul.mubr.bf16.gmra.mrb[0].mxu0 %v965
  %v1439 = vpop.f32.mrb[0].mxu0
  %v1440 = vadd.f32 %v280, %v1439
  %v1441 = vpop.f32.mrb[0].mxu0
  %v1442 = vpop.f32.mrb[0].mxu0
  %v1443 = vadd.f32 %v280, %v1442
  %v1444 = vpop.f32.mrb[0].mxu0
  %1445 = vmatprep.mubr.bf16.mxu0 0
  %1446 = vmatmul.mubr.bf16.gmra.mrb[0].mxu0 %v968
  %v1447 = vpop.f32.mrb[0].mxu0
  %v1448 = vadd.f32 %v280, %v1447
  %v1449 = vpop.f32.mrb[0].mxu0
  %v1450 = vpop.f32.mrb[0].mxu0
  %v1451 = vadd.f32 %v280, %v1450
  %v1452 = vpop.f32.mrb[0].mxu0
  %1453 = vmatprep.mubr.bf16.mxu0 0
  %1454 = vmatmul.mubr.bf16.gmra.mrb[0].mxu0 %v971
  %v1455 = vpop.f32.mrb[0].mxu0
  %v1456 = vadd.f32 %v280, %v1455
  %v1457 = vpop.f32.mrb[0].mxu0
  %v1458 = vpop.f32.mrb[0].mxu0
  %v1459 = vadd.f32 %v280, %v1458
  %v1460 = vpop.f32.mrb[0].mxu0
  %1461 = vmatprep.mubr.bf16.mxu0 0
  %1462 = vmatmul.mubr.bf16.gmra.mrb[0].mxu0 %v974
  %v1463 = vpop.f32.mrb[0].mxu0
  %v1464 = vadd.f32 %v280, %v1463
  %v1465 = vpop.f32.mrb[0].mxu0
  %v1466 = vpop.f32.mrb[0].mxu0
  %v1467 = vadd.f32 %v280, %v1466
  %v1468 = vpop.f32.mrb[0].mxu0
  %1469 = vmatprep.mubr.bf16.mxu0 0
  %1470 = vmatmul.mubr.bf16.gmra.mrb[0].mxu0 %v977
  %v1471 = vpop.f32.mrb[0].mxu0
  %v1472 = vadd.f32 %v280, %v1471
  %v1473 = vpop.f32.mrb[0].mxu0
  %v1474 = vpop.f32.mrb[0].mxu0
  %v1475 = vadd.f32 %v280, %v1474
  %v1476 = vpop.f32.mrb[0].mxu0
  %1477 = vmatprep.mubr.bf16.mxu0 0
  %1478 = vmatmul.mubr.bf16.gmra.mrb[0].mxu0 %v980
  %v1479 = vpop.f32.mrb[0].mxu0
  %v1480 = vadd.f32 %v280, %v1479
  %v1481 = vpop.f32.mrb[0].mxu0
  %v1482 = vpop.f32.mrb[0].mxu0
  %v1483 = vadd.f32 %v280, %v1482
  %v1484 = vpop.f32.mrb[0].mxu0
  %1485 = vmatprep.mubr.bf16.mxu0 0
  %1486 = vmatmul.mubr.bf16.gmra.mrb[0].mxu0 %v983
  %v1487 = vpop.f32.mrb[0].mxu0
  %v1488 = vadd.f32 %v280, %v1487
  %v1489 = vpop.f32.mrb[0].mxu0
  %v1490 = vpop.f32.mrb[0].mxu0
  %v1491 = vadd.f32 %v280, %v1490
  %v1492 = vpop.f32.mrb[0].mxu0
  %1493 = vmatprep.mubr.bf16.mxu0 0
  %1494 = vmatmul.mubr.bf16.gmra.mrb[0].mxu0 %v986
  %v1495 = vpop.f32.mrb[0].mxu0
  %v1496 = vadd.f32 %v280, %v1495
  %v1497 = vpop.f32.mrb[0].mxu0
  %v1498 = vpop.f32.mrb[0].mxu0
  %v1499 = vadd.f32 %v280, %v1498
  %v1500 = vpop.f32.mrb[0].mxu0
  %1501 = vmatprep.mubr.bf16.mxu0 0
  %1502 = vmatmul.mubr.bf16.gmra.mrb[0].mxu0 %v989
  %v1503 = vpop.f32.mrb[0].mxu0
  %v1504 = vadd.f32 %v280, %v1503
  %v1505 = vpop.f32.mrb[0].mxu0
  %v1506 = vpop.f32.mrb[0].mxu0
  %v1507 = vadd.f32 %v280, %v1506
  %v1508 = vpop.f32.mrb[0].mxu0
  %1509 = vmatprep.mubr.bf16.mxu0 0
  %1510 = vmatmul.mubr.bf16.gmra.mrb[0].mxu0 %v992
  %v1511 = vpop.f32.mrb[0].mxu0
  %v1512 = vadd.f32 %v280, %v1511
  %v1513 = vpop.f32.mrb[0].mxu0
  %v1514 = vpop.f32.mrb[0].mxu0
  %v1515 = vadd.f32 %v280, %v1514
  %v1516 = vpop.f32.mrb[0].mxu0
  %1517 = vmatprep.mubr.bf16.mxu0 0
  %1518 = vmatmul.mubr.bf16.gmra.mrb[0].mxu0 %v995
  %v1519 = vpop.f32.mrb[0].mxu0
  %v1520 = vadd.f32 %v280, %v1519
  %v1521 = vpop.f32.mrb[0].mxu0
  %v1522 = vpop.f32.mrb[0].mxu0
  %v1523 = vadd.f32 %v280, %v1522
  %v1524 = vpop.f32.mrb[0].mxu0
  %1525 = vmatprep.mubr.bf16.mxu0 0
  %1526 = vmatmul.mubr.bf16.gmra.mrb[0].mxu0 %v998
  %v1527 = vpop.f32.mrb[0].mxu0
  %v1528 = vadd.f32 %v280, %v1527
  %v1529 = vpop.f32.mrb[0].mxu0
  %v1530 = vpop.f32.mrb[0].mxu0
  %v1531 = vadd.f32 %v280, %v1530
  %v1532 = vpop.f32.mrb[0].mxu0
  %1533 = vmatprep.mubr.bf16.mxu0 0
  %1534 = vmatmul.mubr.bf16.gmra.mrb[0].mxu0 %v1001
  %v1535 = vpop.f32.mrb[0].mxu0
  %v1536 = vadd.f32 %v280, %v1535
  %v1537 = vpop.f32.mrb[0].mxu0
  %v1538 = vpop.f32.mrb[0].mxu0
  %v1539 = vadd.f32 %v280, %v1538
  %v1540 = vpop.f32.mrb[0].mxu0
  %1541 = vmatprep.mubr.bf16.mxu0 0
  %1542 = vmatmul.mubr.bf16.gmra.mrb[0].mxu0 %v1004
  %v1543 = vpop.f32.mrb[0].mxu0
  %v1544 = vadd.f32 %v280, %v1543
  %v1545 = vpop.f32.mrb[0].mxu0
  %v1546 = vpop.f32.mrb[0].mxu0
  %v1547 = vadd.f32 %v280, %v1546
  %v1548 = vpop.f32.mrb[0].mxu0
  %1549 = vmatprep.mubr.bf16.mxu0 0
  %1550 = vmatmul.mubr.bf16.gmra.mrb[0].mxu0 %v1007
  %v1551 = vpop.f32.mrb[0].mxu0
  %v1552 = vadd.f32 %v280, %v1551
  %v1553 = vpop.f32.mrb[0].mxu0
  %v1554 = vpop.f32.mrb[0].mxu0
  %v1555 = vadd.f32 %v280, %v1554
  %v1556 = vpop.f32.mrb[0].mxu0
  %1557 = vmatprep.mubr.bf16.mxu0 0
  %1558 = vmatmul.mubr.bf16.gmra.mrb[0].mxu0 %v1010
  %v1559 = vpop.f32.mrb[0].mxu0
  %v1560 = vadd.f32 %v280, %v1559
  %v1561 = vpop.f32.mrb[0].mxu0
  %v1562 = vpop.f32.mrb[0].mxu0
  %v1563 = vadd.f32 %v280, %v1562
  %v1564 = vpop.f32.mrb[0].mxu0
  %1565 = vmatprep.mubr.bf16.mxu0 0
  %1566 = vmatmul.mubr.bf16.gmra.mrb[0].mxu0 %v1013
  %v1567 = vpop.f32.mrb[0].mxu0
  %v1568 = vadd.f32 %v280, %v1567
  %v1569 = vpop.f32.mrb[0].mxu0
  %v1570 = vpop.f32.mrb[0].mxu0
  %v1571 = vadd.f32 %v280, %v1570
  %v1572 = vpop.f32.mrb[0].mxu0
  %1573 = vmatprep.mubr.bf16.mxu0 0
  %1574 = vmatmul.mubr.bf16.gmra.mrb[0].mxu0 %v1016
  %v1575 = vpop.f32.mrb[0].mxu0
  %v1576 = vadd.f32 %v280, %v1575
  %v1577 = vpop.f32.mrb[0].mxu0
  %v1578 = vpop.f32.mrb[0].mxu0
  %v1579 = vadd.f32 %v280, %v1578
  %v1580 = vpop.f32.mrb[0].mxu0
  %1581 = vmatprep.mubr.bf16.mxu0 0
  %1582 = vmatmul.mubr.bf16.gmra.mrb[0].mxu0 %v1019
  %v1583 = vpop.f32.mrb[0].mxu0
  %v1584 = vadd.f32 %v280, %v1583
  %v1585 = vpop.f32.mrb[0].mxu0
  %v1586 = vpop.f32.mrb[0].mxu0
  %v1587 = vadd.f32 %v280, %v1586
  %v1588 = vpop.f32.mrb[0].mxu0
  %1589 = vmatprep.mubr.bf16.mxu0 0
  %1590 = vmatmul.mubr.bf16.gmra.mrb[0].mxu0 %v1022
  %v1591 = vpop.f32.mrb[0].mxu0
  %v1592 = vadd.f32 %v280, %v1591
  %v1593 = vpop.f32.mrb[0].mxu0
  %v1594 = vpop.f32.mrb[0].mxu0
  %v1595 = vadd.f32 %v280, %v1594
  %v1596 = vpop.f32.mrb[0].mxu0
  %1597 = vmatprep.mubr.bf16.mxu0 0
  %1598 = vmatmul.mubr.bf16.gmra.mrb[0].mxu0 %v1025
  %v1599 = vpop.f32.mrb[0].mxu0
  %v1600 = vadd.f32 %v280, %v1599
  %v1601 = vpop.f32.mrb[0].mxu0
  %v1602 = vpop.f32.mrb[0].mxu0
  %v1603 = vadd.f32 %v280, %v1602
  %v1604 = vpop.f32.mrb[0].mxu0
  %1605 = vmatprep.mubr.bf16.mxu0 0
  %1606 = vmatmul.mubr.bf16.gmra.mrb[0].mxu0 %v1028
  %v1607 = vpop.f32.mrb[0].mxu0
  %v1608 = vadd.f32 %v280, %v1607
  %v1609 = vpop.f32.mrb[0].mxu0
  %v1610 = vpop.f32.mrb[0].mxu0
  %v1611 = vadd.f32 %v280, %v1610
  %v1612 = vpop.f32.mrb[0].mxu0
  %1613 = vmatprep.mubr.bf16.mxu0 0
  %1614 = vmatmul.mubr.bf16.gmra.mrb[0].mxu0 %v1031
  %v1615 = vpop.f32.mrb[0].mxu0
  %v1616 = vadd.f32 %v280, %v1615
  %v1617 = vpop.f32.mrb[0].mxu0
  %v1618 = vpop.f32.mrb[0].mxu0
  %v1619 = vadd.f32 %v280, %v1618
  %v1620 = vpop.f32.mrb[0].mxu0
  %1621 = vmatprep.mubr.bf16.mxu0 0
  %1622 = vmatmul.mubr.bf16.gmra.mrb[0].mxu0 %v1034
  %v1623 = vpop.f32.mrb[0].mxu0
  %v1624 = vadd.f32 %v280, %v1623
  %v1625 = vpop.f32.mrb[0].mxu0
  %v1626 = vpop.f32.mrb[0].mxu0
  %v1627 = vadd.f32 %v280, %v1626
  %v1628 = vpop.f32.mrb[0].mxu0
  %1629 = vmatprep.mubr.bf16.mxu0 0
  %1630 = vmatmul.mubr.bf16.gmra.mrb[0].mxu0 %v1037
  %v1631 = vpop.f32.mrb[0].mxu0
  %v1632 = vadd.f32 %v280, %v1631
  %v1633 = vpop.f32.mrb[0].mxu0
  %v1634 = vpop.f32.mrb[0].mxu0
  %v1635 = vadd.f32 %v280, %v1634
  %v1636 = vpop.f32.mrb[0].mxu0
  %1637 = vmatprep.mubr.bf16.mxu0 0
  %1638 = vmatmul.mubr.bf16.gmra.mrb[0].mxu0 %v1040
  %v1639 = vpop.f32.mrb[0].mxu0
  %v1640 = vadd.f32 %v280, %v1639
  %v1641 = vpop.f32.mrb[0].mxu0
  %v1642 = vpop.f32.mrb[0].mxu0
  %v1643 = vadd.f32 %v280, %v1642
  %v1644 = vpop.f32.mrb[0].mxu0
  %1645 = vmatprep.mubr.bf16.mxu0 0
  %1646 = vmatmul.mubr.bf16.gmra.mrb[0].mxu0 %v1043
  %v1647 = vpop.f32.mrb[0].mxu0
  %v1648 = vadd.f32 %v280, %v1647
  %v1649 = vpop.f32.mrb[0].mxu0
  %v1650 = vpop.f32.mrb[0].mxu0
  %v1651 = vadd.f32 %v280, %v1650
  %v1652 = vpop.f32.mrb[0].mxu0
  %1653 = vmatprep.mubr.bf16.mxu0 0
  %1654 = vmatmul.mubr.bf16.gmra.mrb[0].mxu0 %v1046
  %v1655 = vpop.f32.mrb[0].mxu0
  %v1656 = vadd.f32 %v280, %v1655
  %v1657 = vpop.f32.mrb[0].mxu0
  %v1658 = vpop.f32.mrb[0].mxu0
  %v1659 = vadd.f32 %v280, %v1658
  %v1660 = vpop.f32.mrb[0].mxu0
  %1661 = vmatprep.mubr.bf16.mxu0 0
  %1662 = vmatmul.mubr.bf16.gmra.mrb[0].mxu0 %v1049
  %v1663 = vpop.f32.mrb[0].mxu0
  %v1664 = vadd.f32 %v280, %v1663
  %v1665 = vpop.f32.mrb[0].mxu0
  %v1666 = vpop.f32.mrb[0].mxu0
  %v1667 = vadd.f32 %v280, %v1666
  %v1668 = vpop.f32.mrb[0].mxu0
  %1669 = vmatprep.mubr.bf16.mxu0 0
  %1670 = vmatmul.mubr.bf16.gmra.mrb[0].mxu0 %v1052
  %v1671 = vpop.f32.mrb[0].mxu0
  %v1672 = vadd.f32 %v280, %v1671
  %v1673 = vpop.f32.mrb[0].mxu0
  %v1674 = vpop.f32.mrb[0].mxu0
  %v1675 = vadd.f32 %v280, %v1674
  %v1676 = vpop.f32.mrb[0].mxu0
  %1677 = vmatprep.mubr.bf16.mxu0 0
  %1678 = vmatmul.mubr.bf16.gmra.mrb[0].mxu0 %v1055
  %v1679 = vpop.f32.mrb[0].mxu0
  %v1680 = vadd.f32 %v280, %v1679
  %v1681 = vpop.f32.mrb[0].mxu0
  %v1682 = vpop.f32.mrb[0].mxu0
  %v1683 = vadd.f32 %v280, %v1682
  %v1684 = vpop.f32.mrb[0].mxu0
  %1685 = vmatprep.mubr.bf16.mxu0 0
  %1686 = vmatmul.mubr.bf16.gmra.mrb[0].mxu0 %v1058
  %v1687 = vpop.f32.mrb[0].mxu0
  %v1688 = vadd.f32 %v280, %v1687
  %v1689 = vpop.f32.mrb[0].mxu0
  %v1690 = vpop.f32.mrb[0].mxu0
  %v1691 = vadd.f32 %v280, %v1690
  %v1692 = vpop.f32.mrb[0].mxu0
  %1693 = vmatprep.mubr.bf16.mxu0 0
  %1694 = vmatmul.mubr.bf16.gmra.mrb[0].mxu0 %v1061
  %v1695 = vpop.f32.mrb[0].mxu0
  %v1696 = vadd.f32 %v280, %v1695
  %v1697 = vpop.f32.mrb[0].mxu0
  %v1698 = vpop.f32.mrb[0].mxu0
  %v1699 = vadd.f32 %v280, %v1698
  %v1700 = vpop.f32.mrb[0].mxu0
  %1701 = vmatprep.mubr.bf16.mxu0 0
  %1702 = vmatmul.mubr.bf16.gmra.mrb[0].mxu0 %v1064
  %v1703 = vpop.f32.mrb[0].mxu0
  %v1704 = vadd.f32 %v280, %v1703
  %v1705 = vpop.f32.mrb[0].mxu0
  %v1706 = vpop.f32.mrb[0].mxu0
  %v1707 = vadd.f32 %v280, %v1706
  %v1708 = vpop.f32.mrb[0].mxu0
  %1709 = vmatprep.mubr.bf16.mxu0 0
  %1710 = vmatmul.mubr.bf16.gmra.mrb[0].mxu0 %v1067
  %v1711 = vpop.f32.mrb[0].mxu0
  %v1712 = vadd.f32 %v280, %v1711
  %v1713 = vpop.f32.mrb[0].mxu0
  %v1714 = vpop.f32.mrb[0].mxu0
  %v1715 = vadd.f32 %v280, %v1714
  %v1716 = vpop.f32.mrb[0].mxu0
  %1717 = vmatprep.mubr.bf16.mxu0 0
  %1718 = vmatmul.mubr.bf16.gmra.mrb[0].mxu0 %v1070
  %v1719 = vpop.f32.mrb[0].mxu0
  %v1720 = vadd.f32 %v280, %v1719
  %v1721 = vpop.f32.mrb[0].mxu0
  %v1722 = vpop.f32.mrb[0].mxu0
  %v1723 = vadd.f32 %v280, %v1722
  %v1724 = vpop.f32.mrb[0].mxu0
  %1725 = vmatprep.mubr.bf16.mxu0 0
  %1726 = vmatmul.mubr.bf16.gmra.mrb[0].mxu0 %v1073
  %v1727 = vpop.f32.mrb[0].mxu0
  %v1728 = vadd.f32 %v280, %v1727
  %v1729 = vpop.f32.mrb[0].mxu0
  %v1730 = vpop.f32.mrb[0].mxu0
  %v1731 = vadd.f32 %v280, %v1730
  %v1732 = vpop.f32.mrb[0].mxu0
  %1733 = vmatprep.mubr.bf16.mxu0 0
  %1734 = vmatmul.mubr.bf16.gmra.mrb[0].mxu0 %v1076
  %v1735 = vpop.f32.mrb[0].mxu0
  %v1736 = vadd.f32 %v280, %v1735
  %v1737 = vpop.f32.mrb[0].mxu0
  %v1738 = vpop.f32.mrb[0].mxu0
  %v1739 = vadd.f32 %v280, %v1738
  %v1740 = vpop.f32.mrb[0].mxu0
  %1741 = vmatprep.mubr.bf16.mxu0 0
  %1742 = vmatmul.mubr.bf16.gmra.mrb[0].mxu0 %v1079
  %v1743 = vpop.f32.mrb[0].mxu0
  %v1744 = vadd.f32 %v280, %v1743
  %v1745 = vpop.f32.mrb[0].mxu0
  %v1746 = vpop.f32.mrb[0].mxu0
  %v1747 = vadd.f32 %v280, %v1746
  %v1748 = vpop.f32.mrb[0].mxu0
  %1749 = vmatprep.mubr.bf16.mxu0 0
  %1750 = vmatmul.mubr.bf16.gmra.mrb[0].mxu0 %v1082
  %v1751 = vpop.f32.mrb[0].mxu0
  %v1752 = vadd.f32 %v280, %v1751
  %v1753 = vpop.f32.mrb[0].mxu0
  %v1754 = vpop.f32.mrb[0].mxu0
  %v1755 = vadd.f32 %v280, %v1754
  %v1756 = vpop.f32.mrb[0].mxu0
  %1757 = vmatprep.mubr.bf16.mxu0 0
  %1758 = vmatmul.mubr.bf16.gmra.mrb[0].mxu0 %v1085
  %v1759 = vpop.f32.mrb[0].mxu0
  %v1760 = vadd.f32 %v280, %v1759
  %v1761 = vpop.f32.mrb[0].mxu0
  %v1762 = vpop.f32.mrb[0].mxu0
  %v1763 = vadd.f32 %v280, %v1762
  %v1764 = vpop.f32.mrb[0].mxu0
  %1765 = vmatprep.mubr.bf16.mxu0 0
  %1766 = vmatmul.mubr.bf16.gmra.mrb[0].mxu0 %v1088
  %v1767 = vpop.f32.mrb[0].mxu0
  %v1768 = vadd.f32 %v280, %v1767
  %v1769 = vpop.f32.mrb[0].mxu0
  %v1770 = vpop.f32.mrb[0].mxu0
  %v1771 = vadd.f32 %v280, %v1770
  %v1772 = vpop.f32.mrb[0].mxu0
  %1773 = vmatprep.mubr.bf16.mxu0 0
  %1774 = vmatmul.mubr.bf16.gmra.mrb[0].mxu0 %v1091
  %v1775 = vpop.f32.mrb[0].mxu0
  %v1776 = vadd.f32 %v280, %v1775
  %v1777 = vpop.f32.mrb[0].mxu0
  %v1778 = vpop.f32.mrb[0].mxu0
  %v1779 = vadd.f32 %v280, %v1778
  %v1780 = vpop.f32.mrb[0].mxu0
  %1781 = vmatprep.mubr.bf16.mxu0 0
  %1782 = vmatmul.mubr.bf16.gmra.mrb[0].mxu0 %v1094
  %v1783 = vpop.f32.mrb[0].mxu0
  %v1784 = vadd.f32 %v280, %v1783
  %v1785 = vpop.f32.mrb[0].mxu0
  %v1786 = vpop.f32.mrb[0].mxu0
  %v1787 = vadd.f32 %v280, %v1786
  %v1788 = vpop.f32.mrb[0].mxu0
  %1789 = vmatprep.mubr.bf16.mxu0 0
  %1790 = vmatmul.mubr.bf16.gmra.mrb[0].mxu0 %v1097
  %v1791 = vpop.f32.mrb[0].mxu0
  %v1792 = vadd.f32 %v280, %v1791
  %v1793 = vpop.f32.mrb[0].mxu0
  %v1794 = vpop.f32.mrb[0].mxu0
  %v1795 = vadd.f32 %v280, %v1794
  %v1796 = vpop.f32.mrb[0].mxu0
  %1797 = vmatprep.mubr.bf16.mxu0 0
  %1798 = vmatmul.mubr.bf16.gmra.mrb[0].mxu0 %v1100
  %v1799 = vpop.f32.mrb[0].mxu0
  %v1800 = vadd.f32 %v280, %v1799
  %v1801 = vpop.f32.mrb[0].mxu0
  %v1802 = vpop.f32.mrb[0].mxu0
  %v1803 = vadd.f32 %v280, %v1802
  %v1804 = vpop.f32.mrb[0].mxu0
  %1805 = vmatprep.mubr.bf16.mxu0 0
  %1806 = vmatmul.mubr.bf16.gmra.mrb[0].mxu0 %v1103
  %v1807 = vpop.f32.mrb[0].mxu0
  %v1808 = vadd.f32 %v280, %v1807
  %v1809 = vpop.f32.mrb[0].mxu0
  %v1810 = vpop.f32.mrb[0].mxu0
  %v1811 = vadd.f32 %v280, %v1810
  %v1812 = vpop.f32.mrb[0].mxu0
  %1813 = vmatprep.mubr.bf16.mxu0 0
  %1814 = vmatmul.mubr.bf16.gmra.mrb[0].mxu0 %v1106
  %v1815 = vpop.f32.mrb[0].mxu0
  %v1816 = vadd.f32 %v280, %v1815
  %v1817 = vpop.f32.mrb[0].mxu0
  %v1818 = vpop.f32.mrb[0].mxu0
  %v1819 = vadd.f32 %v280, %v1818
  %v1820 = vpop.f32.mrb[0].mxu0
  %1821 = vmatprep.mubr.bf16.mxu0 0
  %1822 = vmatmul.mubr.bf16.gmra.mrb[0].mxu0 %v1109
  %v1823 = vpop.f32.mrb[0].mxu0
  %v1824 = vadd.f32 %v280, %v1823
  %v1825 = vpop.f32.mrb[0].mxu0
  %v1826 = vpop.f32.mrb[0].mxu0
  %v1827 = vadd.f32 %v280, %v1826
  %v1828 = vpop.f32.mrb[0].mxu0
  %1829 = vmatprep.mubr.bf16.mxu0 0
  %1830 = vmatmul.mubr.bf16.gmra.mrb[0].mxu0 %v1112
  %v1831 = vpop.f32.mrb[0].mxu0
  %v1832 = vadd.f32 %v280, %v1831
  %v1833 = vpop.f32.mrb[0].mxu0
  %v1834 = vpop.f32.mrb[0].mxu0
  %v1835 = vadd.f32 %v280, %v1834
  %v1836 = vpop.f32.mrb[0].mxu0
  %1837 = vmatprep.mubr.bf16.mxu0 0
  %1838 = vmatmul.mubr.bf16.gmra.mrb[0].mxu0 %v1115
  %v1839 = vpop.f32.mrb[0].mxu0
  %v1840 = vadd.f32 %v280, %v1839
  %v1841 = vpop.f32.mrb[0].mxu0
  %v1842 = vpop.f32.mrb[0].mxu0
  %v1843 = vadd.f32 %v280, %v1842
  %v1844 = vpop.f32.mrb[0].mxu0
  %1845 = vmatprep.mubr.bf16.mxu0 0
  %1846 = vmatmul.mubr.bf16.gmra.mrb[0].mxu0 %v1118
  %v1847 = vpop.f32.mrb[0].mxu0
  %v1848 = vadd.f32 %v280, %v1847
  %v1849 = vpop.f32.mrb[0].mxu0
  %v1850 = vpop.f32.mrb[0].mxu0
  %v1851 = vadd.f32 %v280, %v1850
  %v1852 = vpop.f32.mrb[0].mxu0
  %1853 = vmatprep.mubr.bf16.mxu0 0
  %1854 = vmatmul.mubr.bf16.gmra.mrb[0].mxu0 %v1121
  %v1855 = vpop.f32.mrb[0].mxu0
  %v1856 = vadd.f32 %v280, %v1855
  %v1857 = vpop.f32.mrb[0].mxu0
  %v1858 = vpop.f32.mrb[0].mxu0
  %v1859 = vadd.f32 %v280, %v1858
  %v1860 = vpop.f32.mrb[0].mxu0
  %1861 = vmatprep.mubr.bf16.mxu0 0
  %1862 = vmatmul.mubr.bf16.gmra.mrb[0].mxu0 %v1124
  %v1863 = vpop.f32.mrb[0].mxu0
  %v1864 = vadd.f32 %v280, %v1863
  %v1865 = vpop.f32.mrb[0].mxu0
  %v1866 = vpop.f32.mrb[0].mxu0
  %v1867 = vadd.f32 %v280, %v1866
  %v1868 = vpop.f32.mrb[0].mxu0
  %1869 = vmatprep.mubr.bf16.mxu0 0
  %1870 = vmatmul.mubr.bf16.gmra.mrb[0].mxu0 %v1127
  %v1871 = vpop.f32.mrb[0].mxu0
  %v1872 = vadd.f32 %v280, %v1871
  %v1873 = vpop.f32.mrb[0].mxu0
  %v1874 = vpop.f32.mrb[0].mxu0
  %v1875 = vadd.f32 %v280, %v1874
  %v1876 = vpop.f32.mrb[0].mxu0
  %1877 = vmatprep.mubr.bf16.mxu0 0
  %1878 = vmatmul.mubr.bf16.gmra.mrb[0].mxu0 %v1130
  %v1879 = vpop.f32.mrb[0].mxu0
  %v1880 = vadd.f32 %v280, %v1879
  %v1881 = vpop.f32.mrb[0].mxu0
  %v1882 = vpop.f32.mrb[0].mxu0
  %v1883 = vadd.f32 %v280, %v1882
  %v1884 = vpop.f32.mrb[0].mxu0
  %1885 = vmatprep.mubr.bf16.mxu0 0
  %1886 = vmatmul.mubr.bf16.gmra.mrb[0].mxu0 %v1133
  %v1887 = vpop.f32.mrb[0].mxu0
  %v1888 = vadd.f32 %v280, %v1887
  %v1889 = vpop.f32.mrb[0].mxu0
  %v1890 = vpop.f32.mrb[0].mxu0
  %v1891 = vadd.f32 %v280, %v1890
  %v1892 = vpop.f32.mrb[0].mxu0
  %1893 = vmatprep.mubr.bf16.mxu0 0
  %1894 = vmatmul.mubr.bf16.gmra.mrb[0].mxu0 %v1136
  %v1895 = vpop.f32.mrb[0].mxu0
  %v1896 = vadd.f32 %v280, %v1895
  %v1897 = vpop.f32.mrb[0].mxu0
  %v1898 = vpop.f32.mrb[0].mxu0
  %v1899 = vadd.f32 %v280, %v1898
  %v1900 = vpop.f32.mrb[0].mxu0
  %1901 = vmatprep.mubr.bf16.mxu0 0
  %1902 = vmatmul.mubr.bf16.gmra.mrb[0].mxu0 %v1139
  %v1903 = vpop.f32.mrb[0].mxu0
  %v1904 = vadd.f32 %v280, %v1903
  %v1905 = vpop.f32.mrb[0].mxu0
  %v1906 = vpop.f32.mrb[0].mxu0
  %v1907 = vadd.f32 %v280, %v1906
  %v1908 = vpop.f32.mrb[0].mxu0
  %1909 = vmatprep.mubr.bf16.mxu0 0
  %1910 = vmatmul.mubr.bf16.gmra.mrb[0].mxu0 %v1142
  %v1911 = vpop.f32.mrb[0].mxu0
  %v1912 = vadd.f32 %v280, %v1911
  %v1913 = vpop.f32.mrb[0].mxu0
  %v1914 = vpop.f32.mrb[0].mxu0
  %v1915 = vadd.f32 %v280, %v1914
  %v1916 = vpop.f32.mrb[0].mxu0
  %1917 = vmatprep.mubr.bf16.mxu0 0
  %1918 = vmatmul.mubr.bf16.gmra.mrb[0].mxu0 %v1145
  %v1919 = vpop.f32.mrb[0].mxu0
  %v1920 = vadd.f32 %v280, %v1919
  %v1921 = vpop.f32.mrb[0].mxu0
  %v1922 = vpop.f32.mrb[0].mxu0
  %v1923 = vadd.f32 %v280, %v1922
  %v1924 = vpop.f32.mrb[0].mxu0
  %1925 = vmatprep.mubr.bf16.mxu0 0
  %1926 = vmatmul.mubr.bf16.gmra.mrb[0].mxu0 %v1148
  %v1927 = vpop.f32.mrb[0].mxu0
  %v1928 = vadd.f32 %v280, %v1927
  %v1929 = vpop.f32.mrb[0].mxu0
  %v1930 = vpop.f32.mrb[0].mxu0
  %v1931 = vadd.f32 %v280, %v1930
  %v1932 = vpop.f32.mrb[0].mxu0
  %1933 = vmatprep.mubr.bf16.mxu0 0
  %1934 = vmatmul.mubr.bf16.gmra.mrb[0].mxu0 %v1151
  %v1935 = vpop.f32.mrb[0].mxu0
  %v1936 = vadd.f32 %v280, %v1935
  %v1937 = vpop.f32.mrb[0].mxu0
  %v1938 = vpop.f32.mrb[0].mxu0
  %v1939 = vadd.f32 %v280, %v1938
  %v1940 = vpop.f32.mrb[0].mxu0
  %1941 = vmatprep.mubr.bf16.mxu0 0
  %1942 = vmatmul.mubr.bf16.gmra.mrb[0].mxu0 %v1154
  %v1943 = vpop.f32.mrb[0].mxu0
  %v1944 = vadd.f32 %v280, %v1943
  %v1945 = vpop.f32.mrb[0].mxu0
  %v1946 = vpop.f32.mrb[0].mxu0
  %v1947 = vadd.f32 %v280, %v1946
  %v1948 = vpop.f32.mrb[0].mxu0
  %1949 = vmatprep.mubr.bf16.mxu0 0
  %1950 = vmatmul.mubr.bf16.gmra.mrb[0].mxu0 %v1157
  %v1951 = vpop.f32.mrb[0].mxu0
  %v1952 = vadd.f32 %v280, %v1951
  %v1953 = vpop.f32.mrb[0].mxu0
  %v1954 = vpop.f32.mrb[0].mxu0
  %v1955 = vadd.f32 %v280, %v1954
  %v1956 = vpop.f32.mrb[0].mxu0
  %1957 = vmatprep.mubr.bf16.mxu0 0
  %1958 = vmatmul.mubr.bf16.gmra.mrb[0].mxu0 %v1160
  %v1959 = vpop.f32.mrb[0].mxu0
  %v1960 = vadd.f32 %v280, %v1959
  %v1961 = vpop.f32.mrb[0].mxu0
  %v1962 = vpop.f32.mrb[0].mxu0
  %v1963 = vadd.f32 %v280, %v1962
  %v1964 = vpop.f32.mrb[0].mxu0
  %1965 = vmatprep.mubr.bf16.mxu0 0
  %1966 = vmatmul.mubr.bf16.gmra.mrb[0].mxu0 %v1163
  %v1967 = vpop.f32.mrb[0].mxu0
  %v1968 = vadd.f32 %v280, %v1967
  %v1969 = vpop.f32.mrb[0].mxu0
  %v1970 = vpop.f32.mrb[0].mxu0
  %v1971 = vadd.f32 %v280, %v1970
  %v1972 = vpop.f32.mrb[0].mxu0
  %1973 = vmatprep.mubr.bf16.mxu0 0
  %1974 = vmatmul.mubr.bf16.gmra.mrb[0].mxu0 %v1166
  %v1975 = vpop.f32.mrb[0].mxu0
  %v1976 = vadd.f32 %v280, %v1975
  %v1977 = vpop.f32.mrb[0].mxu0
  %v1978 = vpop.f32.mrb[0].mxu0
  %v1979 = vadd.f32 %v280, %v1978
  %v1980 = vpop.f32.mrb[0].mxu0
  %1981 = vmatprep.mubr.bf16.mxu0 0
  %1982 = vmatmul.mubr.bf16.gmra.mrb[0].mxu0 %v1169
  %v1983 = vpop.f32.mrb[0].mxu0
  %v1984 = vadd.f32 %v280, %v1983
  %v1985 = vpop.f32.mrb[0].mxu0
  %v1986 = vpop.f32.mrb[0].mxu0
  %v1987 = vadd.f32 %v280, %v1986
  %v1988 = vpop.f32.mrb[0].mxu0
  %1989 = vmatprep.mubr.bf16.mxu0 0
  %1990 = vmatmul.mubr.bf16.gmra.mrb[0].mxu0 %v1172
  %v1991 = vpop.f32.mrb[0].mxu0
  %v1992 = vadd.f32 %v280, %v1991
  %v1993 = vpop.f32.mrb[0].mxu0
  %v1994 = vpop.f32.mrb[0].mxu0
  %v1995 = vadd.f32 %v280, %v1994
  %v1996 = vpop.f32.mrb[0].mxu0
  %1997 = vmatprep.mubr.bf16.mxu0 0
  %1998 = vmatmul.mubr.bf16.gmra.mrb[0].mxu0 %v1175
  %v1999 = vpop.f32.mrb[0].mxu0
  %v2000 = vadd.f32 %v280, %v1999
  %v2001 = vpop.f32.mrb[0].mxu0
  %v2002 = vpop.f32.mrb[0].mxu0
  %v2003 = vadd.f32 %v280, %v2002
  %v2004 = vpop.f32.mrb[0].mxu0
  %2005 = vmatprep.mubr.bf16.mxu0 0
  %2006 = vmatmul.mubr.bf16.gmra.mrb[0].mxu0 %v1178
  %v2007 = vpop.f32.mrb[0].mxu0
  %v2008 = vadd.f32 %v280, %v2007
  %v2009 = vpop.f32.mrb[0].mxu0
  %v2010 = vpop.f32.mrb[0].mxu0
  %v2011 = vadd.f32 %v280, %v2010
  %v2012 = vpop.f32.mrb[0].mxu0
  %2013 = vmatprep.mubr.bf16.mxu0 0
  %2014 = vmatmul.mubr.bf16.gmra.mrb[0].mxu0 %v1181
  %v2015 = vpop.f32.mrb[0].mxu0
  %v2016 = vadd.f32 %v280, %v2015
  %v2017 = vpop.f32.mrb[0].mxu0
  %v2018 = vpop.f32.mrb[0].mxu0
  %v2019 = vadd.f32 %v280, %v2018
  %v2020 = vpop.f32.mrb[0].mxu0
  %2021 = vmatprep.mubr.bf16.mxu0 0
  %2022 = vmatmul.mubr.bf16.gmra.mrb[0].mxu0 %v1184
  %v2023 = vpop.f32.mrb[0].mxu0
  %v2024 = vadd.f32 %v280, %v2023
  %v2025 = vpop.f32.mrb[0].mxu0
  %v2026 = vpop.f32.mrb[0].mxu0
  %v2027 = vadd.f32 %v280, %v2026
  %v2028 = vpop.f32.mrb[0].mxu0
  %2029 = vmatprep.mubr.bf16.mxu0 0
  %2030 = vmatmul.mubr.bf16.gmra.mrb[0].mxu0 %v1187
  %v2031 = vpop.f32.mrb[0].mxu0
  %v2032 = vadd.f32 %v280, %v2031
  %v2033 = vpop.f32.mrb[0].mxu0
  %v2034 = vpop.f32.mrb[0].mxu0
  %v2035 = vadd.f32 %v280, %v2034
  %v2036 = vpop.f32.mrb[0].mxu0
  %2037 = vmatprep.mubr.bf16.mxu0 0
  %2038 = vmatmul.mubr.bf16.gmra.mrb[0].mxu0 %v1190
  %v2039 = vpop.f32.mrb[0].mxu0
  %v2040 = vadd.f32 %v280, %v2039
  %v2041 = vpop.f32.mrb[0].mxu0
  %v2042 = vpop.f32.mrb[0].mxu0
  %v2043 = vadd.f32 %v280, %v2042
  %v2044 = vpop.f32.mrb[0].mxu0
  %2045 = vmatprep.mubr.bf16.mxu0 0
  %2046 = vmatmul.mubr.bf16.gmra.mrb[0].mxu0 %v1193
  %v2047 = vpop.f32.mrb[0].mxu0
  %v2048 = vadd.f32 %v280, %v2047
  %v2049 = vpop.f32.mrb[0].mxu0
  %v2050 = vpop.f32.mrb[0].mxu0
  %v2051 = vadd.f32 %v280, %v2050
  %v2052 = vpop.f32.mrb[0].mxu0
  %2053 = vmatprep.mubr.bf16.mxu0 0
  %2054 = vmatmul.mubr.bf16.gmra.mrb[0].mxu0 %v1196
  %v2055 = vpop.f32.mrb[0].mxu0
  %v2056 = vadd.f32 %v280, %v2055
  %v2057 = vpop.f32.mrb[0].mxu0
  %v2058 = vpop.f32.mrb[0].mxu0
  %v2059 = vadd.f32 %v280, %v2058
  %v2060 = vpop.f32.mrb[0].mxu0
  %2061 = vmatprep.mubr.bf16.mxu0 0
  %2062 = vmatmul.mubr.bf16.gmra.mrb[0].mxu0 %v1199
  %v2063 = vpop.f32.mrb[0].mxu0
  %v2064 = vadd.f32 %v280, %v2063
  %v2065 = vpop.f32.mrb[0].mxu0
  %v2066 = vpop.f32.mrb[0].mxu0
  %v2067 = vadd.f32 %v280, %v2066
  %v2068 = vpop.f32.mrb[0].mxu0
  %2069 = vmatprep.mubr.bf16.mxu0 0
  %2070 = vmatmul.mubr.bf16.gmra.mrb[0].mxu0 %v1202
  %v2071 = vpop.f32.mrb[0].mxu0
  %v2072 = vadd.f32 %v280, %v2071
  %v2073 = vpop.f32.mrb[0].mxu0
  %v2074 = vpop.f32.mrb[0].mxu0
  %v2075 = vadd.f32 %v280, %v2074
  %v2076 = vpop.f32.mrb[0].mxu0
  %2077 = vmatprep.mubr.bf16.mxu0 0
  %2078 = vmatmul.mubr.bf16.gmra.mrb[0].mxu0 %v1205
  %v2079 = vpop.f32.mrb[0].mxu0
  %v2080 = vadd.f32 %v280, %v2079
  %v2081 = vpop.f32.mrb[0].mxu0
  %v2082 = vpop.f32.mrb[0].mxu0
  %v2083 = vadd.f32 %v280, %v2082
  %v2084 = vpop.f32.mrb[0].mxu0
  %2085 = vmatprep.mubr.bf16.mxu0 0
  %2086 = vmatmul.mubr.bf16.gmra.mrb[0].mxu0 %v1208
  %v2087 = vpop.f32.mrb[0].mxu0
  %v2088 = vadd.f32 %v280, %v2087
  %v2089 = vpop.f32.mrb[0].mxu0
  %v2090 = vpop.f32.mrb[0].mxu0
  %v2091 = vadd.f32 %v280, %v2090
  %v2092 = vpop.f32.mrb[0].mxu0
  %2093 = vmatprep.mubr.bf16.mxu0 0
  %2094 = vmatmul.mubr.bf16.gmra.mrb[0].mxu0 %v1211
  %v2095 = vpop.f32.mrb[0].mxu0
  %v2096 = vadd.f32 %v280, %v2095
  %v2097 = vpop.f32.mrb[0].mxu0
  %v2098 = vpop.f32.mrb[0].mxu0
  %v2099 = vadd.f32 %v280, %v2098
  %v2100 = vpop.f32.mrb[0].mxu0
  %2101 = vmatprep.mubr.bf16.mxu0 0
  %2102 = vmatmul.mubr.bf16.gmra.mrb[0].mxu0 %v1214
  %v2103 = vpop.f32.mrb[0].mxu0
  %v2104 = vadd.f32 %v280, %v2103
  %v2105 = vpop.f32.mrb[0].mxu0
  %v2106 = vpop.f32.mrb[0].mxu0
  %v2107 = vadd.f32 %v280, %v2106
  %v2108 = vpop.f32.mrb[0].mxu0
  %2109 = vmatprep.mubr.bf16.mxu0 0
  %2110 = vmatmul.mubr.bf16.gmra.mrb[0].mxu0 %v1217
  %v2111 = vpop.f32.mrb[0].mxu0
  %v2112 = vadd.f32 %v280, %v2111
  %v2113 = vpop.f32.mrb[0].mxu0
  %v2114 = vpop.f32.mrb[0].mxu0
  %v2115 = vadd.f32 %v280, %v2114
  %v2116 = vpop.f32.mrb[0].mxu0
  %2117 = vmatprep.mubr.bf16.mxu0 0
  %2118 = vmatmul.mubr.bf16.gmra.mrb[0].mxu0 %v1220
  %v2119 = vpop.f32.mrb[0].mxu0
  %v2120 = vadd.f32 %v280, %v2119
  %v2121 = vpop.f32.mrb[0].mxu0
  %v2122 = vpop.f32.mrb[0].mxu0
  %v2123 = vadd.f32 %v280, %v2122
  %v2124 = vpop.f32.mrb[0].mxu0
  %2125 = vmatprep.mubr.bf16.mxu0 0
  %2126 = vmatmul.mubr.bf16.gmra.mrb[0].mxu0 %v1223
  %v2127 = vpop.f32.mrb[0].mxu0
  %v2128 = vadd.f32 %v280, %v2127
  %v2129 = vpop.f32.mrb[0].mxu0
  %v2130 = vpop.f32.mrb[0].mxu0
  %v2131 = vadd.f32 %v280, %v2130
  %v2132 = vpop.f32.mrb[0].mxu0
  %2133 = vmatprep.mubr.bf16.mxu0 0
  %2134 = vmatmul.mubr.bf16.gmra.mrb[0].mxu0 %v1226
  %v2135 = vpop.f32.mrb[0].mxu0
  %v2136 = vadd.f32 %v280, %v2135
  %v2137 = vpop.f32.mrb[0].mxu0
  %v2138 = vpop.f32.mrb[0].mxu0
  %v2139 = vadd.f32 %v280, %v2138
  %v2140 = vpop.f32.mrb[0].mxu0
  %2141 = vmatprep.mubr.bf16.mxu0 0
  %2142 = vmatmul.mubr.bf16.gmra.mrb[0].mxu0 %v1229
  %v2143 = vpop.f32.mrb[0].mxu0
  %v2144 = vadd.f32 %v280, %v2143
  %v2145 = vpop.f32.mrb[0].mxu0
  %v2146 = vpop.f32.mrb[0].mxu0
  %v2147 = vadd.f32 %v280, %v2146
  %v2148 = vpop.f32.mrb[0].mxu0
  %2149 = vmatprep.mubr.bf16.mxu0 0
  %2150 = vmatmul.mubr.bf16.gmra.mrb[0].mxu0 %v1232
  %v2151 = vpop.f32.mrb[0].mxu0
  %v2152 = vadd.f32 %v280, %v2151
  %v2153 = vpop.f32.mrb[0].mxu0
  %v2154 = vpop.f32.mrb[0].mxu0
  %v2155 = vadd.f32 %v280, %v2154
  %v2156 = vpop.f32.mrb[0].mxu0
  %2157 = vmatprep.mubr.bf16.mxu0 0
  %2158 = vmatmul.mubr.bf16.gmra.mrb[0].mxu0 %v1235
  %v2159 = vpop.f32.mrb[0].mxu0
  %v2160 = vadd.f32 %v280, %v2159
  %v2161 = vpop.f32.mrb[0].mxu0
  %v2162 = vpop.f32.mrb[0].mxu0
  %v2163 = vadd.f32 %v280, %v2162
  %v2164 = vpop.f32.mrb[0].mxu0
  %2165 = vmatprep.mubr.bf16.mxu0 0
  %2166 = vmatmul.mubr.bf16.gmra.mrb[0].mxu0 %v1238
  %v2167 = vpop.f32.mrb[0].mxu0
  %v2168 = vadd.f32 %v280, %v2167
  %v2169 = vpop.f32.mrb[0].mxu0
  %v2170 = vpop.f32.mrb[0].mxu0
  %v2171 = vadd.f32 %v280, %v2170
  %v2172 = vpop.f32.mrb[0].mxu0
  %2173 = vmatprep.mubr.bf16.mxu0 0
  %2174 = vmatmul.mubr.bf16.gmra.mrb[0].mxu0 %v1241
  %v2175 = vpop.f32.mrb[0].mxu0
  %v2176 = vadd.f32 %v280, %v2175
  %v2177 = vpop.f32.mrb[0].mxu0
  %v2178 = vpop.f32.mrb[0].mxu0
  %v2179 = vadd.f32 %v280, %v2178
  %v2180 = vpop.f32.mrb[0].mxu0
  %2181 = vmatprep.mubr.bf16.mxu0 0
  %2182 = vmatmul.mubr.bf16.gmra.mrb[0].mxu0 %v1244
  %v2183 = vpop.f32.mrb[0].mxu0
  %v2184 = vadd.f32 %v280, %v2183
  %v2185 = vpop.f32.mrb[0].mxu0
  %v2186 = vpop.f32.mrb[0].mxu0
  %v2187 = vadd.f32 %v280, %v2186
  %v2188 = vpop.f32.mrb[0].mxu0
  %2189 = vmatprep.mubr.bf16.mxu0 0
  %2190 = vmatmul.mubr.bf16.gmra.mrb[0].mxu0 %v1247
  %v2191 = vpop.f32.mrb[0].mxu0
  %v2192 = vadd.f32 %v280, %v2191
  %v2193 = vpop.f32.mrb[0].mxu0
  %v2194 = vpop.f32.mrb[0].mxu0
  %v2195 = vadd.f32 %v280, %v2194
  %v2196 = vpop.f32.mrb[0].mxu0
  %2197 = vmatprep.mubr.bf16.mxu0 0
  %2198 = vmatmul.mubr.bf16.gmra.mrb[0].mxu0 %v1250
  %v2199 = vpop.f32.mrb[0].mxu0
  %v2200 = vadd.f32 %v280, %v2199
  %v2201 = vpop.f32.mrb[0].mxu0
  %v2202 = vpop.f32.mrb[0].mxu0
  %v2203 = vadd.f32 %v280, %v2202
  %v2204 = vpop.f32.mrb[0].mxu0
  %2205 = vmatprep.mubr.bf16.mxu0 0
  %2206 = vmatmul.mubr.bf16.gmra.mrb[0].mxu0 %v1253
  %v2207 = vpop.f32.mrb[0].mxu0
  %v2208 = vadd.f32 %v280, %v2207
  %v2209 = vpop.f32.mrb[0].mxu0
  %v2210 = vpop.f32.mrb[0].mxu0
  %v2211 = vadd.f32 %v280, %v2210
  %v2212 = vpop.f32.mrb[0].mxu0
  %2213 = vmatprep.mubr.bf16.mxu0 0
  %2214 = vmatmul.mubr.bf16.gmra.mrb[0].mxu0 %v1256
  %v2215 = vpop.f32.mrb[0].mxu0
  %v2216 = vadd.f32 %v280, %v2215
  %v2217 = vpop.f32.mrb[0].mxu0
  %v2218 = vpop.f32.mrb[0].mxu0
  %v2219 = vadd.f32 %v280, %v2218
  %v2220 = vpop.f32.mrb[0].mxu0
  %2221 = vmatprep.mubr.bf16.mxu0 0
  %2222 = vmatmul.mubr.bf16.gmra.mrb[0].mxu0 %v1259
  %v2223 = vpop.f32.mrb[0].mxu0
  %v2224 = vadd.f32 %v280, %v2223
  %v2225 = vpop.f32.mrb[0].mxu0
  %v2226 = vpop.f32.mrb[0].mxu0
  %v2227 = vadd.f32 %v280, %v2226
  %v2228 = vpop.f32.mrb[0].mxu0
  %2229 = vmatprep.mubr.bf16.mxu0 0
  %2230 = vmatmul.mubr.bf16.gmra.mrb[0].mxu0 %v1262
  %v2231 = vpop.f32.mrb[0].mxu0
  %v2232 = vadd.f32 %v280, %v2231
  %v2233 = vpop.f32.mrb[0].mxu0
  %v2234 = vpop.f32.mrb[0].mxu0
  %v2235 = vadd.f32 %v280, %v2234
  %v2236 = vpop.f32.mrb[0].mxu0
  %2237 = vmatprep.mubr.bf16.mxu0 0
  %2238 = vmatmul.mubr.bf16.gmra.mrb[0].mxu0 %v1265
  %v2239 = vpop.f32.mrb[0].mxu0
  %v2240 = vadd.f32 %v280, %v2239
  %v2241 = vpop.f32.mrb[0].mxu0
  %v2242 = vpop.f32.mrb[0].mxu0
  %v2243 = vadd.f32 %v280, %v2242
  %v2244 = vpop.f32.mrb[0].mxu0
  %2245 = vmatprep.mubr.bf16.mxu0 0
  %2246 = vmatmul.mubr.bf16.gmra.mrb[0].mxu0 %v1268
  %v2247 = vpop.f32.mrb[0].mxu0
  %v2248 = vadd.f32 %v280, %v2247
  %v2249 = vpop.f32.mrb[0].mxu0
  %v2250 = vpop.f32.mrb[0].mxu0
  %v2251 = vadd.f32 %v280, %v2250
  %v2252 = vpop.f32.mrb[0].mxu0
  %2253 = vmatprep.mubr.bf16.mxu0 0
  %2254 = vmatmul.mubr.bf16.gmra.mrb[0].mxu0 %v1271
  %v2255 = vpop.f32.mrb[0].mxu0
  %v2256 = vadd.f32 %v280, %v2255
  %v2257 = vpop.f32.mrb[0].mxu0
  %v2258 = vpop.f32.mrb[0].mxu0
  %v2259 = vadd.f32 %v280, %v2258
  %v2260 = vpop.f32.mrb[0].mxu0
  %2261 = vmatprep.mubr.bf16.mxu0 0
  %2262 = vmatmul.mubr.bf16.gmra.mrb[0].mxu0 %v1274
  %v2263 = vpop.f32.mrb[0].mxu0
  %v2264 = vadd.f32 %v280, %v2263
  %v2265 = vpop.f32.mrb[0].mxu0
  %v2266 = vpop.f32.mrb[0].mxu0
  %v2267 = vadd.f32 %v280, %v2266
  %v2268 = vpop.f32.mrb[0].mxu0
  %2269 = vmatprep.mubr.bf16.mxu0 0
  %2270 = vmatmul.mubr.bf16.gmra.mrb[0].mxu0 %v1277
  %v2271 = vpop.f32.mrb[0].mxu0
  %v2272 = vadd.f32 %v280, %v2271
  %v2273 = vpop.f32.mrb[0].mxu0
  %v2274 = vpop.f32.mrb[0].mxu0
  %v2275 = vadd.f32 %v280, %v2274
  %v2276 = vpop.f32.mrb[0].mxu0
  %2277 = vmatprep.mubr.bf16.mxu0 0
  %2278 = vmatmul.mubr.bf16.gmra.mrb[0].mxu0 %v1280
  %v2279 = vpop.f32.mrb[0].mxu0
  %v2280 = vadd.f32 %v280, %v2279
  %v2281 = vpop.f32.mrb[0].mxu0
  %v2282 = vpop.f32.mrb[0].mxu0
  %v2283 = vadd.f32 %v280, %v2282
  %v2284 = vpop.f32.mrb[0].mxu0
  %2285 = vmatprep.mubr.bf16.mxu0 0
  %2286 = vmatmul.mubr.bf16.gmra.mrb[0].mxu0 %v1283
  %v2287 = vpop.f32.mrb[0].mxu0
  %v2288 = vadd.f32 %v280, %v2287
  %v2289 = vpop.f32.mrb[0].mxu0
  %v2290 = vpop.f32.mrb[0].mxu0
  %v2291 = vadd.f32 %v280, %v2290
  %v2292 = vpop.f32.mrb[0].mxu0
  %2293 = vmatprep.mubr.bf16.mxu0 0
  %2294 = vmatmul.mubr.bf16.gmra.mrb[0].mxu0 %v1286
  %v2295 = vpop.f32.mrb[0].mxu0
  %v2296 = vadd.f32 %v280, %v2295
  %v2297 = vpop.f32.mrb[0].mxu0
  %v2298 = vpop.f32.mrb[0].mxu0
  %v2299 = vadd.f32 %v280, %v2298
  %v2300 = vpop.f32.mrb[0].mxu0
  %2301 = vmatprep.mubr.bf16.mxu0 0
  %2302 = vmatmul.mubr.bf16.gmra.mrb[0].mxu0 %v1289
  %v2303 = vpop.f32.mrb[0].mxu0
  %v2304 = vadd.f32 %v280, %v2303
  %v2305 = vpop.f32.mrb[0].mxu0
  %v2306 = vpop.f32.mrb[0].mxu0
  %v2307 = vadd.f32 %v280, %v2306
  %v2308 = vpop.f32.mrb[0].mxu0
  %2309 = vmatprep.mubr.bf16.mxu0 0
  %2310 = vmatmul.mubr.bf16.gmra.mrb[0].mxu0 %v1292
  %v2311 = vpop.f32.mrb[0].mxu0
  %v2312 = vadd.f32 %v280, %v2311
  %v2313 = vpop.f32.mrb[0].mxu0
  %v2314 = vpop.f32.mrb[0].mxu0
  %v2315 = vadd.f32 %v280, %v2314
  %v2316 = vpop.f32.mrb[0].mxu0
  %2317 = vmatprep.mubr.bf16.mxu0 0
  %2318 = vmatmul.mubr.bf16.gmra.mrb[0].mxu0 %v1295
  %v2319 = vpop.f32.mrb[0].mxu0
  %v2320 = vadd.f32 %v280, %v2319
  %v2321 = vpop.f32.mrb[0].mxu0
  %v2322 = vpop.f32.mrb[0].mxu0
  %v2323 = vadd.f32 %v280, %v2322
  %v2324 = vpop.f32.mrb[0].mxu0
  %2325 = vmatprep.mubr.bf16.mxu0 0
  %2326 = vmatmul.mubr.bf16.gmra.mrb[0].mxu0 %v1298
  %v2327 = vpop.f32.mrb[0].mxu0
  %v2328 = vadd.f32 %v280, %v2327
  %v2329 = vpop.f32.mrb[0].mxu0
  %v2330 = vpop.f32.mrb[0].mxu0
  %v2331 = vadd.f32 %v280, %v2330
  %v2332 = vpop.f32.mrb[0].mxu0
  %2333 = vmatprep.mubr.bf16.mxu0 0
  %2334 = vmatmul.mubr.bf16.gmra.mrb[0].mxu0 %v1301
  %v2335 = vpop.f32.mrb[0].mxu0
  %v2336 = vadd.f32 %v280, %v2335
  %v2337 = vpop.f32.mrb[0].mxu0
  %v2338 = vpop.f32.mrb[0].mxu0
  %v2339 = vadd.f32 %v280, %v2338
  %v2340 = vpop.f32.mrb[0].mxu0
  %2341 = vmatprep.mubr.bf16.mxu0 0
  %2342 = vmatmul.mubr.bf16.gmra.mrb[0].mxu0 %v1304
  %v2343 = vpop.f32.mrb[0].mxu0
  %v2344 = vadd.f32 %v280, %v2343
  %v2345 = vpop.f32.mrb[0].mxu0
  %v2346 = vpop.f32.mrb[0].mxu0
  %v2347 = vadd.f32 %v280, %v2346
  %v2348 = vpop.f32.mrb[0].mxu0
  %2349 = vmatprep.mubr.bf16.mxu0 0
  %2350 = vmatmul.mubr.bf16.gmra.mrb[0].mxu0 %v1307
  %v2351 = vpop.f32.mrb[0].mxu0
  %v2352 = vadd.f32 %v280, %v2351
  %v2353 = vpop.f32.mrb[0].mxu0
  %v2354 = vpop.f32.mrb[0].mxu0
  %v2355 = vadd.f32 %v280, %v2354
  %v2356 = vpop.f32.mrb[0].mxu0
  %2357 = vmatprep.mubr.bf16.mxu0 0
  %2358 = vmatmul.mubr.bf16.gmra.mrb[0].mxu0 %v1310
  %v2359 = vpop.f32.mrb[0].mxu0
  %v2360 = vadd.f32 %v280, %v2359
  %v2361 = vpop.f32.mrb[0].mxu0
  %v2362 = vpop.f32.mrb[0].mxu0
  %v2363 = vadd.f32 %v280, %v2362
  %v2364 = vpop.f32.mrb[0].mxu0
  %2365 = vmatprep.mubr.bf16.mxu0 0
  %2366 = vmatmul.mubr.bf16.gmra.mrb[0].mxu0 %v1313
  %v2367 = vpop.f32.mrb[0].mxu0
  %v2368 = vadd.f32 %v280, %v2367
  %v2369 = vpop.f32.mrb[0].mxu0
  %v2370 = vpop.f32.mrb[0].mxu0
  %v2371 = vadd.f32 %v280, %v2370
  %v2372 = vpop.f32.mrb[0].mxu0
  %2373 = vmatprep.mubr.bf16.mxu0 0
  %2374 = vmatmul.mubr.bf16.gmra.mrb[0].mxu0 %v1316
  %v2375 = vpop.f32.mrb[0].mxu0
  %v2376 = vadd.f32 %v280, %v2375
  %v2377 = vpop.f32.mrb[0].mxu0
  %v2378 = vpop.f32.mrb[0].mxu0
  %v2379 = vadd.f32 %v280, %v2378
  %v2380 = vpop.f32.mrb[0].mxu0
  %2381 = vdwg.mxu0
  %v2382 = vmax.f32 %v1360, 0.0
  %v2383 = vmax.f32 %v1363, 0.0
  %v2384 = vmax.f32 %v1368, 0.0
  %v2385 = vmax.f32 %v1371, 0.0
  %v2386 = vmax.f32 %v1376, 0.0
  %v2387 = vmax.f32 %v1379, 0.0
  %v2388 = vmax.f32 %v1384, 0.0
  %v2389 = vmax.f32 %v1387, 0.0
  %v2390 = vmax.f32 %v1392, 0.0
  %v2391 = vmax.f32 %v1395, 0.0
  %v2392 = vmax.f32 %v1400, 0.0
  %v2393 = vmax.f32 %v1403, 0.0
  %v2394 = vmax.f32 %v1408, 0.0
  %v2395 = vmax.f32 %v1411, 0.0
  %v2396 = vmax.f32 %v1416, 0.0
  %v2397 = vmax.f32 %v1419, 0.0
  %v2398 = vmax.f32 %v1424, 0.0
  %v2399 = vmax.f32 %v1427, 0.0
  %v2400 = vmax.f32 %v1432, 0.0
  %v2401 = vmax.f32 %v1435, 0.0
  %v2402 = vmax.f32 %v1440, 0.0
  %v2403 = vmax.f32 %v1443, 0.0
  %v2404 = vmax.f32 %v1448, 0.0
  %v2405 = vmax.f32 %v1451, 0.0
  %v2406 = vmax.f32 %v1456, 0.0
  %v2407 = vmax.f32 %v1459, 0.0
  %v2408 = vmax.f32 %v1464, 0.0
  %v2409 = vmax.f32 %v1467, 0.0
  %v2410 = vmax.f32 %v1472, 0.0
  %v2411 = vmax.f32 %v1475, 0.0
  %v2412 = vmax.f32 %v1480, 0.0
  %v2413 = vmax.f32 %v1483, 0.0
  %v2414 = vmax.f32 %v1488, 0.0
  %v2415 = vmax.f32 %v1491, 0.0
  %v2416 = vmax.f32 %v1496, 0.0
  %v2417 = vmax.f32 %v1499, 0.0
  %v2418 = vmax.f32 %v1504, 0.0
  %v2419 = vmax.f32 %v1507, 0.0
  %v2420 = vmax.f32 %v1512, 0.0
  %v2421 = vmax.f32 %v1515, 0.0
  %v2422 = vmax.f32 %v1520, 0.0
  %v2423 = vmax.f32 %v1523, 0.0
  %v2424 = vmax.f32 %v1528, 0.0
  %v2425 = vmax.f32 %v1531, 0.0
  %v2426 = vmax.f32 %v1536, 0.0
  %v2427 = vmax.f32 %v1539, 0.0
  %v2428 = vmax.f32 %v1544, 0.0
  %v2429 = vmax.f32 %v1547, 0.0
  %v2430 = vmax.f32 %v1552, 0.0
  %v2431 = vmax.f32 %v1555, 0.0
  %v2432 = vmax.f32 %v1560, 0.0
  %v2433 = vmax.f32 %v1563, 0.0
  %v2434 = vmax.f32 %v1568, 0.0
  %v2435 = vmax.f32 %v1571, 0.0
  %v2436 = vmax.f32 %v1576, 0.0
  %v2437 = vmax.f32 %v1579, 0.0
  %v2438 = vmax.f32 %v1584, 0.0
  %v2439 = vmax.f32 %v1587, 0.0
  %v2440 = vmax.f32 %v1592, 0.0
  %v2441 = vmax.f32 %v1595, 0.0
  %v2442 = vmax.f32 %v1600, 0.0
  %v2443 = vmax.f32 %v1603, 0.0
  %v2444 = vmax.f32 %v1608, 0.0
  %v2445 = vmax.f32 %v1611, 0.0
  %v2446 = vmax.f32 %v1616, 0.0
  %v2447 = vmax.f32 %v1619, 0.0
  %v2448 = vmax.f32 %v1624, 0.0
  %v2449 = vmax.f32 %v1627, 0.0
  %v2450 = vmax.f32 %v1632, 0.0
  %v2451 = vmax.f32 %v1635, 0.0
  %v2452 = vmax.f32 %v1640, 0.0
  %v2453 = vmax.f32 %v1643, 0.0
  %v2454 = vmax.f32 %v1648, 0.0
  %v2455 = vmax.f32 %v1651, 0.0
  %v2456 = vmax.f32 %v1656, 0.0
  %v2457 = vmax.f32 %v1659, 0.0
  %v2458 = vmax.f32 %v1664, 0.0
  %v2459 = vmax.f32 %v1667, 0.0
  %v2460 = vmax.f32 %v1672, 0.0
  %v2461 = vmax.f32 %v1675, 0.0
  %v2462 = vmax.f32 %v1680, 0.0
  %v2463 = vmax.f32 %v1683, 0.0
  %v2464 = vmax.f32 %v1688, 0.0
  %v2465 = vmax.f32 %v1691, 0.0
  %v2466 = vmax.f32 %v1696, 0.0
  %v2467 = vmax.f32 %v1699, 0.0
  %v2468 = vmax.f32 %v1704, 0.0
  %v2469 = vmax.f32 %v1707, 0.0
  %v2470 = vmax.f32 %v1712, 0.0
  %v2471 = vmax.f32 %v1715, 0.0
  %v2472 = vmax.f32 %v1720, 0.0
  %v2473 = vmax.f32 %v1723, 0.0
  %v2474 = vmax.f32 %v1728, 0.0
  %v2475 = vmax.f32 %v1731, 0.0
  %v2476 = vmax.f32 %v1736, 0.0
  %v2477 = vmax.f32 %v1739, 0.0
  %v2478 = vmax.f32 %v1744, 0.0
  %v2479 = vmax.f32 %v1747, 0.0
  %v2480 = vmax.f32 %v1752, 0.0
  %v2481 = vmax.f32 %v1755, 0.0
  %v2482 = vmax.f32 %v1760, 0.0
  %v2483 = vmax.f32 %v1763, 0.0
  %v2484 = vmax.f32 %v1768, 0.0
  %v2485 = vmax.f32 %v1771, 0.0
  %v2486 = vmax.f32 %v1776, 0.0
  %v2487 = vmax.f32 %v1779, 0.0
  %v2488 = vmax.f32 %v1784, 0.0
  %v2489 = vmax.f32 %v1787, 0.0
  %v2490 = vmax.f32 %v1792, 0.0
  %v2491 = vmax.f32 %v1795, 0.0
  %v2492 = vmax.f32 %v1800, 0.0
  %v2493 = vmax.f32 %v1803, 0.0
  %v2494 = vmax.f32 %v1808, 0.0
  %v2495 = vmax.f32 %v1811, 0.0
  %v2496 = vmax.f32 %v1816, 0.0
  %v2497 = vmax.f32 %v1819, 0.0
  %v2498 = vmax.f32 %v1824, 0.0
  %v2499 = vmax.f32 %v1827, 0.0
  %v2500 = vmax.f32 %v1832, 0.0
  %v2501 = vmax.f32 %v1835, 0.0
  %v2502 = vmax.f32 %v1840, 0.0
  %v2503 = vmax.f32 %v1843, 0.0
  %v2504 = vmax.f32 %v1848, 0.0
  %v2505 = vmax.f32 %v1851, 0.0
  %v2506 = vmax.f32 %v1856, 0.0
  %v2507 = vmax.f32 %v1859, 0.0
  %v2508 = vmax.f32 %v1864, 0.0
  %v2509 = vmax.f32 %v1867, 0.0
  %v2510 = vmax.f32 %v1872, 0.0
  %v2511 = vmax.f32 %v1875, 0.0
  %v2512 = vmax.f32 %v1880, 0.0
  %v2513 = vmax.f32 %v1883, 0.0
  %v2514 = vmax.f32 %v1888, 0.0
  %v2515 = vmax.f32 %v1891, 0.0
  %v2516 = vmax.f32 %v1896, 0.0
  %v2517 = vmax.f32 %v1899, 0.0
  %v2518 = vmax.f32 %v1904, 0.0
  %v2519 = vmax.f32 %v1907, 0.0
  %v2520 = vmax.f32 %v1912, 0.0
  %v2521 = vmax.f32 %v1915, 0.0
  %v2522 = vmax.f32 %v1920, 0.0
  %v2523 = vmax.f32 %v1923, 0.0
  %v2524 = vmax.f32 %v1928, 0.0
  %v2525 = vmax.f32 %v1931, 0.0
  %v2526 = vmax.f32 %v1936, 0.0
  %v2527 = vmax.f32 %v1939, 0.0
  %v2528 = vmax.f32 %v1944, 0.0
  %v2529 = vmax.f32 %v1947, 0.0
  %v2530 = vmax.f32 %v1952, 0.0
  %v2531 = vmax.f32 %v1955, 0.0
  %v2532 = vmax.f32 %v1960, 0.0
  %v2533 = vmax.f32 %v1963, 0.0
  %v2534 = vmax.f32 %v1968, 0.0
  %v2535 = vmax.f32 %v1971, 0.0
  %v2536 = vmax.f32 %v1976, 0.0
  %v2537 = vmax.f32 %v1979, 0.0
  %v2538 = vmax.f32 %v1984, 0.0
  %v2539 = vmax.f32 %v1987, 0.0
  %v2540 = vmax.f32 %v1992, 0.0
  %v2541 = vmax.f32 %v1995, 0.0
  %v2542 = vmax.f32 %v2000, 0.0
  %v2543 = vmax.f32 %v2003, 0.0
  %v2544 = vmax.f32 %v2008, 0.0
  %v2545 = vmax.f32 %v2011, 0.0
  %v2546 = vmax.f32 %v2016, 0.0
  %v2547 = vmax.f32 %v2019, 0.0
  %v2548 = vmax.f32 %v2024, 0.0
  %v2549 = vmax.f32 %v2027, 0.0
  %v2550 = vmax.f32 %v2032, 0.0
  %v2551 = vmax.f32 %v2035, 0.0
  %v2552 = vmax.f32 %v2040, 0.0
  %v2553 = vmax.f32 %v2043, 0.0
  %v2554 = vmax.f32 %v2048, 0.0
  %v2555 = vmax.f32 %v2051, 0.0
  %v2556 = vmax.f32 %v2056, 0.0
  %v2557 = vmax.f32 %v2059, 0.0
  %v2558 = vmax.f32 %v2064, 0.0
  %v2559 = vmax.f32 %v2067, 0.0
  %v2560 = vmax.f32 %v2072, 0.0
  %v2561 = vmax.f32 %v2075, 0.0
  %v2562 = vmax.f32 %v2080, 0.0
  %v2563 = vmax.f32 %v2083, 0.0
  %v2564 = vmax.f32 %v2088, 0.0
  %v2565 = vmax.f32 %v2091, 0.0
  %v2566 = vmax.f32 %v2096, 0.0
  %v2567 = vmax.f32 %v2099, 0.0
  %v2568 = vmax.f32 %v2104, 0.0
  %v2569 = vmax.f32 %v2107, 0.0
  %v2570 = vmax.f32 %v2112, 0.0
  %v2571 = vmax.f32 %v2115, 0.0
  %v2572 = vmax.f32 %v2120, 0.0
  %v2573 = vmax.f32 %v2123, 0.0
  %v2574 = vmax.f32 %v2128, 0.0
  %v2575 = vmax.f32 %v2131, 0.0
  %v2576 = vmax.f32 %v2136, 0.0
  %v2577 = vmax.f32 %v2139, 0.0
  %v2578 = vmax.f32 %v2144, 0.0
  %v2579 = vmax.f32 %v2147, 0.0
  %v2580 = vmax.f32 %v2152, 0.0
  %v2581 = vmax.f32 %v2155, 0.0
  %v2582 = vmax.f32 %v2160, 0.0
  %v2583 = vmax.f32 %v2163, 0.0
  %v2584 = vmax.f32 %v2168, 0.0
  %v2585 = vmax.f32 %v2171, 0.0
  %v2586 = vmax.f32 %v2176, 0.0
  %v2587 = vmax.f32 %v2179, 0.0
  %v2588 = vmax.f32 %v2184, 0.0
  %v2589 = vmax.f32 %v2187, 0.0
  %v2590 = vmax.f32 %v2192, 0.0
  %v2591 = vmax.f32 %v2195, 0.0
  %v2592 = vmax.f32 %v2200, 0.0
  %v2593 = vmax.f32 %v2203, 0.0
  %v2594 = vmax.f32 %v2208, 0.0
  %v2595 = vmax.f32 %v2211, 0.0
  %v2596 = vmax.f32 %v2216, 0.0
  %v2597 = vmax.f32 %v2219, 0.0
  %v2598 = vmax.f32 %v2224, 0.0
  %v2599 = vmax.f32 %v2227, 0.0
  %v2600 = vmax.f32 %v2232, 0.0
  %v2601 = vmax.f32 %v2235, 0.0
  %v2602 = vmax.f32 %v2240, 0.0
  %v2603 = vmax.f32 %v2243, 0.0
  %v2604 = vmax.f32 %v2248, 0.0
  %v2605 = vmax.f32 %v2251, 0.0
  %v2606 = vmax.f32 %v2256, 0.0
  %v2607 = vmax.f32 %v2259, 0.0
  %v2608 = vmax.f32 %v2264, 0.0
  %v2609 = vmax.f32 %v2267, 0.0
  %v2610 = vmax.f32 %v2272, 0.0
  %v2611 = vmax.f32 %v2275, 0.0
  %v2612 = vmax.f32 %v2280, 0.0
  %v2613 = vmax.f32 %v2283, 0.0
  %v2614 = vmax.f32 %v2288, 0.0
  %v2615 = vmax.f32 %v2291, 0.0
  %v2616 = vmax.f32 %v2296, 0.0
  %v2617 = vmax.f32 %v2299, 0.0
  %v2618 = vmax.f32 %v2304, 0.0
  %v2619 = vmax.f32 %v2307, 0.0
  %v2620 = vmax.f32 %v2312, 0.0
  %v2621 = vmax.f32 %v2315, 0.0
  %v2622 = vmax.f32 %v2320, 0.0
  %v2623 = vmax.f32 %v2323, 0.0
  %v2624 = vmax.f32 %v2328, 0.0
  %v2625 = vmax.f32 %v2331, 0.0
  %v2626 = vmax.f32 %v2336, 0.0
  %v2627 = vmax.f32 %v2339, 0.0
  %v2628 = vmax.f32 %v2344, 0.0
  %v2629 = vmax.f32 %v2347, 0.0
  %v2630 = vmax.f32 %v2352, 0.0
  %v2631 = vmax.f32 %v2355, 0.0
  %v2632 = vmax.f32 %v2360, 0.0
  %v2633 = vmax.f32 %v2363, 0.0
  %v2634 = vmax.f32 %v2368, 0.0
  %v2635 = vmax.f32 %v2371, 0.0
  %v2636 = vmax.f32 %v2376, 0.0
  %v2637 = vmax.f32 %v2379, 0.0
  %v2638 = vmax.f32 %v2382, %v2446
  %v2639 = vmax.f32 %v2383, %v2447
  %v2640 = vmax.f32 %v2384, %v2448
  %v2641 = vmax.f32 %v2385, %v2449
  %v2642 = vmax.f32 %v2386, %v2450
  %v2643 = vmax.f32 %v2387, %v2451
  %v2644 = vmax.f32 %v2388, %v2452
  %v2645 = vmax.f32 %v2389, %v2453
  %v2646 = vmax.f32 %v2390, %v2454
  %v2647 = vmax.f32 %v2391, %v2455
  %v2648 = vmax.f32 %v2392, %v2456
  %v2649 = vmax.f32 %v2393, %v2457
  %v2650 = vmax.f32 %v2394, %v2458
  %v2651 = vmax.f32 %v2395, %v2459
  %v2652 = vmax.f32 %v2396, %v2460
  %v2653 = vmax.f32 %v2397, %v2461
  %v2654 = vmax.f32 %v2398, %v2462
  %v2655 = vmax.f32 %v2399, %v2463
  %v2656 = vmax.f32 %v2400, %v2464
  %v2657 = vmax.f32 %v2401, %v2465
  %v2658 = vmax.f32 %v2402, %v2466
  %v2659 = vmax.f32 %v2403, %v2467
  %v2660 = vmax.f32 %v2404, %v2468
  %v2661 = vmax.f32 %v2405, %v2469
  %v2662 = vmax.f32 %v2406, %v2470
  %v2663 = vmax.f32 %v2407, %v2471
  %v2664 = vmax.f32 %v2408, %v2472
  %v2665 = vmax.f32 %v2409, %v2473
  %v2666 = vmax.f32 %v2410, %v2474
  %v2667 = vmax.f32 %v2411, %v2475
  %v2668 = vmax.f32 %v2412, %v2476
  %v2669 = vmax.f32 %v2413, %v2477
  %v2670 = vmax.f32 %v2414, %v2478
  %v2671 = vmax.f32 %v2415, %v2479
  %v2672 = vmax.f32 %v2416, %v2480
  %v2673 = vmax.f32 %v2417, %v2481
  %v2674 = vmax.f32 %v2418, %v2482
  %v2675 = vmax.f32 %v2419, %v2483
  %v2676 = vmax.f32 %v2420, %v2484
  %v2677 = vmax.f32 %v2421, %v2485
  %v2678 = vmax.f32 %v2422, %v2486
  %v2679 = vmax.f32 %v2423, %v2487
  %v2680 = vmax.f32 %v2424, %v2488
  %v2681 = vmax.f32 %v2425, %v2489
  %v2682 = vmax.f32 %v2426, %v2490
  %v2683 = vmax.f32 %v2427, %v2491
  %v2684 = vmax.f32 %v2428, %v2492
  %v2685 = vmax.f32 %v2429, %v2493
  %v2686 = vmax.f32 %v2430, %v2494
  %v2687 = vmax.f32 %v2431, %v2495
  %v2688 = vmax.f32 %v2432, %v2496
  %v2689 = vmax.f32 %v2433, %v2497
  %v2690 = vmax.f32 %v2434, %v2498
  %v2691 = vmax.f32 %v2435, %v2499
  %v2692 = vmax.f32 %v2436, %v2500
  %v2693 = vmax.f32 %v2437, %v2501
  %v2694 = vmax.f32 %v2438, %v2502
  %v2695 = vmax.f32 %v2439, %v2503
  %v2696 = vmax.f32 %v2440, %v2504
  %v2697 = vmax.f32 %v2441, %v2505
  %v2698 = vmax.f32 %v2442, %v2506
  %v2699 = vmax.f32 %v2443, %v2507
  %v2700 = vmax.f32 %v2444, %v2508
  %v2701 = vmax.f32 %v2445, %v2509
  %v2702 = vmax.f32 %v2510, %v2574
  %v2703 = vmax.f32 %v2511, %v2575
  %v2704 = vmax.f32 %v2512, %v2576
  %v2705 = vmax.f32 %v2513, %v2577
  %v2706 = vmax.f32 %v2514, %v2578
  %v2707 = vmax.f32 %v2515, %v2579
  %v2708 = vmax.f32 %v2516, %v2580
  %v2709 = vmax.f32 %v2517, %v2581
  %v2710 = vmax.f32 %v2518, %v2582
  %v2711 = vmax.f32 %v2519, %v2583
  %v2712 = vmax.f32 %v2520, %v2584
  %v2713 = vmax.f32 %v2521, %v2585
  %v2714 = vmax.f32 %v2522, %v2586
  %v2715 = vmax.f32 %v2523, %v2587
  %v2716 = vmax.f32 %v2524, %v2588
  %v2717 = vmax.f32 %v2525, %v2589
  %v2718 = vmax.f32 %v2526, %v2590
  %v2719 = vmax.f32 %v2527, %v2591
  %v2720 = vmax.f32 %v2528, %v2592
  %v2721 = vmax.f32 %v2529, %v2593
  %v2722 = vmax.f32 %v2530, %v2594
  %v2723 = vmax.f32 %v2531, %v2595
  %v2724 = vmax.f32 %v2532, %v2596
  %v2725 = vmax.f32 %v2533, %v2597
  %v2726 = vmax.f32 %v2534, %v2598
  %v2727 = vmax.f32 %v2535, %v2599
  %v2728 = vmax.f32 %v2536, %v2600
  %v2729 = vmax.f32 %v2537, %v2601
  %v2730 = vmax.f32 %v2538, %v2602
  %v2731 = vmax.f32 %v2539, %v2603
  %v2732 = vmax.f32 %v2540, %v2604
  %v2733 = vmax.f32 %v2541, %v2605
  %v2734 = vmax.f32 %v2542, %v2606
  %v2735 = vmax.f32 %v2543, %v2607
  %v2736 = vmax.f32 %v2544, %v2608
  %v2737 = vmax.f32 %v2545, %v2609
  %v2738 = vmax.f32 %v2546, %v2610
  %v2739 = vmax.f32 %v2547, %v2611
  %v2740 = vmax.f32 %v2548, %v2612
  %v2741 = vmax.f32 %v2549, %v2613
  %v2742 = vmax.f32 %v2550, %v2614
  %v2743 = vmax.f32 %v2551, %v2615
  %v2744 = vmax.f32 %v2552, %v2616
  %v2745 = vmax.f32 %v2553, %v2617
  %v2746 = vmax.f32 %v2554, %v2618
  %v2747 = vmax.f32 %v2555, %v2619
  %v2748 = vmax.f32 %v2556, %v2620
  %v2749 = vmax.f32 %v2557, %v2621
  %v2750 = vmax.f32 %v2558, %v2622
  %v2751 = vmax.f32 %v2559, %v2623
  %v2752 = vmax.f32 %v2560, %v2624
  %v2753 = vmax.f32 %v2561, %v2625
  %v2754 = vmax.f32 %v2562, %v2626
  %v2755 = vmax.f32 %v2563, %v2627
  %v2756 = vmax.f32 %v2564, %v2628
  %v2757 = vmax.f32 %v2565, %v2629
  %v2758 = vmax.f32 %v2566, %v2630
  %v2759 = vmax.f32 %v2567, %v2631
  %v2760 = vmax.f32 %v2568, %v2632
  %v2761 = vmax.f32 %v2569, %v2633
  %v2762 = vmax.f32 %v2570, %v2634
  %v2763 = vmax.f32 %v2571, %v2635
  %v2764 = vmax.f32 %v2572, %v2636
  %v2765 = vmax.f32 %v2573, %v2637
  %v2766 = vmax.f32 %v2638, %v2702
  %v2767 = vmax.f32 %v2639, %v2703
  %v2768 = vmax.f32 %v2640, %v2704
  %v2769 = vmax.f32 %v2641, %v2705
  %v2770 = vmax.f32 %v2642, %v2706
  %v2771 = vmax.f32 %v2643, %v2707
  %v2772 = vmax.f32 %v2644, %v2708
  %v2773 = vmax.f32 %v2645, %v2709
  %v2774 = vmax.f32 %v2646, %v2710
  %v2775 = vmax.f32 %v2647, %v2711
  %v2776 = vmax.f32 %v2648, %v2712
  %v2777 = vmax.f32 %v2649, %v2713
  %v2778 = vmax.f32 %v2650, %v2714
  %v2779 = vmax.f32 %v2651, %v2715
  %v2780 = vmax.f32 %v2652, %v2716
  %v2781 = vmax.f32 %v2653, %v2717
  %v2782 = vmax.f32 %v2654, %v2718
  %v2783 = vmax.f32 %v2655, %v2719
  %v2784 = vmax.f32 %v2656, %v2720
  %v2785 = vmax.f32 %v2657, %v2721
  %v2786 = vmax.f32 %v2658, %v2722
  %v2787 = vmax.f32 %v2659, %v2723
  %v2788 = vmax.f32 %v2660, %v2724
  %v2789 = vmax.f32 %v2661, %v2725
  %v2790 = vmax.f32 %v2662, %v2726
  %v2791 = vmax.f32 %v2663, %v2727
  %v2792 = vmax.f32 %v2664, %v2728
  %v2793 = vmax.f32 %v2665, %v2729
  %v2794 = vmax.f32 %v2666, %v2730
  %v2795 = vmax.f32 %v2667, %v2731
  %v2796 = vmax.f32 %v2668, %v2732
  %v2797 = vmax.f32 %v2669, %v2733
  %v2798 = vmax.f32 %v2670, %v2734
  %v2799 = vmax.f32 %v2671, %v2735
  %v2800 = vmax.f32 %v2672, %v2736
  %v2801 = vmax.f32 %v2673, %v2737
  %v2802 = vmax.f32 %v2674, %v2738
  %v2803 = vmax.f32 %v2675, %v2739
  %v2804 = vmax.f32 %v2676, %v2740
  %v2805 = vmax.f32 %v2677, %v2741
  %v2806 = vmax.f32 %v2678, %v2742
  %v2807 = vmax.f32 %v2679, %v2743
  %v2808 = vmax.f32 %v2680, %v2744
  %v2809 = vmax.f32 %v2681, %v2745
  %v2810 = vmax.f32 %v2682, %v2746
  %v2811 = vmax.f32 %v2683, %v2747
  %v2812 = vmax.f32 %v2684, %v2748
  %v2813 = vmax.f32 %v2685, %v2749
  %v2814 = vmax.f32 %v2686, %v2750
  %v2815 = vmax.f32 %v2687, %v2751
  %v2816 = vmax.f32 %v2688, %v2752
  %v2817 = vmax.f32 %v2689, %v2753
  %v2818 = vmax.f32 %v2690, %v2754
  %v2819 = vmax.f32 %v2691, %v2755
  %v2820 = vmax.f32 %v2692, %v2756
  %v2821 = vmax.f32 %v2693, %v2757
  %v2822 = vmax.f32 %v2694, %v2758
  %v2823 = vmax.f32 %v2695, %v2759
  %v2824 = vmax.f32 %v2696, %v2760
  %v2825 = vmax.f32 %v2697, %v2761
  %v2826 = vmax.f32 %v2698, %v2762
  %v2827 = vmax.f32 %v2699, %v2763
  %v2828 = vmax.f32 %v2700, %v2764
  %v2829 = vmax.f32 %v2701, %v2765
  %vm2830 = vcmask 261120
  %2831 = vst.msk [vmem:[%s3] sm:$0xff] %vm2830, %v2766
  %2832 = vst.msk [vmem:[%s3 + $0x8] sm:$0xff] %vm2830, %v2767
  %2833 = vst.msk [vmem:[%s3 + $0x10] sm:$0xff] %vm2830, %v2768
  %2834 = vst.msk [vmem:[%s3 + $0x18] sm:$0xff] %vm2830, %v2769
  %2835 = vst.msk [vmem:[%s3 + $0x20] sm:$0xff] %vm2830, %v2770
  %2836 = vst.msk [vmem:[%s3 + $0x28] sm:$0xff] %vm2830, %v2771
  %2837 = vst.msk [vmem:[%s3 + $0x30] sm:$0xff] %vm2830, %v2772
  %2838 = vst.msk [vmem:[%s3 + $0x38] sm:$0xff] %vm2830, %v2773
  %2839 = vst.msk [vmem:[%s3 + $0x40] sm:$0xff] %vm2830, %v2774
  %2840 = vst.msk [vmem:[%s3 + $0x48] sm:$0xff] %vm2830, %v2775
  %2841 = vst.msk [vmem:[%s3 + $0x50] sm:$0xff] %vm2830, %v2776
  %2842 = vst.msk [vmem:[%s3 + $0x58] sm:$0xff] %vm2830, %v2777
  %2843 = vst.msk [vmem:[%s3 + $0x60] sm:$0xff] %vm2830, %v2778
  %2844 = vst.msk [vmem:[%s3 + $0x68] sm:$0xff] %vm2830, %v2779
  %2845 = vst.msk [vmem:[%s3 + $0x70] sm:$0xff] %vm2830, %v2780
  %2846 = vst.msk [vmem:[%s3 + $0x78] sm:$0xff] %vm2830, %v2781
  %2847 = vst.msk [vmem:[%s3 + $0x80] sm:$0xff] %vm2830, %v2782
  %2848 = vst.msk [vmem:[%s3 + $0x88] sm:$0xff] %vm2830, %v2783
  %2849 = vst.msk [vmem:[%s3 + $0x90] sm:$0xff] %vm2830, %v2784
  %2850 = vst.msk [vmem:[%s3 + $0x98] sm:$0xff] %vm2830, %v2785
  %2851 = vst.msk [vmem:[%s3 + $0xa0] sm:$0xff] %vm2830, %v2786
  %2852 = vst.msk [vmem:[%s3 + $0xa8] sm:$0xff] %vm2830, %v2787
  %2853 = vst.msk [vmem:[%s3 + $0xb0] sm:$0xff] %vm2830, %v2788
  %2854 = vst.msk [vmem:[%s3 + $0xb8] sm:$0xff] %vm2830, %v2789
  %2855 = vst.msk [vmem:[%s3 + $0xc0] sm:$0xff] %vm2830, %v2790
  %2856 = vst.msk [vmem:[%s3 + $0xc8] sm:$0xff] %vm2830, %v2791
  %2857 = vst.msk [vmem:[%s3 + $0xd0] sm:$0xff] %vm2830, %v2792
  %2858 = vst.msk [vmem:[%s3 + $0xd8] sm:$0xff] %vm2830, %v2793
  %2859 = vst.msk [vmem:[%s3 + $0xe0] sm:$0xff] %vm2830, %v2794
  %2860 = vst.msk [vmem:[%s3 + $0xe8] sm:$0xff] %vm2830, %v2795
  %2861 = vst.msk [vmem:[%s3 + $0xf0] sm:$0xff] %vm2830, %v2796
  %2862 = vst.msk [vmem:[%s3 + $0xf8] sm:$0xff] %vm2830, %v2797
  %2863 = vst.msk [vmem:[%s3 + $0x100] sm:$0xff] %vm2830, %v2798
  %2864 = vst.msk [vmem:[%s3 + $0x108] sm:$0xff] %vm2830, %v2799
  %2865 = vst.msk [vmem:[%s3 + $0x110] sm:$0xff] %vm2830, %v2800
  %2866 = vst.msk [vmem:[%s3 + $0x118] sm:$0xff] %vm2830, %v2801
  %2867 = vst.msk [vmem:[%s3 + $0x120] sm:$0xff] %vm2830, %v2802
  %2868 = vst.msk [vmem:[%s3 + $0x128] sm:$0xff] %vm2830, %v2803
  %2869 = vst.msk [vmem:[%s3 + $0x130] sm:$0xff] %vm2830, %v2804
  %2870 = vst.msk [vmem:[%s3 + $0x138] sm:$0xff] %vm2830, %v2805
  %2871 = vst.msk [vmem:[%s3 + $0x140] sm:$0xff] %vm2830, %v2806
  %2872 = vst.msk [vmem:[%s3 + $0x148] sm:$0xff] %vm2830, %v2807
  %2873 = vst.msk [vmem:[%s3 + $0x150] sm:$0xff] %vm2830, %v2808
  %2874 = vst.msk [vmem:[%s3 + $0x158] sm:$0xff] %vm2830, %v2809
  %2875 = vst.msk [vmem:[%s3 + $0x160] sm:$0xff] %vm2830, %v2810
  %2876 = vst.msk [vmem:[%s3 + $0x168] sm:$0xff] %vm2830, %v2811
  %2877 = vst.msk [vmem:[%s3 + $0x170] sm:$0xff] %vm2830, %v2812
  %2878 = vst.msk [vmem:[%s3 + $0x178] sm:$0xff] %vm2830, %v2813
  %2879 = vst.msk [vmem:[%s3 + $0x180] sm:$0xff] %vm2830, %v2814
  %2880 = vst.msk [vmem:[%s3 + $0x188] sm:$0xff] %vm2830, %v2815
  %2881 = vst.msk [vmem:[%s3 + $0x190] sm:$0xff] %vm2830, %v2816
  %2882 = vst.msk [vmem:[%s3 + $0x198] sm:$0xff] %vm2830, %v2817
  %2883 = vst.msk [vmem:[%s3 + $0x1a0] sm:$0xff] %vm2830, %v2818
  %2884 = vst.msk [vmem:[%s3 + $0x1a8] sm:$0xff] %vm2830, %v2819
  %2885 = vst.msk [vmem:[%s3 + $0x1b0] sm:$0xff] %vm2830, %v2820
  %2886 = vst.msk [vmem:[%s3 + $0x1b8] sm:$0xff] %vm2830, %v2821
  %2887 = vst.msk [vmem:[%s3 + $0x1c0] sm:$0xff] %vm2830, %v2822
  %2888 = vst.msk [vmem:[%s3 + $0x1c8] sm:$0xff] %vm2830, %v2823
  %2889 = vst.msk [vmem:[%s3 + $0x1d0] sm:$0xff] %vm2830, %v2824
  %2890 = vst.msk [vmem:[%s3 + $0x1d8] sm:$0xff] %vm2830, %v2825
  %2891 = vst.msk [vmem:[%s3 + $0x1e0] sm:$0xff] %vm2830, %v2826
  %2892 = vst.msk [vmem:[%s3 + $0x1e8] sm:$0xff] %vm2830, %v2827
  %2893 = vst.msk [vmem:[%s3 + $0x1f0] sm:$0xff] %vm2830, %v2828
  %2894 = vst.msk [vmem:[%s3 + $0x1f8] sm:$0xff] %vm2830, %v2829
  // Predicated region
  $region14: #{ecg_listener_forward.4} parent=0 // pred_check
    _
  $region15: #{ecg_listener_forward.4} parent=0 // pred_check_branch
    %2896 = sbr.rel (0) target = $region17
  $region16: #{ecg_listener_forward.4} parent=0 // pred_region
    _
  $region17: #{ecg_listener_forward.4} parent=0 // pred_fallthru
    _
  // Predicated region
  $region18: #{ecg_listener_forward.4} parent=0 // pred_check
    _
  $region19: #{ecg_listener_forward.4} parent=0 // pred_check_branch
    %2898 = sbr.rel (0) target = $region21
  $region20: #{ecg_listener_forward.4} parent=0 // pred_region
    _
  $region21: #{ecg_listener_forward.4} parent=0 // pred_fallthru
    _

// kernel: ecg_listener_forward.5
$region0: #{ecg_listener_forward.5}
  #allocation0 [shape = 'u32[]', space=smem, size = 0x4, offset = 0x4, fixed_abs, tag = 'smem constant byte address 0x4 - core index']
  #allocation1 [shape = 'u32[144,128]{1,0:T(1,128)}', space=vmem, size = 0x12000, scoped, tag = 'internal scratch']
  %s0 = inlined_call_operand.vmem [shape: bf16[512,288], index: 0, kind: input, shape index: {}]
  %s1 = inlined_call_operand.vmem [shape: bf16[288,32], index: 1, kind: input, shape index: {}]
  %s2 = inlined_call_operand.vmem [shape: f32[1,32], index: 2, kind: input, shape index: {}]
  %s3 = inlined_call_operand.vmem [shape: f32[128,32], index: 3, kind: output, shape index: {}]
  %s4 = sld [smem:[#allocation0]]
  $region22: #{ecg_listener_forward.5} parent=0
    _
  %s6 = ssub.s32 1, %s4
  %s7 = scalar_select 0, %s6, %s4
  // Predicated region
  $region2: #{ecg_listener_forward.5} parent=0 // pred_check
    _
  $region3: #{ecg_listener_forward.5} parent=0 // pred_check_branch
    %9 = sbr.rel (0) target = $region5
  $region4: #{ecg_listener_forward.5} parent=0 // pred_region
    _
  $region5: #{ecg_listener_forward.5} parent=0 // pred_fallthru
    _
  // Predicated region
  $region6: #{ecg_listener_forward.5} parent=0 // pred_check
    _
  $region7: #{ecg_listener_forward.5} parent=0 // pred_check_branch
    %11 = sbr.rel (0) target = $region9
  $region8: #{ecg_listener_forward.5} parent=0 // pred_region
    _
  $region9: #{ecg_listener_forward.5} parent=0 // pred_fallthru
    _
  // Predicated region
  $region10: #{ecg_listener_forward.5} parent=0 // pred_check
    _
  $region11: #{ecg_listener_forward.5} parent=0 // pred_check_branch
    %13 = sbr.rel (0) target = $region13
  $region12: #{ecg_listener_forward.5} parent=0 // pred_region
    _
  $region13: #{ecg_listener_forward.5} parent=0 // pred_fallthru
    _
  %v15 = vld [vmem:[%s0] sm:$0xff]
  %v16 = vld [vmem:[%s0 + $0x8] sm:$0xf]
  %v17 = vld [vmem:[%s0 + $0xc] sm:$0xff]
  %v18 = vld [vmem:[%s0 + $0x14] sm:$0xf]
  %v19 = vld [vmem:[%s0 + $0x18] sm:$0xff]
  %v20 = vld [vmem:[%s0 + $0x20] sm:$0xf]
  %v21 = vld [vmem:[%s0 + $0x24] sm:$0xff]
  %v22 = vld [vmem:[%s0 + $0x2c] sm:$0xf]
  %v23 = vld [vmem:[%s0 + $0x30] sm:$0xff]
  %v24 = vld [vmem:[%s0 + $0x38] sm:$0xf]
  %v25 = vld [vmem:[%s0 + $0x3c] sm:$0xff]
  %v26 = vld [vmem:[%s0 + $0x44] sm:$0xf]
  %v27 = vld [vmem:[%s0 + $0x48] sm:$0xff]
  %v28 = vld [vmem:[%s0 + $0x50] sm:$0xf]
  %v29 = vld [vmem:[%s0 + $0x54] sm:$0xff]
  %v30 = vld [vmem:[%s0 + $0x5c] sm:$0xf]
  %v31 = vld [vmem:[%s0 + $0x60] sm:$0xff]
  %v32 = vld [vmem:[%s0 + $0x68] sm:$0xf]
  %v33 = vld [vmem:[%s0 + $0x6c] sm:$0xff]
  %v34 = vld [vmem:[%s0 + $0x74] sm:$0xf]
  %v35 = vld [vmem:[%s0 + $0x78] sm:$0xff]
  %v36 = vld [vmem:[%s0 + $0x80] sm:$0xf]
  %v37 = vld [vmem:[%s0 + $0x84] sm:$0xff]
  %v38 = vld [vmem:[%s0 + $0x8c] sm:$0xf]
  %v39 = vld [vmem:[%s0 + $0x90] sm:$0xff]
  %v40 = vld [vmem:[%s0 + $0x98] sm:$0xf]
  %v41 = vld [vmem:[%s0 + $0x9c] sm:$0xff]
  %v42 = vld [vmem:[%s0 + $0xa4] sm:$0xf]
  %v43 = vld [vmem:[%s0 + $0xa8] sm:$0xff]
  %v44 = vld [vmem:[%s0 + $0xb0] sm:$0xf]
  %v45 = vld [vmem:[%s0 + $0xb4] sm:$0xff]
  %v46 = vld [vmem:[%s0 + $0xbc] sm:$0xf]
  %v47 = vld [vmem:[%s0 + $0xc0] sm:$0xff]
  %v48 = vld [vmem:[%s0 + $0xc8] sm:$0xf]
  %v49 = vld [vmem:[%s0 + $0xcc] sm:$0xff]
  %v50 = vld [vmem:[%s0 + $0xd4] sm:$0xf]
  %v51 = vld [vmem:[%s0 + $0xd8] sm:$0xff]
  %v52 = vld [vmem:[%s0 + $0xe0] sm:$0xf]
  %v53 = vld [vmem:[%s0 + $0xe4] sm:$0xff]
  %v54 = vld [vmem:[%s0 + $0xec] sm:$0xf]
  %v55 = vld [vmem:[%s0 + $0xf0] sm:$0xff]
  %v56 = vld [vmem:[%s0 + $0xf8] sm:$0xf]
  %v57 = vld [vmem:[%s0 + $0xfc] sm:$0xff]
  %v58 = vld [vmem:[%s0 + $0x104] sm:$0xf]
  %v59 = vld [vmem:[%s0 + $0x108] sm:$0xff]
  %v60 = vld [vmem:[%s0 + $0x110] sm:$0xf]
  %v61 = vld [vmem:[%s0 + $0x114] sm:$0xff]
  %v62 = vld [vmem:[%s0 + $0x11c] sm:$0xf]
  %v63 = vld [vmem:[%s0 + $0x120] sm:$0xff]
  %v64 = vld [vmem:[%s0 + $0x128] sm:$0xf]
  %v65 = vld [vmem:[%s0 + $0x12c] sm:$0xff]
  %v66 = vld [vmem:[%s0 + $0x134] sm:$0xf]
  %v67 = vld [vmem:[%s0 + $0x138] sm:$0xff]
  %v68 = vld [vmem:[%s0 + $0x140] sm:$0xf]
  %v69 = vld [vmem:[%s0 + $0x144] sm:$0xff]
  %v70 = vld [vmem:[%s0 + $0x14c] sm:$0xf]
  %v71 = vld [vmem:[%s0 + $0x150] sm:$0xff]
  %v72 = vld [vmem:[%s0 + $0x158] sm:$0xf]
  %v73 = vld [vmem:[%s0 + $0x15c] sm:$0xff]
  %v74 = vld [vmem:[%s0 + $0x164] sm:$0xf]
  %v75 = vld [vmem:[%s0 + $0x168] sm:$0xff]
  %v76 = vld [vmem:[%s0 + $0x170] sm:$0xf]
  %v77 = vld [vmem:[%s0 + $0x174] sm:$0xff]
  %v78 = vld [vmem:[%s0 + $0x17c] sm:$0xf]
  %v79 = vld [vmem:[%s0 + $0x180] sm:$0xff]
  %v80 = vld [vmem:[%s0 + $0x188] sm:$0xf]
  %v81 = vld [vmem:[%s0 + $0x18c] sm:$0xff]
  %v82 = vld [vmem:[%s0 + $0x194] sm:$0xf]
  %v83 = vld [vmem:[%s0 + $0x198] sm:$0xff]
  %v84 = vld [vmem:[%s0 + $0x1a0] sm:$0xf]
  %v85 = vld [vmem:[%s0 + $0x1a4] sm:$0xff]
  %v86 = vld [vmem:[%s0 + $0x1ac] sm:$0xf]
  %v87 = vld [vmem:[%s0 + $0x1b0] sm:$0xff]
  %v88 = vld [vmem:[%s0 + $0x1b8] sm:$0xf]
  %v89 = vld [vmem:[%s0 + $0x1bc] sm:$0xff]
  %v90 = vld [vmem:[%s0 + $0x1c4] sm:$0xf]
  %v91 = vld [vmem:[%s0 + $0x1c8] sm:$0xff]
  %v92 = vld [vmem:[%s0 + $0x1d0] sm:$0xf]
  %v93 = vld [vmem:[%s0 + $0x1d4] sm:$0xff]
  %v94 = vld [vmem:[%s0 + $0x1dc] sm:$0xf]
  %v95 = vld [vmem:[%s0 + $0x1e0] sm:$0xff]
  %v96 = vld [vmem:[%s0 + $0x1e8] sm:$0xf]
  %v97 = vld [vmem:[%s0 + $0x1ec] sm:$0xff]
  %v98 = vld [vmem:[%s0 + $0x1f4] sm:$0xf]
  %v99 = vld [vmem:[%s0 + $0x1f8] sm:$0xff]
  %v100 = vld [vmem:[%s0 + $0x200] sm:$0xf]
  %v101 = vld [vmem:[%s0 + $0x204] sm:$0xff]
  %v102 = vld [vmem:[%s0 + $0x20c] sm:$0xf]
  %v103 = vld [vmem:[%s0 + $0x210] sm:$0xff]
  %v104 = vld [vmem:[%s0 + $0x218] sm:$0xf]
  %v105 = vld [vmem:[%s0 + $0x21c] sm:$0xff]
  %v106 = vld [vmem:[%s0 + $0x224] sm:$0xf]
  %v107 = vld [vmem:[%s0 + $0x228] sm:$0xff]
  %v108 = vld [vmem:[%s0 + $0x230] sm:$0xf]
  %v109 = vld [vmem:[%s0 + $0x234] sm:$0xff]
  %v110 = vld [vmem:[%s0 + $0x23c] sm:$0xf]
  %v111 = vld [vmem:[%s0 + $0x240] sm:$0xff]
  %v112 = vld [vmem:[%s0 + $0x248] sm:$0xf]
  %v113 = vld [vmem:[%s0 + $0x24c] sm:$0xff]
  %v114 = vld [vmem:[%s0 + $0x254] sm:$0xf]
  %v115 = vld [vmem:[%s0 + $0x258] sm:$0xff]
  %v116 = vld [vmem:[%s0 + $0x260] sm:$0xf]
  %v117 = vld [vmem:[%s0 + $0x264] sm:$0xff]
  %v118 = vld [vmem:[%s0 + $0x26c] sm:$0xf]
  %v119 = vld [vmem:[%s0 + $0x270] sm:$0xff]
  %v120 = vld [vmem:[%s0 + $0x278] sm:$0xf]
  %v121 = vld [vmem:[%s0 + $0x27c] sm:$0xff]
  %v122 = vld [vmem:[%s0 + $0x284] sm:$0xf]
  %v123 = vld [vmem:[%s0 + $0x288] sm:$0xff]
  %v124 = vld [vmem:[%s0 + $0x290] sm:$0xf]
  %v125 = vld [vmem:[%s0 + $0x294] sm:$0xff]
  %v126 = vld [vmem:[%s0 + $0x29c] sm:$0xf]
  %v127 = vld [vmem:[%s0 + $0x2a0] sm:$0xff]
  %v128 = vld [vmem:[%s0 + $0x2a8] sm:$0xf]
  %v129 = vld [vmem:[%s0 + $0x2ac] sm:$0xff]
  %v130 = vld [vmem:[%s0 + $0x2b4] sm:$0xf]
  %v131 = vld [vmem:[%s0 + $0x2b8] sm:$0xff]
  %v132 = vld [vmem:[%s0 + $0x2c0] sm:$0xf]
  %v133 = vld [vmem:[%s0 + $0x2c4] sm:$0xff]
  %v134 = vld [vmem:[%s0 + $0x2cc] sm:$0xf]
  %v135 = vld [vmem:[%s0 + $0x2d0] sm:$0xff]
  %v136 = vld [vmem:[%s0 + $0x2d8] sm:$0xf]
  %v137 = vld [vmem:[%s0 + $0x2dc] sm:$0xff]
  %v138 = vld [vmem:[%s0 + $0x2e4] sm:$0xf]
  %v139 = vld [vmem:[%s0 + $0x2e8] sm:$0xff]
  %v140 = vld [vmem:[%s0 + $0x2f0] sm:$0xf]
  %v141 = vld [vmem:[%s0 + $0x2f4] sm:$0xff]
  %v142 = vld [vmem:[%s0 + $0x2fc] sm:$0xf]
  %v143 = vld [vmem:[%s1] sm:$0xf]
  %v144 = vld [vmem:[%s1 + $0x4] sm:$0xf]
  %v145 = vld [vmem:[%s1 + $0x8] sm:$0xf]
  %v146 = vld [vmem:[%s1 + $0xc] sm:$0xf]
  %v147 = vld [vmem:[%s1 + $0x10] sm:$0xf]
  %v148 = vld [vmem:[%s1 + $0x14] sm:$0xf]
  %v149 = vld [vmem:[%s1 + $0x18] sm:$0xf]
  %v150 = vld [vmem:[%s1 + $0x1c] sm:$0xf]
  %v151 = vld [vmem:[%s1 + $0x20] sm:$0xf]
  %v152 = vld [vmem:[%s1 + $0x24] sm:$0xf]
  %v153 = vld [vmem:[%s1 + $0x28] sm:$0xf]
  %v154 = vld [vmem:[%s1 + $0x2c] sm:$0xf]
  %v155 = vld [vmem:[%s1 + $0x30] sm:$0xf]
  %v156 = vld [vmem:[%s1 + $0x34] sm:$0xf]
  %v157 = vld [vmem:[%s1 + $0x38] sm:$0xf]
  %v158 = vld [vmem:[%s1 + $0x3c] sm:$0xf]
  %v159 = vld [vmem:[%s1 + $0x40] sm:$0xf]
  %v160 = vld [vmem:[%s1 + $0x44] sm:$0xf]
  %v161 = vld [vmem:[%s1 + $0x48] sm:$0xf]
  %v162 = vld [vmem:[%s1 + $0x4c] sm:$0xf]
  %v163 = vld [vmem:[%s1 + $0x50] sm:$0xf]
  %v164 = vld [vmem:[%s1 + $0x54] sm:$0xf]
  %v165 = vld [vmem:[%s1 + $0x58] sm:$0xf]
  %v166 = vld [vmem:[%s1 + $0x5c] sm:$0xf]
  %v167 = vld [vmem:[%s1 + $0x60] sm:$0xf]
  %v168 = vld [vmem:[%s1 + $0x64] sm:$0xf]
  %v169 = vld [vmem:[%s1 + $0x68] sm:$0xf]
  %v170 = vld [vmem:[%s1 + $0x6c] sm:$0xf]
  %v171 = vld [vmem:[%s1 + $0x70] sm:$0xf]
  %v172 = vld [vmem:[%s1 + $0x74] sm:$0xf]
  %v173 = vld [vmem:[%s1 + $0x78] sm:$0xf]
  %v174 = vld [vmem:[%s1 + $0x7c] sm:$0xf]
  %v175 = vld [vmem:[%s1 + $0x80] sm:$0xf]
  %v176 = vld [vmem:[%s1 + $0x84] sm:$0xf]
  %v177 = vld [vmem:[%s1 + $0x88] sm:$0xf]
  %v178 = vld [vmem:[%s1 + $0x8c] sm:$0xf]
  %v179 = vld [vmem:[%s2] sm:$0x1]
  %v181 = vlaneseq
  %v182 = vshrl.u32 %v181, 7
  %v183 = vsub.s32 0, %v182
  %v184 = vrot.slane %v179, %v183
  %v314 = vunpack.c.l.b16 %v15
  %v315 = vunpack.c.h.b16 %v15
  %v316 = vunpack.c.l.b16 %v16
  %v317 = vunpack.c.l.b16 %v17
  %v318 = vunpack.c.h.b16 %v17
  %v319 = vunpack.c.l.b16 %v18
  %v320 = vunpack.c.l.b16 %v19
  %v321 = vunpack.c.h.b16 %v19
  %v322 = vunpack.c.l.b16 %v20
  %v323 = vunpack.c.l.b16 %v21
  %v324 = vunpack.c.h.b16 %v21
  %v325 = vunpack.c.l.b16 %v22
  %v326 = vunpack.c.l.b16 %v23
  %v327 = vunpack.c.h.b16 %v23
  %v328 = vunpack.c.l.b16 %v24
  %v329 = vunpack.c.l.b16 %v25
  %v330 = vunpack.c.h.b16 %v25
  %v331 = vunpack.c.l.b16 %v26
  %v332 = vunpack.c.l.b16 %v27
  %v333 = vunpack.c.h.b16 %v27
  %v334 = vunpack.c.l.b16 %v28
  %v335 = vunpack.c.l.b16 %v29
  %v336 = vunpack.c.h.b16 %v29
  %v337 = vunpack.c.l.b16 %v30
  %v338 = vunpack.c.l.b16 %v31
  %v339 = vunpack.c.h.b16 %v31
  %v340 = vunpack.c.l.b16 %v32
  %v341 = vunpack.c.l.b16 %v33
  %v342 = vunpack.c.h.b16 %v33
  %v343 = vunpack.c.l.b16 %v34
  %v344 = vunpack.c.l.b16 %v35
  %v345 = vunpack.c.h.b16 %v35
  %v346 = vunpack.c.l.b16 %v36
  %v347 = vunpack.c.l.b16 %v37
  %v348 = vunpack.c.h.b16 %v37
  %v349 = vunpack.c.l.b16 %v38
  %v350 = vunpack.c.l.b16 %v39
  %v351 = vunpack.c.h.b16 %v39
  %v352 = vunpack.c.l.b16 %v40
  %v353 = vunpack.c.l.b16 %v41
  %v354 = vunpack.c.h.b16 %v41
  %v355 = vunpack.c.l.b16 %v42
  %v356 = vunpack.c.l.b16 %v43
  %v357 = vunpack.c.h.b16 %v43
  %v358 = vunpack.c.l.b16 %v44
  %v359 = vunpack.c.l.b16 %v45
  %v360 = vunpack.c.h.b16 %v45
  %v361 = vunpack.c.l.b16 %v46
  %v362 = vunpack.c.l.b16 %v47
  %v363 = vunpack.c.h.b16 %v47
  %v364 = vunpack.c.l.b16 %v48
  %v365 = vunpack.c.l.b16 %v49
  %v366 = vunpack.c.h.b16 %v49
  %v367 = vunpack.c.l.b16 %v50
  %v368 = vunpack.c.l.b16 %v51
  %v369 = vunpack.c.h.b16 %v51
  %v370 = vunpack.c.l.b16 %v52
  %v371 = vunpack.c.l.b16 %v53
  %v372 = vunpack.c.h.b16 %v53
  %v373 = vunpack.c.l.b16 %v54
  %v374 = vunpack.c.l.b16 %v55
  %v375 = vunpack.c.h.b16 %v55
  %v376 = vunpack.c.l.b16 %v56
  %v377 = vunpack.c.l.b16 %v57
  %v378 = vunpack.c.h.b16 %v57
  %v379 = vunpack.c.l.b16 %v58
  %v380 = vunpack.c.l.b16 %v59
  %v381 = vunpack.c.h.b16 %v59
  %v382 = vunpack.c.l.b16 %v60
  %v383 = vunpack.c.l.b16 %v61
  %v384 = vunpack.c.h.b16 %v61
  %v385 = vunpack.c.l.b16 %v62
  %v386 = vunpack.c.l.b16 %v63
  %v387 = vunpack.c.h.b16 %v63
  %v388 = vunpack.c.l.b16 %v64
  %v389 = vunpack.c.l.b16 %v65
  %v390 = vunpack.c.h.b16 %v65
  %v391 = vunpack.c.l.b16 %v66
  %v392 = vunpack.c.l.b16 %v67
  %v393 = vunpack.c.h.b16 %v67
  %v394 = vunpack.c.l.b16 %v68
  %v395 = vunpack.c.l.b16 %v69
  %v396 = vunpack.c.h.b16 %v69
  %v397 = vunpack.c.l.b16 %v70
  %v398 = vunpack.c.l.b16 %v71
  %v399 = vunpack.c.h.b16 %v71
  %v400 = vunpack.c.l.b16 %v72
  %v401 = vunpack.c.l.b16 %v73
  %v402 = vunpack.c.h.b16 %v73
  %v403 = vunpack.c.l.b16 %v74
  %v404 = vunpack.c.l.b16 %v75
  %v405 = vunpack.c.h.b16 %v75
  %v406 = vunpack.c.l.b16 %v76
  %v407 = vunpack.c.l.b16 %v77
  %v408 = vunpack.c.h.b16 %v77
  %v409 = vunpack.c.l.b16 %v78
  %v410 = vunpack.c.l.b16 %v79
  %v411 = vunpack.c.h.b16 %v79
  %v412 = vunpack.c.l.b16 %v80
  %v413 = vunpack.c.l.b16 %v81
  %v414 = vunpack.c.h.b16 %v81
  %v415 = vunpack.c.l.b16 %v82
  %v416 = vunpack.c.l.b16 %v83
  %v417 = vunpack.c.h.b16 %v83
  %v418 = vunpack.c.l.b16 %v84
  %v419 = vunpack.c.l.b16 %v85
  %v420 = vunpack.c.h.b16 %v85
  %v421 = vunpack.c.l.b16 %v86
  %v422 = vunpack.c.l.b16 %v87
  %v423 = vunpack.c.h.b16 %v87
  %v424 = vunpack.c.l.b16 %v88
  %v425 = vunpack.c.l.b16 %v89
  %v426 = vunpack.c.h.b16 %v89
  %v427 = vunpack.c.l.b16 %v90
  %v428 = vunpack.c.l.b16 %v91
  %v429 = vunpack.c.h.b16 %v91
  %v430 = vunpack.c.l.b16 %v92
  %v431 = vunpack.c.l.b16 %v93
  %v432 = vunpack.c.h.b16 %v93
  %v433 = vunpack.c.l.b16 %v94
  %v434 = vunpack.c.l.b16 %v95
  %v435 = vunpack.c.h.b16 %v95
  %v436 = vunpack.c.l.b16 %v96
  %v437 = vunpack.c.l.b16 %v97
  %v438 = vunpack.c.h.b16 %v97
  %v439 = vunpack.c.l.b16 %v98
  %v440 = vunpack.c.l.b16 %v99
  %v441 = vunpack.c.h.b16 %v99
  %v442 = vunpack.c.l.b16 %v100
  %v443 = vunpack.c.l.b16 %v101
  %v444 = vunpack.c.h.b16 %v101
  %v445 = vunpack.c.l.b16 %v102
  %v446 = vunpack.c.l.b16 %v103
  %v447 = vunpack.c.h.b16 %v103
  %v448 = vunpack.c.l.b16 %v104
  %v449 = vunpack.c.l.b16 %v105
  %v450 = vunpack.c.h.b16 %v105
  %v451 = vunpack.c.l.b16 %v106
  %v452 = vunpack.c.l.b16 %v107
  %v453 = vunpack.c.h.b16 %v107
  %v454 = vunpack.c.l.b16 %v108
  %v455 = vunpack.c.l.b16 %v109
  %v456 = vunpack.c.h.b16 %v109
  %v457 = vunpack.c.l.b16 %v110
  %v458 = vunpack.c.l.b16 %v111
  %v459 = vunpack.c.h.b16 %v111
  %v460 = vunpack.c.l.b16 %v112
  %v461 = vunpack.c.l.b16 %v113
  %v462 = vunpack.c.h.b16 %v113
  %v463 = vunpack.c.l.b16 %v114
  %v464 = vunpack.c.l.b16 %v115
  %v465 = vunpack.c.h.b16 %v115
  %v466 = vunpack.c.l.b16 %v116
  %v467 = vunpack.c.l.b16 %v117
  %v468 = vunpack.c.h.b16 %v117
  %v469 = vunpack.c.l.b16 %v118
  %v470 = vunpack.c.l.b16 %v119
  %v471 = vunpack.c.h.b16 %v119
  %v472 = vunpack.c.l.b16 %v120
  %v473 = vunpack.c.l.b16 %v121
  %v474 = vunpack.c.h.b16 %v121
  %v475 = vunpack.c.l.b16 %v122
  %v476 = vunpack.c.l.b16 %v123
  %v477 = vunpack.c.h.b16 %v123
  %v478 = vunpack.c.l.b16 %v124
  %v479 = vunpack.c.l.b16 %v125
  %v480 = vunpack.c.h.b16 %v125
  %v481 = vunpack.c.l.b16 %v126
  %v482 = vunpack.c.l.b16 %v127
  %v483 = vunpack.c.h.b16 %v127
  %v484 = vunpack.c.l.b16 %v128
  %v485 = vunpack.c.l.b16 %v129
  %v486 = vunpack.c.h.b16 %v129
  %v487 = vunpack.c.l.b16 %v130
  %v488 = vunpack.c.l.b16 %v131
  %v489 = vunpack.c.h.b16 %v131
  %v490 = vunpack.c.l.b16 %v132
  %v491 = vunpack.c.l.b16 %v133
  %v492 = vunpack.c.h.b16 %v133
  %v493 = vunpack.c.l.b16 %v134
  %v494 = vunpack.c.l.b16 %v135
  %v495 = vunpack.c.h.b16 %v135
  %v496 = vunpack.c.l.b16 %v136
  %v497 = vunpack.c.l.b16 %v137
  %v498 = vunpack.c.h.b16 %v137
  %v499 = vunpack.c.l.b16 %v138
  %v500 = vunpack.c.l.b16 %v139
  %v501 = vunpack.c.h.b16 %v139
  %v502 = vunpack.c.l.b16 %v140
  %v503 = vunpack.c.l.b16 %v141
  %v504 = vunpack.c.h.b16 %v141
  %v505 = vunpack.c.l.b16 %v142
  %v506 = vpack.c.b16 %v317, %v314
  %v507 = vpack.c.b16 %v318, %v315
  %v508 = vpack.c.b16 %v319, %v316
  %v509 = vpack.c.b16 %v323, %v320
  %v510 = vpack.c.b16 %v324, %v321
  %v511 = vpack.c.b16 %v325, %v322
  %v512 = vpack.c.b16 %v329, %v326
  %v513 = vpack.c.b16 %v330, %v327
  %v514 = vpack.c.b16 %v331, %v328
  %v515 = vpack.c.b16 %v335, %v332
  %v516 = vpack.c.b16 %v336, %v333
  %v517 = vpack.c.b16 %v337, %v334
  %v518 = vpack.c.b16 %v341, %v338
  %v519 = vpack.c.b16 %v342, %v339
  %v520 = vpack.c.b16 %v343, %v340
  %v521 = vpack.c.b16 %v347, %v344
  %v522 = vpack.c.b16 %v348, %v345
  %v523 = vpack.c.b16 %v349, %v346
  %v524 = vpack.c.b16 %v353, %v350
  %v525 = vpack.c.b16 %v354, %v351
  %v526 = vpack.c.b16 %v355, %v352
  %v527 = vpack.c.b16 %v359, %v356
  %v528 = vpack.c.b16 %v360, %v357
  %v529 = vpack.c.b16 %v361, %v358
  %v530 = vpack.c.b16 %v365, %v362
  %v531 = vpack.c.b16 %v366, %v363
  %v532 = vpack.c.b16 %v367, %v364
  %v533 = vpack.c.b16 %v371, %v368
  %v534 = vpack.c.b16 %v372, %v369
  %v535 = vpack.c.b16 %v373, %v370
  %v536 = vpack.c.b16 %v377, %v374
  %v537 = vpack.c.b16 %v378, %v375
  %v538 = vpack.c.b16 %v379, %v376
  %v539 = vpack.c.b16 %v383, %v380
  %v540 = vpack.c.b16 %v384, %v381
  %v541 = vpack.c.b16 %v385, %v382
  %v542 = vpack.c.b16 %v389, %v386
  %v543 = vpack.c.b16 %v390, %v387
  %v544 = vpack.c.b16 %v391, %v388
  %v545 = vpack.c.b16 %v395, %v392
  %v546 = vpack.c.b16 %v396, %v393
  %v547 = vpack.c.b16 %v397, %v394
  %v548 = vpack.c.b16 %v401, %v398
  %v549 = vpack.c.b16 %v402, %v399
  %v550 = vpack.c.b16 %v403, %v400
  %v551 = vpack.c.b16 %v407, %v404
  %v552 = vpack.c.b16 %v408, %v405
  %v553 = vpack.c.b16 %v409, %v406
  %v554 = vpack.c.b16 %v413, %v410
  %v555 = vpack.c.b16 %v414, %v411
  %v556 = vpack.c.b16 %v415, %v412
  %v557 = vpack.c.b16 %v419, %v416
  %v558 = vpack.c.b16 %v420, %v417
  %v559 = vpack.c.b16 %v421, %v418
  %v560 = vpack.c.b16 %v425, %v422
  %v561 = vpack.c.b16 %v426, %v423
  %v562 = vpack.c.b16 %v427, %v424
  %v563 = vpack.c.b16 %v431, %v428
  %v564 = vpack.c.b16 %v432, %v429
  %v565 = vpack.c.b16 %v433, %v430
  %v566 = vpack.c.b16 %v437, %v434
  %v567 = vpack.c.b16 %v438, %v435
  %v568 = vpack.c.b16 %v439, %v436
  %v569 = vpack.c.b16 %v443, %v440
  %v570 = vpack.c.b16 %v444, %v441
  %v571 = vpack.c.b16 %v445, %v442
  %v572 = vpack.c.b16 %v449, %v446
  %v573 = vpack.c.b16 %v450, %v447
  %v574 = vpack.c.b16 %v451, %v448
  %v575 = vpack.c.b16 %v455, %v452
  %v576 = vpack.c.b16 %v456, %v453
  %v577 = vpack.c.b16 %v457, %v454
  %v578 = vpack.c.b16 %v461, %v458
  %v579 = vpack.c.b16 %v462, %v459
  %v580 = vpack.c.b16 %v463, %v460
  %v581 = vpack.c.b16 %v467, %v464
  %v582 = vpack.c.b16 %v468, %v465
  %v583 = vpack.c.b16 %v469, %v466
  %v584 = vpack.c.b16 %v473, %v470
  %v585 = vpack.c.b16 %v474, %v471
  %v586 = vpack.c.b16 %v475, %v472
  %v587 = vpack.c.b16 %v479, %v476
  %v588 = vpack.c.b16 %v480, %v477
  %v589 = vpack.c.b16 %v481, %v478
  %v590 = vpack.c.b16 %v485, %v482
  %v591 = vpack.c.b16 %v486, %v483
  %v592 = vpack.c.b16 %v487, %v484
  %v593 = vpack.c.b16 %v491, %v488
  %v594 = vpack.c.b16 %v492, %v489
  %v595 = vpack.c.b16 %v493, %v490
  %v596 = vpack.c.b16 %v497, %v494
  %v597 = vpack.c.b16 %v498, %v495
  %v598 = vpack.c.b16 %v499, %v496
  %v599 = vpack.c.b16 %v503, %v500
  %v600 = vpack.c.b16 %v504, %v501
  %v601 = vpack.c.b16 %v505, %v502
  %v702 = vunpack.c.l.b16 %v143
  %v703 = vunpack.c.l.b16 %v144
  %v704 = vunpack.c.l.b16 %v145
  %v705 = vunpack.c.l.b16 %v146
  %v706 = vunpack.c.l.b16 %v147
  %v707 = vunpack.c.l.b16 %v148
  %v708 = vunpack.c.l.b16 %v149
  %v709 = vunpack.c.l.b16 %v150
  %v710 = vunpack.c.l.b16 %v151
  %v711 = vunpack.c.l.b16 %v152
  %v712 = vunpack.c.l.b16 %v153
  %v713 = vunpack.c.l.b16 %v154
  %v714 = vunpack.c.l.b16 %v155
  %v715 = vunpack.c.l.b16 %v156
  %v716 = vunpack.c.l.b16 %v157
  %v717 = vunpack.c.l.b16 %v158
  %v718 = vunpack.c.l.b16 %v159
  %v719 = vunpack.c.l.b16 %v160
  %v720 = vunpack.c.l.b16 %v161
  %v721 = vunpack.c.l.b16 %v162
  %v722 = vunpack.c.l.b16 %v163
  %v723 = vunpack.c.l.b16 %v164
  %v724 = vunpack.c.l.b16 %v165
  %v725 = vunpack.c.l.b16 %v166
  %v726 = vunpack.c.l.b16 %v167
  %v727 = vunpack.c.l.b16 %v168
  %v728 = vunpack.c.l.b16 %v169
  %v729 = vunpack.c.l.b16 %v170
  %v730 = vunpack.c.l.b16 %v171
  %v731 = vunpack.c.l.b16 %v172
  %v732 = vunpack.c.l.b16 %v173
  %v733 = vunpack.c.l.b16 %v174
  %v734 = vunpack.c.l.b16 %v175
  %v735 = vunpack.c.l.b16 %v176
  %v736 = vunpack.c.l.b16 %v177
  %v737 = vunpack.c.l.b16 %v178
  %v738 = vpack.c.b16 %v703, %v702
  %v739 = vpack.c.b16 %v705, %v704
  %v740 = vpack.c.b16 %v707, %v706
  %v741 = vpack.c.b16 %v709, %v708
  %v742 = vpack.c.b16 %v711, %v710
  %v743 = vpack.c.b16 %v713, %v712
  %v744 = vpack.c.b16 %v715, %v714
  %v745 = vpack.c.b16 %v717, %v716
  %v746 = vpack.c.b16 %v719, %v718
  %v747 = vpack.c.b16 %v721, %v720
  %v748 = vpack.c.b16 %v723, %v722
  %v749 = vpack.c.b16 %v725, %v724
  %v750 = vpack.c.b16 %v727, %v726
  %v751 = vpack.c.b16 %v729, %v728
  %v752 = vpack.c.b16 %v731, %v730
  %v753 = vpack.c.b16 %v733, %v732
  %v754 = vpack.c.b16 %v735, %v734
  %v755 = vpack.c.b16 %v737, %v736
  %vm774 = vcmask 261120
  %v776 = vsel %vm774, %v508, 0
  %v779 = vsel %vm774, %v511, 0
  %v782 = vsel %vm774, %v514, 0
  %v785 = vsel %vm774, %v517, 0
  %v788 = vsel %vm774, %v520, 0
  %v791 = vsel %vm774, %v523, 0
  %v794 = vsel %vm774, %v526, 0
  %v797 = vsel %vm774, %v529, 0
  %v800 = vsel %vm774, %v532, 0
  %v803 = vsel %vm774, %v535, 0
  %v806 = vsel %vm774, %v538, 0
  %v809 = vsel %vm774, %v541, 0
  %v812 = vsel %vm774, %v544, 0
  %v815 = vsel %vm774, %v547, 0
  %v818 = vsel %vm774, %v550, 0
  %v821 = vsel %vm774, %v553, 0
  %v824 = vsel %vm774, %v556, 0
  %v827 = vsel %vm774, %v559, 0
  %v830 = vsel %vm774, %v562, 0
  %v833 = vsel %vm774, %v565, 0
  %v836 = vsel %vm774, %v568, 0
  %v839 = vsel %vm774, %v571, 0
  %v842 = vsel %vm774, %v574, 0
  %v845 = vsel %vm774, %v577, 0
  %v848 = vsel %vm774, %v580, 0
  %v851 = vsel %vm774, %v583, 0
  %v854 = vsel %vm774, %v586, 0
  %v857 = vsel %vm774, %v589, 0
  %v860 = vsel %vm774, %v592, 0
  %v863 = vsel %vm774, %v595, 0
  %v866 = vsel %vm774, %v598, 0
  %v869 = vsel %vm774, %v601, 0
  %871 = vmatprep.subr.bf16.mxu0 0
  %872 = vmatpush1.bf16.msra.mxu0 %v738
  %873 = vmatprep.subr.bf16.mxu0 0
  %874 = vmatpush1.bf16.msra.mxu0 %v739
  %875 = vmatprep.subr.bf16.mxu0 0
  %876 = vmatpush1.bf16.msra.mxu0 %v740
  %877 = vmatprep.subr.bf16.mxu0 0
  %878 = vmatpush1.bf16.msra.mxu0 %v741
  %879 = vmatprep.subr.bf16.mxu0 0
  %880 = vmatpush1.bf16.msra.mxu0 %v742
  %881 = vmatprep.subr.bf16.mxu0 0
  %882 = vmatpush1.bf16.msra.mxu0 %v743
  %883 = vmatprep.subr.bf16.mxu0 0
  %884 = vmatpush1.bf16.msra.mxu0 %v744
  %885 = vmatprep.subr.bf16.mxu0 0
  %886 = vmatpush1.bf16.msra.mxu0 %v745
  %887 = vmatprep.subr.bf16.mxu0 0
  %888 = vmatpush1.bf16.msra.mxu0 %v746
  %889 = vmatprep.subr.bf16.mxu0 0
  %890 = vmatpush1.bf16.msra.mxu0 %v747
  %891 = vmatprep.subr.bf16.mxu0 0
  %892 = vmatpush1.bf16.msra.mxu0 %v748
  %893 = vmatprep.subr.bf16.mxu0 0
  %894 = vmatpush1.bf16.msra.mxu0 %v749
  %895 = vmatprep.subr.bf16.mxu0 0
  %896 = vmatpush1.bf16.msra.mxu0 %v750
  %897 = vmatprep.subr.bf16.mxu0 0
  %898 = vmatpush1.bf16.msra.mxu0 %v751
  %899 = vmatprep.subr.bf16.mxu0 0
  %900 = vmatpush1.bf16.msra.mxu0 %v752
  %901 = vmatprep.subr.bf16.mxu0 0
  %902 = vmatpush1.bf16.msra.mxu0 %v753
  %903 = vmatprep.mubr.bf16.mxu0 %v507
  %904 = vmatmul.mubr.bf16.gmra.mrb[0].mxu0 %v506
  %v905 = vpop.f32.mrb[0].mxu0
  %v906 = vadd.f32 %v184, %v905
  %v907 = vpop.f32.mrb[0].mxu0
  %v908 = vpop.f32.mrb[0].mxu0
  %v909 = vadd.f32 %v184, %v908
  %v910 = vpop.f32.mrb[0].mxu0
  %911 = vmatprep.mubr.bf16.mxu0 %v510
  %912 = vmatmul.mubr.bf16.gmra.mrb[0].mxu0 %v509
  %v913 = vpop.f32.mrb[0].mxu0
  %v914 = vadd.f32 %v184, %v913
  %v915 = vpop.f32.mrb[0].mxu0
  %v916 = vpop.f32.mrb[0].mxu0
  %v917 = vadd.f32 %v184, %v916
  %v918 = vpop.f32.mrb[0].mxu0
  %919 = vmatprep.mubr.bf16.mxu0 %v513
  %920 = vmatmul.mubr.bf16.gmra.mrb[0].mxu0 %v512
  %v921 = vpop.f32.mrb[0].mxu0
  %v922 = vadd.f32 %v184, %v921
  %v923 = vpop.f32.mrb[0].mxu0
  %v924 = vpop.f32.mrb[0].mxu0
  %v925 = vadd.f32 %v184, %v924
  %v926 = vpop.f32.mrb[0].mxu0
  %927 = vmatprep.mubr.bf16.mxu0 %v516
  %928 = vmatmul.mubr.bf16.gmra.mrb[0].mxu0 %v515
  %v929 = vpop.f32.mrb[0].mxu0
  %v930 = vadd.f32 %v184, %v929
  %v931 = vpop.f32.mrb[0].mxu0
  %v932 = vpop.f32.mrb[0].mxu0
  %v933 = vadd.f32 %v184, %v932
  %v934 = vpop.f32.mrb[0].mxu0
  %935 = vmatprep.mubr.bf16.mxu0 %v519
  %936 = vmatmul.mubr.bf16.gmra.mrb[0].mxu0 %v518
  %v937 = vpop.f32.mrb[0].mxu0
  %v938 = vadd.f32 %v184, %v937
  %v939 = vpop.f32.mrb[0].mxu0
  %v940 = vpop.f32.mrb[0].mxu0
  %v941 = vadd.f32 %v184, %v940
  %v942 = vpop.f32.mrb[0].mxu0
  %943 = vmatprep.mubr.bf16.mxu0 %v522
  %944 = vmatmul.mubr.bf16.gmra.mrb[0].mxu0 %v521
  %v945 = vpop.f32.mrb[0].mxu0
  %v946 = vadd.f32 %v184, %v945
  %v947 = vpop.f32.mrb[0].mxu0
  %v948 = vpop.f32.mrb[0].mxu0
  %v949 = vadd.f32 %v184, %v948
  %v950 = vpop.f32.mrb[0].mxu0
  %951 = vmatprep.mubr.bf16.mxu0 %v525
  %952 = vmatmul.mubr.bf16.gmra.mrb[0].mxu0 %v524
  %v953 = vpop.f32.mrb[0].mxu0
  %v954 = vadd.f32 %v184, %v953
  %v955 = vpop.f32.mrb[0].mxu0
  %v956 = vpop.f32.mrb[0].mxu0
  %v957 = vadd.f32 %v184, %v956
  %v958 = vpop.f32.mrb[0].mxu0
  %959 = vmatprep.mubr.bf16.mxu0 %v528
  %960 = vmatmul.mubr.bf16.gmra.mrb[0].mxu0 %v527
  %v961 = vpop.f32.mrb[0].mxu0
  %v962 = vadd.f32 %v184, %v961
  %v963 = vpop.f32.mrb[0].mxu0
  %v964 = vpop.f32.mrb[0].mxu0
  %v965 = vadd.f32 %v184, %v964
  %v966 = vpop.f32.mrb[0].mxu0
  %967 = vmatprep.mubr.bf16.mxu0 %v531
  %968 = vmatmul.mubr.bf16.gmra.mrb[0].mxu0 %v530
  %v969 = vpop.f32.mrb[0].mxu0
  %v970 = vadd.f32 %v184, %v969
  %v971 = vpop.f32.mrb[0].mxu0
  %v972 = vpop.f32.mrb[0].mxu0
  %v973 = vadd.f32 %v184, %v972
  %v974 = vpop.f32.mrb[0].mxu0
  %975 = vmatprep.mubr.bf16.mxu0 %v534
  %976 = vmatmul.mubr.bf16.gmra.mrb[0].mxu0 %v533
  %v977 = vpop.f32.mrb[0].mxu0
  %v978 = vadd.f32 %v184, %v977
  %v979 = vpop.f32.mrb[0].mxu0
  %v980 = vpop.f32.mrb[0].mxu0
  %v981 = vadd.f32 %v184, %v980
  %v982 = vpop.f32.mrb[0].mxu0
  %983 = vmatprep.mubr.bf16.mxu0 %v537
  %984 = vmatmul.mubr.bf16.gmra.mrb[0].mxu0 %v536
  %v985 = vpop.f32.mrb[0].mxu0
  %v986 = vadd.f32 %v184, %v985
  %v987 = vpop.f32.mrb[0].mxu0
  %v988 = vpop.f32.mrb[0].mxu0
  %v989 = vadd.f32 %v184, %v988
  %v990 = vpop.f32.mrb[0].mxu0
  %991 = vmatprep.mubr.bf16.mxu0 %v540
  %992 = vmatmul.mubr.bf16.gmra.mrb[0].mxu0 %v539
  %v993 = vpop.f32.mrb[0].mxu0
  %v994 = vadd.f32 %v184, %v993
  %v995 = vpop.f32.mrb[0].mxu0
  %v996 = vpop.f32.mrb[0].mxu0
  %v997 = vadd.f32 %v184, %v996
  %v998 = vpop.f32.mrb[0].mxu0
  %999 = vmatprep.mubr.bf16.mxu0 %v543
  %1000 = vmatmul.mubr.bf16.gmra.mrb[0].mxu0 %v542
  %v1001 = vpop.f32.mrb[0].mxu0
  %v1002 = vadd.f32 %v184, %v1001
  %v1003 = vpop.f32.mrb[0].mxu0
  %v1004 = vpop.f32.mrb[0].mxu0
  %v1005 = vadd.f32 %v184, %v1004
  %v1006 = vpop.f32.mrb[0].mxu0
  %1007 = vmatprep.mubr.bf16.mxu0 %v546
  %1008 = vmatmul.mubr.bf16.gmra.mrb[0].mxu0 %v545
  %v1009 = vpop.f32.mrb[0].mxu0
  %v1010 = vadd.f32 %v184, %v1009
  %v1011 = vpop.f32.mrb[0].mxu0
  %v1012 = vpop.f32.mrb[0].mxu0
  %v1013 = vadd.f32 %v184, %v1012
  %v1014 = vpop.f32.mrb[0].mxu0
  %1015 = vmatprep.mubr.bf16.mxu0 %v549
  %1016 = vmatmul.mubr.bf16.gmra.mrb[0].mxu0 %v548
  %v1017 = vpop.f32.mrb[0].mxu0
  %v1018 = vadd.f32 %v184, %v1017
  %v1019 = vpop.f32.mrb[0].mxu0
  %v1020 = vpop.f32.mrb[0].mxu0
  %v1021 = vadd.f32 %v184, %v1020
  %v1022 = vpop.f32.mrb[0].mxu0
  %1023 = vmatprep.mubr.bf16.mxu0 %v552
  %1024 = vmatmul.mubr.bf16.gmra.mrb[0].mxu0 %v551
  %v1025 = vpop.f32.mrb[0].mxu0
  %v1026 = vadd.f32 %v184, %v1025
  %v1027 = vpop.f32.mrb[0].mxu0
  %v1028 = vpop.f32.mrb[0].mxu0
  %v1029 = vadd.f32 %v184, %v1028
  %v1030 = vpop.f32.mrb[0].mxu0
  %1031 = vmatprep.mubr.bf16.mxu0 %v555
  %1032 = vmatmul.mubr.bf16.gmra.mrb[0].mxu0 %v554
  %v1033 = vpop.f32.mrb[0].mxu0
  %v1034 = vadd.f32 %v184, %v1033
  %v1035 = vpop.f32.mrb[0].mxu0
  %v1036 = vpop.f32.mrb[0].mxu0
  %v1037 = vadd.f32 %v184, %v1036
  %v1038 = vpop.f32.mrb[0].mxu0
  %1039 = vmatprep.mubr.bf16.mxu0 %v558
  %1040 = vmatmul.mubr.bf16.gmra.mrb[0].mxu0 %v557
  %v1041 = vpop.f32.mrb[0].mxu0
  %v1042 = vadd.f32 %v184, %v1041
  %v1043 = vpop.f32.mrb[0].mxu0
  %v1044 = vpop.f32.mrb[0].mxu0
  %v1045 = vadd.f32 %v184, %v1044
  %v1046 = vpop.f32.mrb[0].mxu0
  %1047 = vmatprep.mubr.bf16.mxu0 %v561
  %1048 = vmatmul.mubr.bf16.gmra.mrb[0].mxu0 %v560
  %v1049 = vpop.f32.mrb[0].mxu0
  %v1050 = vadd.f32 %v184, %v1049
  %v1051 = vpop.f32.mrb[0].mxu0
  %v1052 = vpop.f32.mrb[0].mxu0
  %v1053 = vadd.f32 %v184, %v1052
  %v1054 = vpop.f32.mrb[0].mxu0
  %1055 = vmatprep.mubr.bf16.mxu0 %v564
  %1056 = vmatmul.mubr.bf16.gmra.mrb[0].mxu0 %v563
  %v1057 = vpop.f32.mrb[0].mxu0
  %v1058 = vadd.f32 %v184, %v1057
  %v1059 = vpop.f32.mrb[0].mxu0
  %v1060 = vpop.f32.mrb[0].mxu0
  %v1061 = vadd.f32 %v184, %v1060
  %v1062 = vpop.f32.mrb[0].mxu0
  %1063 = vmatprep.mubr.bf16.mxu0 %v567
  %1064 = vmatmul.mubr.bf16.gmra.mrb[0].mxu0 %v566
  %v1065 = vpop.f32.mrb[0].mxu0
  %v1066 = vadd.f32 %v184, %v1065
  %v1067 = vpop.f32.mrb[0].mxu0
  %v1068 = vpop.f32.mrb[0].mxu0
  %v1069 = vadd.f32 %v184, %v1068
  %v1070 = vpop.f32.mrb[0].mxu0
  %1071 = vmatprep.mubr.bf16.mxu0 %v570
  %1072 = vmatmul.mubr.bf16.gmra.mrb[0].mxu0 %v569
  %v1073 = vpop.f32.mrb[0].mxu0
  %v1074 = vadd.f32 %v184, %v1073
  %v1075 = vpop.f32.mrb[0].mxu0
  %v1076 = vpop.f32.mrb[0].mxu0
  %v1077 = vadd.f32 %v184, %v1076
  %v1078 = vpop.f32.mrb[0].mxu0
  %1079 = vmatprep.mubr.bf16.mxu0 %v573
  %1080 = vmatmul.mubr.bf16.gmra.mrb[0].mxu0 %v572
  %v1081 = vpop.f32.mrb[0].mxu0
  %v1082 = vadd.f32 %v184, %v1081
  %v1083 = vpop.f32.mrb[0].mxu0
  %v1084 = vpop.f32.mrb[0].mxu0
  %v1085 = vadd.f32 %v184, %v1084
  %v1086 = vpop.f32.mrb[0].mxu0
  %1087 = vmatprep.mubr.bf16.mxu0 %v576
  %1088 = vmatmul.mubr.bf16.gmra.mrb[0].mxu0 %v575
  %v1089 = vpop.f32.mrb[0].mxu0
  %v1090 = vadd.f32 %v184, %v1089
  %v1091 = vpop.f32.mrb[0].mxu0
  %v1092 = vpop.f32.mrb[0].mxu0
  %v1093 = vadd.f32 %v184, %v1092
  %v1094 = vpop.f32.mrb[0].mxu0
  %1095 = vmatprep.mubr.bf16.mxu0 %v579
  %1096 = vmatmul.mubr.bf16.gmra.mrb[0].mxu0 %v578
  %v1097 = vpop.f32.mrb[0].mxu0
  %v1098 = vadd.f32 %v184, %v1097
  %v1099 = vpop.f32.mrb[0].mxu0
  %v1100 = vpop.f32.mrb[0].mxu0
  %v1101 = vadd.f32 %v184, %v1100
  %v1102 = vpop.f32.mrb[0].mxu0
  %1103 = vmatprep.mubr.bf16.mxu0 %v582
  %1104 = vmatmul.mubr.bf16.gmra.mrb[0].mxu0 %v581
  %v1105 = vpop.f32.mrb[0].mxu0
  %v1106 = vadd.f32 %v184, %v1105
  %v1107 = vpop.f32.mrb[0].mxu0
  %v1108 = vpop.f32.mrb[0].mxu0
  %v1109 = vadd.f32 %v184, %v1108
  %v1110 = vpop.f32.mrb[0].mxu0
  %1111 = vmatprep.mubr.bf16.mxu0 %v585
  %1112 = vmatmul.mubr.bf16.gmra.mrb[0].mxu0 %v584
  %v1113 = vpop.f32.mrb[0].mxu0
  %v1114 = vadd.f32 %v184, %v1113
  %v1115 = vpop.f32.mrb[0].mxu0
  %v1116 = vpop.f32.mrb[0].mxu0
  %v1117 = vadd.f32 %v184, %v1116
  %v1118 = vpop.f32.mrb[0].mxu0
  %1119 = vmatprep.mubr.bf16.mxu0 %v588
  %1120 = vmatmul.mubr.bf16.gmra.mrb[0].mxu0 %v587
  %v1121 = vpop.f32.mrb[0].mxu0
  %v1122 = vadd.f32 %v184, %v1121
  %v1123 = vpop.f32.mrb[0].mxu0
  %v1124 = vpop.f32.mrb[0].mxu0
  %v1125 = vadd.f32 %v184, %v1124
  %v1126 = vpop.f32.mrb[0].mxu0
  %1127 = vmatprep.mubr.bf16.mxu0 %v591
  %1128 = vmatmul.mubr.bf16.gmra.mrb[0].mxu0 %v590
  %v1129 = vpop.f32.mrb[0].mxu0
  %v1130 = vadd.f32 %v184, %v1129
  %v1131 = vpop.f32.mrb[0].mxu0
  %v1132 = vpop.f32.mrb[0].mxu0
  %v1133 = vadd.f32 %v184, %v1132
  %v1134 = vpop.f32.mrb[0].mxu0
  %1135 = vmatprep.mubr.bf16.mxu0 %v594
  %1136 = vmatmul.mubr.bf16.gmra.mrb[0].mxu0 %v593
  %v1137 = vpop.f32.mrb[0].mxu0
  %v1138 = vadd.f32 %v184, %v1137
  %v1139 = vpop.f32.mrb[0].mxu0
  %v1140 = vpop.f32.mrb[0].mxu0
  %v1141 = vadd.f32 %v184, %v1140
  %v1142 = vpop.f32.mrb[0].mxu0
  %1143 = vmatprep.mubr.bf16.mxu0 %v597
  %1144 = vmatmul.mubr.bf16.gmra.mrb[0].mxu0 %v596
  %v1145 = vpop.f32.mrb[0].mxu0
  %v1146 = vadd.f32 %v184, %v1145
  %v1147 = vpop.f32.mrb[0].mxu0
  %v1148 = vpop.f32.mrb[0].mxu0
  %v1149 = vadd.f32 %v184, %v1148
  %v1150 = vpop.f32.mrb[0].mxu0
  %1151 = vmatprep.mubr.bf16.mxu0 %v600
  %1152 = vmatmul.mubr.bf16.gmra.mrb[0].mxu0 %v599
  %v1153 = vpop.f32.mrb[0].mxu0
  %v1154 = vadd.f32 %v184, %v1153
  %v1155 = vpop.f32.mrb[0].mxu0
  %v1156 = vpop.f32.mrb[0].mxu0
  %v1157 = vadd.f32 %v184, %v1156
  %v1158 = vpop.f32.mrb[0].mxu0
  %1159 = vdwg.mxu0
  %1160 = vmatprep.subr.bf16.mxu0 0
  %1161 = vmatpush1.bf16.msra.mxu0 %v754
  %1162 = vmatprep.subr.bf16.mxu0 0
  %1163 = vmatpush1.bf16.msra.mxu0 %v755
  %1164 = vmatprep.subr.bf16.mxu0 0
  %1165 = vmatpush1.bf16.msra.mxu0 0
  %1166 = vmatprep.subr.bf16.mxu0 0
  %1167 = vmatpush1.bf16.msra.mxu0 0
  %1168 = vmatprep.subr.bf16.mxu0 0
  %1169 = vmatpush1.bf16.msra.mxu0 0
  %1170 = vmatprep.subr.bf16.mxu0 0
  %1171 = vmatpush1.bf16.msra.mxu0 0
  %1172 = vmatprep.subr.bf16.mxu0 0
  %1173 = vmatpush1.bf16.msra.mxu0 0
  %1174 = vmatprep.subr.bf16.mxu0 0
  %1175 = vmatpush1.bf16.msra.mxu0 0
  %1176 = vmatprep.subr.bf16.mxu0 0
  %1177 = vmatpush1.bf16.msra.mxu0 0
  %1178 = vmatprep.subr.bf16.mxu0 0
  %1179 = vmatpush1.bf16.msra.mxu0 0
  %1180 = vmatprep.subr.bf16.mxu0 0
  %1181 = vmatpush1.bf16.msra.mxu0 0
  %1182 = vmatprep.subr.bf16.mxu0 0
  %1183 = vmatpush1.bf16.msra.mxu0 0
  %1184 = vmatprep.subr.bf16.mxu0 0
  %1185 = vmatpush1.bf16.msra.mxu0 0
  %1186 = vmatprep.subr.bf16.mxu0 0
  %1187 = vmatpush1.bf16.msra.mxu0 0
  %1188 = vmatprep.subr.bf16.mxu0 0
  %1189 = vmatpush1.bf16.msra.mxu0 0
  %1190 = vmatprep.subr.bf16.mxu0 0
  %1191 = vmatpush1.bf16.msra.mxu0 0
  %1192 = vmatprep.mubr.bf16.mxu0 0
  %1193 = vmatmul.mubr.bf16.gmra.mrb[0].mxu0 %v776
  %v1194 = vpop.f32.mrb[0].mxu0
  %v1195 = vadd.f32 %v906, %v1194
  %v1196 = vpop.f32.mrb[0].mxu0
  %v1197 = vpop.f32.mrb[0].mxu0
  %v1198 = vadd.f32 %v909, %v1197
  %v1199 = vpop.f32.mrb[0].mxu0
  %1200 = vmatprep.mubr.bf16.mxu0 0
  %1201 = vmatmul.mubr.bf16.gmra.mrb[0].mxu0 %v779
  %v1202 = vpop.f32.mrb[0].mxu0
  %v1203 = vadd.f32 %v914, %v1202
  %v1204 = vpop.f32.mrb[0].mxu0
  %v1205 = vpop.f32.mrb[0].mxu0
  %v1206 = vadd.f32 %v917, %v1205
  %v1207 = vpop.f32.mrb[0].mxu0
  %1208 = vmatprep.mubr.bf16.mxu0 0
  %1209 = vmatmul.mubr.bf16.gmra.mrb[0].mxu0 %v782
  %v1210 = vpop.f32.mrb[0].mxu0
  %v1211 = vadd.f32 %v922, %v1210
  %v1212 = vpop.f32.mrb[0].mxu0
  %v1213 = vpop.f32.mrb[0].mxu0
  %v1214 = vadd.f32 %v925, %v1213
  %v1215 = vpop.f32.mrb[0].mxu0
  %1216 = vmatprep.mubr.bf16.mxu0 0
  %1217 = vmatmul.mubr.bf16.gmra.mrb[0].mxu0 %v785
  %v1218 = vpop.f32.mrb[0].mxu0
  %v1219 = vadd.f32 %v930, %v1218
  %v1220 = vpop.f32.mrb[0].mxu0
  %v1221 = vpop.f32.mrb[0].mxu0
  %v1222 = vadd.f32 %v933, %v1221
  %v1223 = vpop.f32.mrb[0].mxu0
  %1224 = vmatprep.mubr.bf16.mxu0 0
  %1225 = vmatmul.mubr.bf16.gmra.mrb[0].mxu0 %v788
  %v1226 = vpop.f32.mrb[0].mxu0
  %v1227 = vadd.f32 %v938, %v1226
  %v1228 = vpop.f32.mrb[0].mxu0
  %v1229 = vpop.f32.mrb[0].mxu0
  %v1230 = vadd.f32 %v941, %v1229
  %v1231 = vpop.f32.mrb[0].mxu0
  %1232 = vmatprep.mubr.bf16.mxu0 0
  %1233 = vmatmul.mubr.bf16.gmra.mrb[0].mxu0 %v791
  %v1234 = vpop.f32.mrb[0].mxu0
  %v1235 = vadd.f32 %v946, %v1234
  %v1236 = vpop.f32.mrb[0].mxu0
  %v1237 = vpop.f32.mrb[0].mxu0
  %v1238 = vadd.f32 %v949, %v1237
  %v1239 = vpop.f32.mrb[0].mxu0
  %1240 = vmatprep.mubr.bf16.mxu0 0
  %1241 = vmatmul.mubr.bf16.gmra.mrb[0].mxu0 %v794
  %v1242 = vpop.f32.mrb[0].mxu0
  %v1243 = vadd.f32 %v954, %v1242
  %v1244 = vpop.f32.mrb[0].mxu0
  %v1245 = vpop.f32.mrb[0].mxu0
  %v1246 = vadd.f32 %v957, %v1245
  %v1247 = vpop.f32.mrb[0].mxu0
  %1248 = vmatprep.mubr.bf16.mxu0 0
  %1249 = vmatmul.mubr.bf16.gmra.mrb[0].mxu0 %v797
  %v1250 = vpop.f32.mrb[0].mxu0
  %v1251 = vadd.f32 %v962, %v1250
  %v1252 = vpop.f32.mrb[0].mxu0
  %v1253 = vpop.f32.mrb[0].mxu0
  %v1254 = vadd.f32 %v965, %v1253
  %v1255 = vpop.f32.mrb[0].mxu0
  %1256 = vmatprep.mubr.bf16.mxu0 0
  %1257 = vmatmul.mubr.bf16.gmra.mrb[0].mxu0 %v800
  %v1258 = vpop.f32.mrb[0].mxu0
  %v1259 = vadd.f32 %v970, %v1258
  %v1260 = vpop.f32.mrb[0].mxu0
  %v1261 = vpop.f32.mrb[0].mxu0
  %v1262 = vadd.f32 %v973, %v1261
  %v1263 = vpop.f32.mrb[0].mxu0
  %1264 = vmatprep.mubr.bf16.mxu0 0
  %1265 = vmatmul.mubr.bf16.gmra.mrb[0].mxu0 %v803
  %v1266 = vpop.f32.mrb[0].mxu0
  %v1267 = vadd.f32 %v978, %v1266
  %v1268 = vpop.f32.mrb[0].mxu0
  %v1269 = vpop.f32.mrb[0].mxu0
  %v1270 = vadd.f32 %v981, %v1269
  %v1271 = vpop.f32.mrb[0].mxu0
  %1272 = vmatprep.mubr.bf16.mxu0 0
  %1273 = vmatmul.mubr.bf16.gmra.mrb[0].mxu0 %v806
  %v1274 = vpop.f32.mrb[0].mxu0
  %v1275 = vadd.f32 %v986, %v1274
  %v1276 = vpop.f32.mrb[0].mxu0
  %v1277 = vpop.f32.mrb[0].mxu0
  %v1278 = vadd.f32 %v989, %v1277
  %v1279 = vpop.f32.mrb[0].mxu0
  %1280 = vmatprep.mubr.bf16.mxu0 0
  %1281 = vmatmul.mubr.bf16.gmra.mrb[0].mxu0 %v809
  %v1282 = vpop.f32.mrb[0].mxu0
  %v1283 = vadd.f32 %v994, %v1282
  %v1284 = vpop.f32.mrb[0].mxu0
  %v1285 = vpop.f32.mrb[0].mxu0
  %v1286 = vadd.f32 %v997, %v1285
  %v1287 = vpop.f32.mrb[0].mxu0
  %1288 = vmatprep.mubr.bf16.mxu0 0
  %1289 = vmatmul.mubr.bf16.gmra.mrb[0].mxu0 %v812
  %v1290 = vpop.f32.mrb[0].mxu0
  %v1291 = vadd.f32 %v1002, %v1290
  %v1292 = vpop.f32.mrb[0].mxu0
  %v1293 = vpop.f32.mrb[0].mxu0
  %v1294 = vadd.f32 %v1005, %v1293
  %v1295 = vpop.f32.mrb[0].mxu0
  %1296 = vmatprep.mubr.bf16.mxu0 0
  %1297 = vmatmul.mubr.bf16.gmra.mrb[0].mxu0 %v815
  %v1298 = vpop.f32.mrb[0].mxu0
  %v1299 = vadd.f32 %v1010, %v1298
  %v1300 = vpop.f32.mrb[0].mxu0
  %v1301 = vpop.f32.mrb[0].mxu0
  %v1302 = vadd.f32 %v1013, %v1301
  %v1303 = vpop.f32.mrb[0].mxu0
  %1304 = vmatprep.mubr.bf16.mxu0 0
  %1305 = vmatmul.mubr.bf16.gmra.mrb[0].mxu0 %v818
  %v1306 = vpop.f32.mrb[0].mxu0
  %v1307 = vadd.f32 %v1018, %v1306
  %v1308 = vpop.f32.mrb[0].mxu0
  %v1309 = vpop.f32.mrb[0].mxu0
  %v1310 = vadd.f32 %v1021, %v1309
  %v1311 = vpop.f32.mrb[0].mxu0
  %1312 = vmatprep.mubr.bf16.mxu0 0
  %1313 = vmatmul.mubr.bf16.gmra.mrb[0].mxu0 %v821
  %v1314 = vpop.f32.mrb[0].mxu0
  %v1315 = vadd.f32 %v1026, %v1314
  %v1316 = vpop.f32.mrb[0].mxu0
  %v1317 = vpop.f32.mrb[0].mxu0
  %v1318 = vadd.f32 %v1029, %v1317
  %v1319 = vpop.f32.mrb[0].mxu0
  %1320 = vmatprep.mubr.bf16.mxu0 0
  %1321 = vmatmul.mubr.bf16.gmra.mrb[0].mxu0 %v824
  %v1322 = vpop.f32.mrb[0].mxu0
  %v1323 = vadd.f32 %v1034, %v1322
  %v1324 = vpop.f32.mrb[0].mxu0
  %v1325 = vpop.f32.mrb[0].mxu0
  %v1326 = vadd.f32 %v1037, %v1325
  %v1327 = vpop.f32.mrb[0].mxu0
  %1328 = vmatprep.mubr.bf16.mxu0 0
  %1329 = vmatmul.mubr.bf16.gmra.mrb[0].mxu0 %v827
  %v1330 = vpop.f32.mrb[0].mxu0
  %v1331 = vadd.f32 %v1042, %v1330
  %v1332 = vpop.f32.mrb[0].mxu0
  %v1333 = vpop.f32.mrb[0].mxu0
  %v1334 = vadd.f32 %v1045, %v1333
  %v1335 = vpop.f32.mrb[0].mxu0
  %1336 = vmatprep.mubr.bf16.mxu0 0
  %1337 = vmatmul.mubr.bf16.gmra.mrb[0].mxu0 %v830
  %v1338 = vpop.f32.mrb[0].mxu0
  %v1339 = vadd.f32 %v1050, %v1338
  %v1340 = vpop.f32.mrb[0].mxu0
  %v1341 = vpop.f32.mrb[0].mxu0
  %v1342 = vadd.f32 %v1053, %v1341
  %v1343 = vpop.f32.mrb[0].mxu0
  %1344 = vmatprep.mubr.bf16.mxu0 0
  %1345 = vmatmul.mubr.bf16.gmra.mrb[0].mxu0 %v833
  %v1346 = vpop.f32.mrb[0].mxu0
  %v1347 = vadd.f32 %v1058, %v1346
  %v1348 = vpop.f32.mrb[0].mxu0
  %v1349 = vpop.f32.mrb[0].mxu0
  %v1350 = vadd.f32 %v1061, %v1349
  %v1351 = vpop.f32.mrb[0].mxu0
  %1352 = vmatprep.mubr.bf16.mxu0 0
  %1353 = vmatmul.mubr.bf16.gmra.mrb[0].mxu0 %v836
  %v1354 = vpop.f32.mrb[0].mxu0
  %v1355 = vadd.f32 %v1066, %v1354
  %v1356 = vpop.f32.mrb[0].mxu0
  %v1357 = vpop.f32.mrb[0].mxu0
  %v1358 = vadd.f32 %v1069, %v1357
  %v1359 = vpop.f32.mrb[0].mxu0
  %1360 = vmatprep.mubr.bf16.mxu0 0
  %1361 = vmatmul.mubr.bf16.gmra.mrb[0].mxu0 %v839
  %v1362 = vpop.f32.mrb[0].mxu0
  %v1363 = vadd.f32 %v1074, %v1362
  %v1364 = vpop.f32.mrb[0].mxu0
  %v1365 = vpop.f32.mrb[0].mxu0
  %v1366 = vadd.f32 %v1077, %v1365
  %v1367 = vpop.f32.mrb[0].mxu0
  %1368 = vmatprep.mubr.bf16.mxu0 0
  %1369 = vmatmul.mubr.bf16.gmra.mrb[0].mxu0 %v842
  %v1370 = vpop.f32.mrb[0].mxu0
  %v1371 = vadd.f32 %v1082, %v1370
  %v1372 = vpop.f32.mrb[0].mxu0
  %v1373 = vpop.f32.mrb[0].mxu0
  %v1374 = vadd.f32 %v1085, %v1373
  %v1375 = vpop.f32.mrb[0].mxu0
  %1376 = vmatprep.mubr.bf16.mxu0 0
  %1377 = vmatmul.mubr.bf16.gmra.mrb[0].mxu0 %v845
  %v1378 = vpop.f32.mrb[0].mxu0
  %v1379 = vadd.f32 %v1090, %v1378
  %v1380 = vpop.f32.mrb[0].mxu0
  %v1381 = vpop.f32.mrb[0].mxu0
  %v1382 = vadd.f32 %v1093, %v1381
  %v1383 = vpop.f32.mrb[0].mxu0
  %1384 = vmatprep.mubr.bf16.mxu0 0
  %1385 = vmatmul.mubr.bf16.gmra.mrb[0].mxu0 %v848
  %v1386 = vpop.f32.mrb[0].mxu0
  %v1387 = vadd.f32 %v1098, %v1386
  %v1388 = vpop.f32.mrb[0].mxu0
  %v1389 = vpop.f32.mrb[0].mxu0
  %v1390 = vadd.f32 %v1101, %v1389
  %v1391 = vpop.f32.mrb[0].mxu0
  %1392 = vmatprep.mubr.bf16.mxu0 0
  %1393 = vmatmul.mubr.bf16.gmra.mrb[0].mxu0 %v851
  %v1394 = vpop.f32.mrb[0].mxu0
  %v1395 = vadd.f32 %v1106, %v1394
  %v1396 = vpop.f32.mrb[0].mxu0
  %v1397 = vpop.f32.mrb[0].mxu0
  %v1398 = vadd.f32 %v1109, %v1397
  %v1399 = vpop.f32.mrb[0].mxu0
  %1400 = vmatprep.mubr.bf16.mxu0 0
  %1401 = vmatmul.mubr.bf16.gmra.mrb[0].mxu0 %v854
  %v1402 = vpop.f32.mrb[0].mxu0
  %v1403 = vadd.f32 %v1114, %v1402
  %v1404 = vpop.f32.mrb[0].mxu0
  %v1405 = vpop.f32.mrb[0].mxu0
  %v1406 = vadd.f32 %v1117, %v1405
  %v1407 = vpop.f32.mrb[0].mxu0
  %1408 = vmatprep.mubr.bf16.mxu0 0
  %1409 = vmatmul.mubr.bf16.gmra.mrb[0].mxu0 %v857
  %v1410 = vpop.f32.mrb[0].mxu0
  %v1411 = vadd.f32 %v1122, %v1410
  %v1412 = vpop.f32.mrb[0].mxu0
  %v1413 = vpop.f32.mrb[0].mxu0
  %v1414 = vadd.f32 %v1125, %v1413
  %v1415 = vpop.f32.mrb[0].mxu0
  %1416 = vmatprep.mubr.bf16.mxu0 0
  %1417 = vmatmul.mubr.bf16.gmra.mrb[0].mxu0 %v860
  %v1418 = vpop.f32.mrb[0].mxu0
  %v1419 = vadd.f32 %v1130, %v1418
  %v1420 = vpop.f32.mrb[0].mxu0
  %v1421 = vpop.f32.mrb[0].mxu0
  %v1422 = vadd.f32 %v1133, %v1421
  %v1423 = vpop.f32.mrb[0].mxu0
  %1424 = vmatprep.mubr.bf16.mxu0 0
  %1425 = vmatmul.mubr.bf16.gmra.mrb[0].mxu0 %v863
  %v1426 = vpop.f32.mrb[0].mxu0
  %v1427 = vadd.f32 %v1138, %v1426
  %v1428 = vpop.f32.mrb[0].mxu0
  %v1429 = vpop.f32.mrb[0].mxu0
  %v1430 = vadd.f32 %v1141, %v1429
  %v1431 = vpop.f32.mrb[0].mxu0
  %1432 = vmatprep.mubr.bf16.mxu0 0
  %1433 = vmatmul.mubr.bf16.gmra.mrb[0].mxu0 %v866
  %v1434 = vpop.f32.mrb[0].mxu0
  %v1435 = vadd.f32 %v1146, %v1434
  %v1436 = vpop.f32.mrb[0].mxu0
  %v1437 = vpop.f32.mrb[0].mxu0
  %v1438 = vadd.f32 %v1149, %v1437
  %v1439 = vpop.f32.mrb[0].mxu0
  %1440 = vmatprep.mubr.bf16.mxu0 0
  %1441 = vmatmul.mubr.bf16.gmra.mrb[0].mxu0 %v869
  %v1442 = vpop.f32.mrb[0].mxu0
  %v1443 = vadd.f32 %v1154, %v1442
  %v1444 = vpop.f32.mrb[0].mxu0
  %v1445 = vpop.f32.mrb[0].mxu0
  %v1446 = vadd.f32 %v1157, %v1445
  %v1447 = vpop.f32.mrb[0].mxu0
  %1448 = vdwg.mxu0
  %v1449 = vmax.f32 %v1195, 0.0
  %v1450 = vmax.f32 %v1198, 0.0
  %v1451 = vmax.f32 %v1203, 0.0
  %v1452 = vmax.f32 %v1206, 0.0
  %v1453 = vmax.f32 %v1211, 0.0
  %v1454 = vmax.f32 %v1214, 0.0
  %v1455 = vmax.f32 %v1219, 0.0
  %v1456 = vmax.f32 %v1222, 0.0
  %v1457 = vmax.f32 %v1227, 0.0
  %v1458 = vmax.f32 %v1230, 0.0
  %v1459 = vmax.f32 %v1235, 0.0
  %v1460 = vmax.f32 %v1238, 0.0
  %v1461 = vmax.f32 %v1243, 0.0
  %v1462 = vmax.f32 %v1246, 0.0
  %v1463 = vmax.f32 %v1251, 0.0
  %v1464 = vmax.f32 %v1254, 0.0
  %v1465 = vmax.f32 %v1259, 0.0
  %v1466 = vmax.f32 %v1262, 0.0
  %v1467 = vmax.f32 %v1267, 0.0
  %v1468 = vmax.f32 %v1270, 0.0
  %v1469 = vmax.f32 %v1275, 0.0
  %v1470 = vmax.f32 %v1278, 0.0
  %v1471 = vmax.f32 %v1283, 0.0
  %v1472 = vmax.f32 %v1286, 0.0
  %v1473 = vmax.f32 %v1291, 0.0
  %v1474 = vmax.f32 %v1294, 0.0
  %v1475 = vmax.f32 %v1299, 0.0
  %v1476 = vmax.f32 %v1302, 0.0
  %v1477 = vmax.f32 %v1307, 0.0
  %v1478 = vmax.f32 %v1310, 0.0
  %v1479 = vmax.f32 %v1315, 0.0
  %v1480 = vmax.f32 %v1318, 0.0
  %v1481 = vmax.f32 %v1323, 0.0
  %v1482 = vmax.f32 %v1326, 0.0
  %v1483 = vmax.f32 %v1331, 0.0
  %v1484 = vmax.f32 %v1334, 0.0
  %v1485 = vmax.f32 %v1339, 0.0
  %v1486 = vmax.f32 %v1342, 0.0
  %v1487 = vmax.f32 %v1347, 0.0
  %v1488 = vmax.f32 %v1350, 0.0
  %v1489 = vmax.f32 %v1355, 0.0
  %v1490 = vmax.f32 %v1358, 0.0
  %v1491 = vmax.f32 %v1363, 0.0
  %v1492 = vmax.f32 %v1366, 0.0
  %v1493 = vmax.f32 %v1371, 0.0
  %v1494 = vmax.f32 %v1374, 0.0
  %v1495 = vmax.f32 %v1379, 0.0
  %v1496 = vmax.f32 %v1382, 0.0
  %v1497 = vmax.f32 %v1387, 0.0
  %v1498 = vmax.f32 %v1390, 0.0
  %v1499 = vmax.f32 %v1395, 0.0
  %v1500 = vmax.f32 %v1398, 0.0
  %v1501 = vmax.f32 %v1403, 0.0
  %v1502 = vmax.f32 %v1406, 0.0
  %v1503 = vmax.f32 %v1411, 0.0
  %v1504 = vmax.f32 %v1414, 0.0
  %v1505 = vmax.f32 %v1419, 0.0
  %v1506 = vmax.f32 %v1422, 0.0
  %v1507 = vmax.f32 %v1427, 0.0
  %v1508 = vmax.f32 %v1430, 0.0
  %v1509 = vmax.f32 %v1435, 0.0
  %v1510 = vmax.f32 %v1438, 0.0
  %v1511 = vmax.f32 %v1443, 0.0
  %v1512 = vmax.f32 %v1446, 0.0
  %v1513 = vmax.f32 %v1449, %v1465
  %v1514 = vmax.f32 %v1450, %v1466
  %v1515 = vmax.f32 %v1451, %v1467
  %v1516 = vmax.f32 %v1452, %v1468
  %v1517 = vmax.f32 %v1453, %v1469
  %v1518 = vmax.f32 %v1454, %v1470
  %v1519 = vmax.f32 %v1455, %v1471
  %v1520 = vmax.f32 %v1456, %v1472
  %v1521 = vmax.f32 %v1457, %v1473
  %v1522 = vmax.f32 %v1458, %v1474
  %v1523 = vmax.f32 %v1459, %v1475
  %v1524 = vmax.f32 %v1460, %v1476
  %v1525 = vmax.f32 %v1461, %v1477
  %v1526 = vmax.f32 %v1462, %v1478
  %v1527 = vmax.f32 %v1463, %v1479
  %v1528 = vmax.f32 %v1464, %v1480
  %v1529 = vmax.f32 %v1481, %v1497
  %v1530 = vmax.f32 %v1482, %v1498
  %v1531 = vmax.f32 %v1483, %v1499
  %v1532 = vmax.f32 %v1484, %v1500
  %v1533 = vmax.f32 %v1485, %v1501
  %v1534 = vmax.f32 %v1486, %v1502
  %v1535 = vmax.f32 %v1487, %v1503
  %v1536 = vmax.f32 %v1488, %v1504
  %v1537 = vmax.f32 %v1489, %v1505
  %v1538 = vmax.f32 %v1490, %v1506
  %v1539 = vmax.f32 %v1491, %v1507
  %v1540 = vmax.f32 %v1492, %v1508
  %v1541 = vmax.f32 %v1493, %v1509
  %v1542 = vmax.f32 %v1494, %v1510
  %v1543 = vmax.f32 %v1495, %v1511
  %v1544 = vmax.f32 %v1496, %v1512
  %v1545 = vmax.f32 %v1513, %v1529
  %v1546 = vmax.f32 %v1514, %v1530
  %v1547 = vmax.f32 %v1515, %v1531
  %v1548 = vmax.f32 %v1516, %v1532
  %v1549 = vmax.f32 %v1517, %v1533
  %v1550 = vmax.f32 %v1518, %v1534
  %v1551 = vmax.f32 %v1519, %v1535
  %v1552 = vmax.f32 %v1520, %v1536
  %v1553 = vmax.f32 %v1521, %v1537
  %v1554 = vmax.f32 %v1522, %v1538
  %v1555 = vmax.f32 %v1523, %v1539
  %v1556 = vmax.f32 %v1524, %v1540
  %v1557 = vmax.f32 %v1525, %v1541
  %v1558 = vmax.f32 %v1526, %v1542
  %v1559 = vmax.f32 %v1527, %v1543
  %v1560 = vmax.f32 %v1528, %v1544
  %1561 = vst.msk [vmem:[%s3] sm:$0xff] %vm774, %v1545
  %1562 = vst.msk [vmem:[%s3 + $0x8] sm:$0xff] %vm774, %v1546
  %1563 = vst.msk [vmem:[%s3 + $0x10] sm:$0xff] %vm774, %v1547
  %1564 = vst.msk [vmem:[%s3 + $0x18] sm:$0xff] %vm774, %v1548
  %1565 = vst.msk [vmem:[%s3 + $0x20] sm:$0xff] %vm774, %v1549
  %1566 = vst.msk [vmem:[%s3 + $0x28] sm:$0xff] %vm774, %v1550
  %1567 = vst.msk [vmem:[%s3 + $0x30] sm:$0xff] %vm774, %v1551
  %1568 = vst.msk [vmem:[%s3 + $0x38] sm:$0xff] %vm774, %v1552
  %1569 = vst.msk [vmem:[%s3 + $0x40] sm:$0xff] %vm774, %v1553
  %1570 = vst.msk [vmem:[%s3 + $0x48] sm:$0xff] %vm774, %v1554
  %1571 = vst.msk [vmem:[%s3 + $0x50] sm:$0xff] %vm774, %v1555
  %1572 = vst.msk [vmem:[%s3 + $0x58] sm:$0xff] %vm774, %v1556
  %1573 = vst.msk [vmem:[%s3 + $0x60] sm:$0xff] %vm774, %v1557
  %1574 = vst.msk [vmem:[%s3 + $0x68] sm:$0xff] %vm774, %v1558
  %1575 = vst.msk [vmem:[%s3 + $0x70] sm:$0xff] %vm774, %v1559
  %1576 = vst.msk [vmem:[%s3 + $0x78] sm:$0xff] %vm774, %v1560
  // Predicated region
  $region14: #{ecg_listener_forward.5} parent=0 // pred_check
    _
  $region15: #{ecg_listener_forward.5} parent=0 // pred_check_branch
    %1578 = sbr.rel (0) target = $region17
  $region16: #{ecg_listener_forward.5} parent=0 // pred_region
    _
  $region17: #{ecg_listener_forward.5} parent=0 // pred_fallthru
    _
  // Predicated region
  $region18: #{ecg_listener_forward.5} parent=0 // pred_check
    _
  $region19: #{ecg_listener_forward.5} parent=0 // pred_check_branch
    %1580 = sbr.rel (0) target = $region21
  $region20: #{ecg_listener_forward.5} parent=0 // pred_region
    _
  $region21: #{ecg_listener_forward.5} parent=0 // pred_fallthru
    _

// kernel: ecg_listener_forward.6
$region0: #{ecg_listener_forward.6}
  #allocation0 [shape = 'u32[]', space=smem, size = 0x4, offset = 0x4, fixed_abs, tag = 'smem constant byte address 0x4 - core index']
  #allocation1 [shape = 'u32[144,128]{1,0:T(1,128)}', space=vmem, size = 0x12000, scoped, tag = 'internal scratch']
  %s0 = inlined_call_operand.vmem [shape: bf16[128,288], index: 0, kind: input, shape index: {}]
  %s1 = inlined_call_operand.vmem [shape: bf16[288,32], index: 1, kind: input, shape index: {}]
  %s2 = inlined_call_operand.vmem [shape: f32[1,32], index: 2, kind: input, shape index: {}]
  %s3 = inlined_call_operand.vmem [shape: f32[32,32], index: 3, kind: output, shape index: {}]
  %s4 = sld [smem:[#allocation0]]
  $region22: #{ecg_listener_forward.6} parent=0
    _
  %s6 = ssub.s32 1, %s4
  %s7 = scalar_select 0, %s6, %s4
  // Predicated region
  $region2: #{ecg_listener_forward.6} parent=0 // pred_check
    _
  $region3: #{ecg_listener_forward.6} parent=0 // pred_check_branch
    %9 = sbr.rel (0) target = $region5
  $region4: #{ecg_listener_forward.6} parent=0 // pred_region
    _
  $region5: #{ecg_listener_forward.6} parent=0 // pred_fallthru
    _
  // Predicated region
  $region6: #{ecg_listener_forward.6} parent=0 // pred_check
    _
  $region7: #{ecg_listener_forward.6} parent=0 // pred_check_branch
    %11 = sbr.rel (0) target = $region9
  $region8: #{ecg_listener_forward.6} parent=0 // pred_region
    _
  $region9: #{ecg_listener_forward.6} parent=0 // pred_fallthru
    _
  // Predicated region
  $region10: #{ecg_listener_forward.6} parent=0 // pred_check
    _
  $region11: #{ecg_listener_forward.6} parent=0 // pred_check_branch
    %13 = sbr.rel (0) target = $region13
  $region12: #{ecg_listener_forward.6} parent=0 // pred_region
    _
  $region13: #{ecg_listener_forward.6} parent=0 // pred_fallthru
    _
  %v15 = vld [vmem:[%s0] sm:$0xff]
  %v16 = vld [vmem:[%s0 + $0x8] sm:$0xf]
  %v17 = vld [vmem:[%s0 + $0xc] sm:$0xff]
  %v18 = vld [vmem:[%s0 + $0x14] sm:$0xf]
  %v19 = vld [vmem:[%s0 + $0x18] sm:$0xff]
  %v20 = vld [vmem:[%s0 + $0x20] sm:$0xf]
  %v21 = vld [vmem:[%s0 + $0x24] sm:$0xff]
  %v22 = vld [vmem:[%s0 + $0x2c] sm:$0xf]
  %v23 = vld [vmem:[%s0 + $0x30] sm:$0xff]
  %v24 = vld [vmem:[%s0 + $0x38] sm:$0xf]
  %v25 = vld [vmem:[%s0 + $0x3c] sm:$0xff]
  %v26 = vld [vmem:[%s0 + $0x44] sm:$0xf]
  %v27 = vld [vmem:[%s0 + $0x48] sm:$0xff]
  %v28 = vld [vmem:[%s0 + $0x50] sm:$0xf]
  %v29 = vld [vmem:[%s0 + $0x54] sm:$0xff]
  %v30 = vld [vmem:[%s0 + $0x5c] sm:$0xf]
  %v31 = vld [vmem:[%s0 + $0x60] sm:$0xff]
  %v32 = vld [vmem:[%s0 + $0x68] sm:$0xf]
  %v33 = vld [vmem:[%s0 + $0x6c] sm:$0xff]
  %v34 = vld [vmem:[%s0 + $0x74] sm:$0xf]
  %v35 = vld [vmem:[%s0 + $0x78] sm:$0xff]
  %v36 = vld [vmem:[%s0 + $0x80] sm:$0xf]
  %v37 = vld [vmem:[%s0 + $0x84] sm:$0xff]
  %v38 = vld [vmem:[%s0 + $0x8c] sm:$0xf]
  %v39 = vld [vmem:[%s0 + $0x90] sm:$0xff]
  %v40 = vld [vmem:[%s0 + $0x98] sm:$0xf]
  %v41 = vld [vmem:[%s0 + $0x9c] sm:$0xff]
  %v42 = vld [vmem:[%s0 + $0xa4] sm:$0xf]
  %v43 = vld [vmem:[%s0 + $0xa8] sm:$0xff]
  %v44 = vld [vmem:[%s0 + $0xb0] sm:$0xf]
  %v45 = vld [vmem:[%s0 + $0xb4] sm:$0xff]
  %v46 = vld [vmem:[%s0 + $0xbc] sm:$0xf]
  %v47 = vld [vmem:[%s1] sm:$0xf]
  %v48 = vld [vmem:[%s1 + $0x4] sm:$0xf]
  %v49 = vld [vmem:[%s1 + $0x8] sm:$0xf]
  %v50 = vld [vmem:[%s1 + $0xc] sm:$0xf]
  %v51 = vld [vmem:[%s1 + $0x10] sm:$0xf]
  %v52 = vld [vmem:[%s1 + $0x14] sm:$0xf]
  %v53 = vld [vmem:[%s1 + $0x18] sm:$0xf]
  %v54 = vld [vmem:[%s1 + $0x1c] sm:$0xf]
  %v55 = vld [vmem:[%s1 + $0x20] sm:$0xf]
  %v56 = vld [vmem:[%s1 + $0x24] sm:$0xf]
  %v57 = vld [vmem:[%s1 + $0x28] sm:$0xf]
  %v58 = vld [vmem:[%s1 + $0x2c] sm:$0xf]
  %v59 = vld [vmem:[%s1 + $0x30] sm:$0xf]
  %v60 = vld [vmem:[%s1 + $0x34] sm:$0xf]
  %v61 = vld [vmem:[%s1 + $0x38] sm:$0xf]
  %v62 = vld [vmem:[%s1 + $0x3c] sm:$0xf]
  %v63 = vld [vmem:[%s1 + $0x40] sm:$0xf]
  %v64 = vld [vmem:[%s1 + $0x44] sm:$0xf]
  %v65 = vld [vmem:[%s1 + $0x48] sm:$0xf]
  %v66 = vld [vmem:[%s1 + $0x4c] sm:$0xf]
  %v67 = vld [vmem:[%s1 + $0x50] sm:$0xf]
  %v68 = vld [vmem:[%s1 + $0x54] sm:$0xf]
  %v69 = vld [vmem:[%s1 + $0x58] sm:$0xf]
  %v70 = vld [vmem:[%s1 + $0x5c] sm:$0xf]
  %v71 = vld [vmem:[%s1 + $0x60] sm:$0xf]
  %v72 = vld [vmem:[%s1 + $0x64] sm:$0xf]
  %v73 = vld [vmem:[%s1 + $0x68] sm:$0xf]
  %v74 = vld [vmem:[%s1 + $0x6c] sm:$0xf]
  %v75 = vld [vmem:[%s1 + $0x70] sm:$0xf]
  %v76 = vld [vmem:[%s1 + $0x74] sm:$0xf]
  %v77 = vld [vmem:[%s1 + $0x78] sm:$0xf]
  %v78 = vld [vmem:[%s1 + $0x7c] sm:$0xf]
  %v79 = vld [vmem:[%s1 + $0x80] sm:$0xf]
  %v80 = vld [vmem:[%s1 + $0x84] sm:$0xf]
  %v81 = vld [vmem:[%s1 + $0x88] sm:$0xf]
  %v82 = vld [vmem:[%s1 + $0x8c] sm:$0xf]
  %v83 = vld [vmem:[%s2] sm:$0x1]
  %v85 = vlaneseq
  %v86 = vshrl.u32 %v85, 7
  %v87 = vsub.s32 0, %v86
  %v88 = vrot.slane %v83, %v87
  %v122 = vunpack.c.l.b16 %v15
  %v123 = vunpack.c.h.b16 %v15
  %v124 = vunpack.c.l.b16 %v16
  %v125 = vunpack.c.l.b16 %v17
  %v126 = vunpack.c.h.b16 %v17
  %v127 = vunpack.c.l.b16 %v18
  %v128 = vunpack.c.l.b16 %v19
  %v129 = vunpack.c.h.b16 %v19
  %v130 = vunpack.c.l.b16 %v20
  %v131 = vunpack.c.l.b16 %v21
  %v132 = vunpack.c.h.b16 %v21
  %v133 = vunpack.c.l.b16 %v22
  %v134 = vunpack.c.l.b16 %v23
  %v135 = vunpack.c.h.b16 %v23
  %v136 = vunpack.c.l.b16 %v24
  %v137 = vunpack.c.l.b16 %v25
  %v138 = vunpack.c.h.b16 %v25
  %v139 = vunpack.c.l.b16 %v26
  %v140 = vunpack.c.l.b16 %v27
  %v141 = vunpack.c.h.b16 %v27
  %v142 = vunpack.c.l.b16 %v28
  %v143 = vunpack.c.l.b16 %v29
  %v144 = vunpack.c.h.b16 %v29
  %v145 = vunpack.c.l.b16 %v30
  %v146 = vunpack.c.l.b16 %v31
  %v147 = vunpack.c.h.b16 %v31
  %v148 = vunpack.c.l.b16 %v32
  %v149 = vunpack.c.l.b16 %v33
  %v150 = vunpack.c.h.b16 %v33
  %v151 = vunpack.c.l.b16 %v34
  %v152 = vunpack.c.l.b16 %v35
  %v153 = vunpack.c.h.b16 %v35
  %v154 = vunpack.c.l.b16 %v36
  %v155 = vunpack.c.l.b16 %v37
  %v156 = vunpack.c.h.b16 %v37
  %v157 = vunpack.c.l.b16 %v38
  %v158 = vunpack.c.l.b16 %v39
  %v159 = vunpack.c.h.b16 %v39
  %v160 = vunpack.c.l.b16 %v40
  %v161 = vunpack.c.l.b16 %v41
  %v162 = vunpack.c.h.b16 %v41
  %v163 = vunpack.c.l.b16 %v42
  %v164 = vunpack.c.l.b16 %v43
  %v165 = vunpack.c.h.b16 %v43
  %v166 = vunpack.c.l.b16 %v44
  %v167 = vunpack.c.l.b16 %v45
  %v168 = vunpack.c.h.b16 %v45
  %v169 = vunpack.c.l.b16 %v46
  %v170 = vpack.c.b16 %v125, %v122
  %v171 = vpack.c.b16 %v126, %v123
  %v172 = vpack.c.b16 %v127, %v124
  %v173 = vpack.c.b16 %v131, %v128
  %v174 = vpack.c.b16 %v132, %v129
  %v175 = vpack.c.b16 %v133, %v130
  %v176 = vpack.c.b16 %v137, %v134
  %v177 = vpack.c.b16 %v138, %v135
  %v178 = vpack.c.b16 %v139, %v136
  %v179 = vpack.c.b16 %v143, %v140
  %v180 = vpack.c.b16 %v144, %v141
  %v181 = vpack.c.b16 %v145, %v142
  %v182 = vpack.c.b16 %v149, %v146
  %v183 = vpack.c.b16 %v150, %v147
  %v184 = vpack.c.b16 %v151, %v148
  %v185 = vpack.c.b16 %v155, %v152
  %v186 = vpack.c.b16 %v156, %v153
  %v187 = vpack.c.b16 %v157, %v154
  %v188 = vpack.c.b16 %v161, %v158
  %v189 = vpack.c.b16 %v162, %v159
  %v190 = vpack.c.b16 %v163, %v160
  %v191 = vpack.c.b16 %v167, %v164
  %v192 = vpack.c.b16 %v168, %v165
  %v193 = vpack.c.b16 %v169, %v166
  %v246 = vunpack.c.l.b16 %v47
  %v247 = vunpack.c.l.b16 %v48
  %v248 = vunpack.c.l.b16 %v49
  %v249 = vunpack.c.l.b16 %v50
  %v250 = vunpack.c.l.b16 %v51
  %v251 = vunpack.c.l.b16 %v52
  %v252 = vunpack.c.l.b16 %v53
  %v253 = vunpack.c.l.b16 %v54
  %v254 = vunpack.c.l.b16 %v55
  %v255 = vunpack.c.l.b16 %v56
  %v256 = vunpack.c.l.b16 %v57
  %v257 = vunpack.c.l.b16 %v58
  %v258 = vunpack.c.l.b16 %v59
  %v259 = vunpack.c.l.b16 %v60
  %v260 = vunpack.c.l.b16 %v61
  %v261 = vunpack.c.l.b16 %v62
  %v262 = vunpack.c.l.b16 %v63
  %v263 = vunpack.c.l.b16 %v64
  %v264 = vunpack.c.l.b16 %v65
  %v265 = vunpack.c.l.b16 %v66
  %v266 = vunpack.c.l.b16 %v67
  %v267 = vunpack.c.l.b16 %v68
  %v268 = vunpack.c.l.b16 %v69
  %v269 = vunpack.c.l.b16 %v70
  %v270 = vunpack.c.l.b16 %v71
  %v271 = vunpack.c.l.b16 %v72
  %v272 = vunpack.c.l.b16 %v73
  %v273 = vunpack.c.l.b16 %v74
  %v274 = vunpack.c.l.b16 %v75
  %v275 = vunpack.c.l.b16 %v76
  %v276 = vunpack.c.l.b16 %v77
  %v277 = vunpack.c.l.b16 %v78
  %v278 = vunpack.c.l.b16 %v79
  %v279 = vunpack.c.l.b16 %v80
  %v280 = vunpack.c.l.b16 %v81
  %v281 = vunpack.c.l.b16 %v82
  %v282 = vpack.c.b16 %v247, %v246
  %v283 = vpack.c.b16 %v249, %v248
  %v284 = vpack.c.b16 %v251, %v250
  %v285 = vpack.c.b16 %v253, %v252
  %v286 = vpack.c.b16 %v255, %v254
  %v287 = vpack.c.b16 %v257, %v256
  %v288 = vpack.c.b16 %v259, %v258
  %v289 = vpack.c.b16 %v261, %v260
  %v290 = vpack.c.b16 %v263, %v262
  %v291 = vpack.c.b16 %v265, %v264
  %v292 = vpack.c.b16 %v267, %v266
  %v293 = vpack.c.b16 %v269, %v268
  %v294 = vpack.c.b16 %v271, %v270
  %v295 = vpack.c.b16 %v273, %v272
  %v296 = vpack.c.b16 %v275, %v274
  %v297 = vpack.c.b16 %v277, %v276
  %v298 = vpack.c.b16 %v279, %v278
  %v299 = vpack.c.b16 %v281, %v280
  %vm318 = vcmask 261120
  %v320 = vsel %vm318, %v172, 0
  %v323 = vsel %vm318, %v175, 0
  %v326 = vsel %vm318, %v178, 0
  %v329 = vsel %vm318, %v181, 0
  %v332 = vsel %vm318, %v184, 0
  %v335 = vsel %vm318, %v187, 0
  %v338 = vsel %vm318, %v190, 0
  %v341 = vsel %vm318, %v193, 0
  %343 = vmatprep.subr.bf16.mxu0 0
  %344 = vmatpush1.bf16.msra.mxu0 %v282
  %345 = vmatprep.subr.bf16.mxu0 0
  %346 = vmatpush1.bf16.msra.mxu0 %v283
  %347 = vmatprep.subr.bf16.mxu0 0
  %348 = vmatpush1.bf16.msra.mxu0 %v284
  %349 = vmatprep.subr.bf16.mxu0 0
  %350 = vmatpush1.bf16.msra.mxu0 %v285
  %351 = vmatprep.subr.bf16.mxu0 0
  %352 = vmatpush1.bf16.msra.mxu0 %v286
  %353 = vmatprep.subr.bf16.mxu0 0
  %354 = vmatpush1.bf16.msra.mxu0 %v287
  %355 = vmatprep.subr.bf16.mxu0 0
  %356 = vmatpush1.bf16.msra.mxu0 %v288
  %357 = vmatprep.subr.bf16.mxu0 0
  %358 = vmatpush1.bf16.msra.mxu0 %v289
  %359 = vmatprep.subr.bf16.mxu0 0
  %360 = vmatpush1.bf16.msra.mxu0 %v290
  %361 = vmatprep.subr.bf16.mxu0 0
  %362 = vmatpush1.bf16.msra.mxu0 %v291
  %363 = vmatprep.subr.bf16.mxu0 0
  %364 = vmatpush1.bf16.msra.mxu0 %v292
  %365 = vmatprep.subr.bf16.mxu0 0
  %366 = vmatpush1.bf16.msra.mxu0 %v293
  %367 = vmatprep.subr.bf16.mxu0 0
  %368 = vmatpush1.bf16.msra.mxu0 %v294
  %369 = vmatprep.subr.bf16.mxu0 0
  %370 = vmatpush1.bf16.msra.mxu0 %v295
  %371 = vmatprep.subr.bf16.mxu0 0
  %372 = vmatpush1.bf16.msra.mxu0 %v296
  %373 = vmatprep.subr.bf16.mxu0 0
  %374 = vmatpush1.bf16.msra.mxu0 %v297
  %375 = vmatprep.mubr.bf16.mxu0 %v171
  %376 = vmatmul.mubr.bf16.gmra.mrb[0].mxu0 %v170
  %v377 = vpop.f32.mrb[0].mxu0
  %v378 = vadd.f32 %v88, %v377
  %v379 = vpop.f32.mrb[0].mxu0
  %v380 = vpop.f32.mrb[0].mxu0
  %v381 = vadd.f32 %v88, %v380
  %v382 = vpop.f32.mrb[0].mxu0
  %383 = vmatprep.mubr.bf16.mxu0 %v174
  %384 = vmatmul.mubr.bf16.gmra.mrb[0].mxu0 %v173
  %v385 = vpop.f32.mrb[0].mxu0
  %v386 = vadd.f32 %v88, %v385
  %v387 = vpop.f32.mrb[0].mxu0
  %v388 = vpop.f32.mrb[0].mxu0
  %v389 = vadd.f32 %v88, %v388
  %v390 = vpop.f32.mrb[0].mxu0
  %391 = vmatprep.mubr.bf16.mxu0 %v177
  %392 = vmatmul.mubr.bf16.gmra.mrb[0].mxu0 %v176
  %v393 = vpop.f32.mrb[0].mxu0
  %v394 = vadd.f32 %v88, %v393
  %v395 = vpop.f32.mrb[0].mxu0
  %v396 = vpop.f32.mrb[0].mxu0
  %v397 = vadd.f32 %v88, %v396
  %v398 = vpop.f32.mrb[0].mxu0
  %399 = vmatprep.mubr.bf16.mxu0 %v180
  %400 = vmatmul.mubr.bf16.gmra.mrb[0].mxu0 %v179
  %v401 = vpop.f32.mrb[0].mxu0
  %v402 = vadd.f32 %v88, %v401
  %v403 = vpop.f32.mrb[0].mxu0
  %v404 = vpop.f32.mrb[0].mxu0
  %v405 = vadd.f32 %v88, %v404
  %v406 = vpop.f32.mrb[0].mxu0
  %407 = vmatprep.mubr.bf16.mxu0 %v183
  %408 = vmatmul.mubr.bf16.gmra.mrb[0].mxu0 %v182
  %v409 = vpop.f32.mrb[0].mxu0
  %v410 = vadd.f32 %v88, %v409
  %v411 = vpop.f32.mrb[0].mxu0
  %v412 = vpop.f32.mrb[0].mxu0
  %v413 = vadd.f32 %v88, %v412
  %v414 = vpop.f32.mrb[0].mxu0
  %415 = vmatprep.mubr.bf16.mxu0 %v186
  %416 = vmatmul.mubr.bf16.gmra.mrb[0].mxu0 %v185
  %v417 = vpop.f32.mrb[0].mxu0
  %v418 = vadd.f32 %v88, %v417
  %v419 = vpop.f32.mrb[0].mxu0
  %v420 = vpop.f32.mrb[0].mxu0
  %v421 = vadd.f32 %v88, %v420
  %v422 = vpop.f32.mrb[0].mxu0
  %423 = vmatprep.mubr.bf16.mxu0 %v189
  %424 = vmatmul.mubr.bf16.gmra.mrb[0].mxu0 %v188
  %v425 = vpop.f32.mrb[0].mxu0
  %v426 = vadd.f32 %v88, %v425
  %v427 = vpop.f32.mrb[0].mxu0
  %v428 = vpop.f32.mrb[0].mxu0
  %v429 = vadd.f32 %v88, %v428
  %v430 = vpop.f32.mrb[0].mxu0
  %431 = vmatprep.mubr.bf16.mxu0 %v192
  %432 = vmatmul.mubr.bf16.gmra.mrb[0].mxu0 %v191
  %v433 = vpop.f32.mrb[0].mxu0
  %v434 = vadd.f32 %v88, %v433
  %v435 = vpop.f32.mrb[0].mxu0
  %v436 = vpop.f32.mrb[0].mxu0
  %v437 = vadd.f32 %v88, %v436
  %v438 = vpop.f32.mrb[0].mxu0
  %439 = vdwg.mxu0
  %440 = vmatprep.subr.bf16.mxu0 0
  %441 = vmatpush1.bf16.msra.mxu0 %v298
  %442 = vmatprep.subr.bf16.mxu0 0
  %443 = vmatpush1.bf16.msra.mxu0 %v299
  %444 = vmatprep.subr.bf16.mxu0 0
  %445 = vmatpush1.bf16.msra.mxu0 0
  %446 = vmatprep.subr.bf16.mxu0 0
  %447 = vmatpush1.bf16.msra.mxu0 0
  %448 = vmatprep.subr.bf16.mxu0 0
  %449 = vmatpush1.bf16.msra.mxu0 0
  %450 = vmatprep.subr.bf16.mxu0 0
  %451 = vmatpush1.bf16.msra.mxu0 0
  %452 = vmatprep.subr.bf16.mxu0 0
  %453 = vmatpush1.bf16.msra.mxu0 0
  %454 = vmatprep.subr.bf16.mxu0 0
  %455 = vmatpush1.bf16.msra.mxu0 0
  %456 = vmatprep.subr.bf16.mxu0 0
  %457 = vmatpush1.bf16.msra.mxu0 0
  %458 = vmatprep.subr.bf16.mxu0 0
  %459 = vmatpush1.bf16.msra.mxu0 0
  %460 = vmatprep.subr.bf16.mxu0 0
  %461 = vmatpush1.bf16.msra.mxu0 0
  %462 = vmatprep.subr.bf16.mxu0 0
  %463 = vmatpush1.bf16.msra.mxu0 0
  %464 = vmatprep.subr.bf16.mxu0 0
  %465 = vmatpush1.bf16.msra.mxu0 0
  %466 = vmatprep.subr.bf16.mxu0 0
  %467 = vmatpush1.bf16.msra.mxu0 0
  %468 = vmatprep.subr.bf16.mxu0 0
  %469 = vmatpush1.bf16.msra.mxu0 0
  %470 = vmatprep.subr.bf16.mxu0 0
  %471 = vmatpush1.bf16.msra.mxu0 0
  %472 = vmatprep.mubr.bf16.mxu0 0
  %473 = vmatmul.mubr.bf16.gmra.mrb[0].mxu0 %v320
  %v474 = vpop.f32.mrb[0].mxu0
  %v475 = vadd.f32 %v378, %v474
  %v476 = vpop.f32.mrb[0].mxu0
  %v477 = vpop.f32.mrb[0].mxu0
  %v478 = vadd.f32 %v381, %v477
  %v479 = vpop.f32.mrb[0].mxu0
  %480 = vmatprep.mubr.bf16.mxu0 0
  %481 = vmatmul.mubr.bf16.gmra.mrb[0].mxu0 %v323
  %v482 = vpop.f32.mrb[0].mxu0
  %v483 = vadd.f32 %v386, %v482
  %v484 = vpop.f32.mrb[0].mxu0
  %v485 = vpop.f32.mrb[0].mxu0
  %v486 = vadd.f32 %v389, %v485
  %v487 = vpop.f32.mrb[0].mxu0
  %488 = vmatprep.mubr.bf16.mxu0 0
  %489 = vmatmul.mubr.bf16.gmra.mrb[0].mxu0 %v326
  %v490 = vpop.f32.mrb[0].mxu0
  %v491 = vadd.f32 %v394, %v490
  %v492 = vpop.f32.mrb[0].mxu0
  %v493 = vpop.f32.mrb[0].mxu0
  %v494 = vadd.f32 %v397, %v493
  %v495 = vpop.f32.mrb[0].mxu0
  %496 = vmatprep.mubr.bf16.mxu0 0
  %497 = vmatmul.mubr.bf16.gmra.mrb[0].mxu0 %v329
  %v498 = vpop.f32.mrb[0].mxu0
  %v499 = vadd.f32 %v402, %v498
  %v500 = vpop.f32.mrb[0].mxu0
  %v501 = vpop.f32.mrb[0].mxu0
  %v502 = vadd.f32 %v405, %v501
  %v503 = vpop.f32.mrb[0].mxu0
  %504 = vmatprep.mubr.bf16.mxu0 0
  %505 = vmatmul.mubr.bf16.gmra.mrb[0].mxu0 %v332
  %v506 = vpop.f32.mrb[0].mxu0
  %v507 = vadd.f32 %v410, %v506
  %v508 = vpop.f32.mrb[0].mxu0
  %v509 = vpop.f32.mrb[0].mxu0
  %v510 = vadd.f32 %v413, %v509
  %v511 = vpop.f32.mrb[0].mxu0
  %512 = vmatprep.mubr.bf16.mxu0 0
  %513 = vmatmul.mubr.bf16.gmra.mrb[0].mxu0 %v335
  %v514 = vpop.f32.mrb[0].mxu0
  %v515 = vadd.f32 %v418, %v514
  %v516 = vpop.f32.mrb[0].mxu0
  %v517 = vpop.f32.mrb[0].mxu0
  %v518 = vadd.f32 %v421, %v517
  %v519 = vpop.f32.mrb[0].mxu0
  %520 = vmatprep.mubr.bf16.mxu0 0
  %521 = vmatmul.mubr.bf16.gmra.mrb[0].mxu0 %v338
  %v522 = vpop.f32.mrb[0].mxu0
  %v523 = vadd.f32 %v426, %v522
  %v524 = vpop.f32.mrb[0].mxu0
  %v525 = vpop.f32.mrb[0].mxu0
  %v526 = vadd.f32 %v429, %v525
  %v527 = vpop.f32.mrb[0].mxu0
  %528 = vmatprep.mubr.bf16.mxu0 0
  %529 = vmatmul.mubr.bf16.gmra.mrb[0].mxu0 %v341
  %v530 = vpop.f32.mrb[0].mxu0
  %v531 = vadd.f32 %v434, %v530
  %v532 = vpop.f32.mrb[0].mxu0
  %v533 = vpop.f32.mrb[0].mxu0
  %v534 = vadd.f32 %v437, %v533
  %v535 = vpop.f32.mrb[0].mxu0
  %536 = vdwg.mxu0
  %v537 = vmax.f32 %v475, 0.0
  %v538 = vmax.f32 %v478, 0.0
  %v539 = vmax.f32 %v483, 0.0
  %v540 = vmax.f32 %v486, 0.0
  %v541 = vmax.f32 %v491, 0.0
  %v542 = vmax.f32 %v494, 0.0
  %v543 = vmax.f32 %v499, 0.0
  %v544 = vmax.f32 %v502, 0.0
  %v545 = vmax.f32 %v507, 0.0
  %v546 = vmax.f32 %v510, 0.0
  %v547 = vmax.f32 %v515, 0.0
  %v548 = vmax.f32 %v518, 0.0
  %v549 = vmax.f32 %v523, 0.0
  %v550 = vmax.f32 %v526, 0.0
  %v551 = vmax.f32 %v531, 0.0
  %v552 = vmax.f32 %v534, 0.0
  %v553 = vmax.f32 %v537, %v541
  %v554 = vmax.f32 %v538, %v542
  %v555 = vmax.f32 %v539, %v543
  %v556 = vmax.f32 %v540, %v544
  %v557 = vmax.f32 %v545, %v549
  %v558 = vmax.f32 %v546, %v550
  %v559 = vmax.f32 %v547, %v551
  %v560 = vmax.f32 %v548, %v552
  %v561 = vmax.f32 %v553, %v557
  %v562 = vmax.f32 %v554, %v558
  %v563 = vmax.f32 %v555, %v559
  %v564 = vmax.f32 %v556, %v560
  %565 = vst.msk [vmem:[%s3] sm:$0xff] %vm318, %v561
  %566 = vst.msk [vmem:[%s3 + $0x8] sm:$0xff] %vm318, %v562
  %567 = vst.msk [vmem:[%s3 + $0x10] sm:$0xff] %vm318, %v563
  %568 = vst.msk [vmem:[%s3 + $0x18] sm:$0xff] %vm318, %v564
  // Predicated region
  $region14: #{ecg_listener_forward.6} parent=0 // pred_check
    _
  $region15: #{ecg_listener_forward.6} parent=0 // pred_check_branch
    %570 = sbr.rel (0) target = $region17
  $region16: #{ecg_listener_forward.6} parent=0 // pred_region
    _
  $region17: #{ecg_listener_forward.6} parent=0 // pred_fallthru
    _
  // Predicated region
  $region18: #{ecg_listener_forward.6} parent=0 // pred_check
    _
  $region19: #{ecg_listener_forward.6} parent=0 // pred_check_branch
    %572 = sbr.rel (0) target = $region21
  $region20: #{ecg_listener_forward.6} parent=0 // pred_region
    _
  $region21: #{ecg_listener_forward.6} parent=0 // pred_fallthru
    _

// kernel: ecg_listener_forward.7
$region0: #{ecg_listener_forward.7}
  #allocation0 [shape = 'u32[]', space=smem, size = 0x4, offset = 0x4, fixed_abs, tag = 'smem constant byte address 0x4 - core index']
  #allocation1 [shape = 'u32[144,128]{1,0:T(1,128)}', space=vmem, size = 0x12000, scoped, tag = 'internal scratch']
  %s0 = inlined_call_operand.vmem [shape: bf16[32,288], index: 0, kind: input, shape index: {}]
  %s1 = inlined_call_operand.vmem [shape: bf16[288,32], index: 1, kind: input, shape index: {}]
  %s2 = inlined_call_operand.vmem [shape: f32[1,32], index: 2, kind: input, shape index: {}]
  %s3 = inlined_call_operand.vmem [shape: bf16[16,16], index: 3, kind: input, shape index: {}]
  %s4 = inlined_call_operand.vmem [shape: s32[2,1], index: 4, kind: input, shape index: {}]
  %s5 = inlined_call_operand.vmem [shape: bf16[16,96], index: 5, kind: input, shape index: {}]
  %s6 = inlined_call_operand.vmem [shape: bf16[32,96], index: 6, kind: input, shape index: {}]
  %s7 = inlined_call_operand.vmem [shape: f32[1,96], index: 7, kind: input, shape index: {}]
  %s8 = inlined_call_operand.vmem [shape: f32[1,96], index: 8, kind: input, shape index: {}]
  %s9 = inlined_call_operand.vmem [shape: bf16[32,32], index: 9, kind: input, shape index: {}]
  %s10 = inlined_call_operand.hbm [shape: f32[2,4], index: 10, kind: output, shape index: {}]
  %s11 = sld [smem:[#allocation0]]
  $region50: #{ecg_listener_forward.7} parent=0
    _
  %s13 = ssub.s32 1, %s11
  %s14 = scalar_select 0, %s13, %s11
  $region1: #{ecg_listener_forward.7} parent=0
    #allocation2 [shape = 'u8[1024]{0}', space=vmem, size = 0x400, scoped, tag = 'output window, operand 0, single buffered']
    #allocation3 [shape = 's32[1]{0}', space=sflag, size = 0x4, scoped, tag = 'scoped memory for ecg_listener_forward.7']
    %15 = vsyncpa [#allocation3], 0
    // Predicated region
    $region2: #{ecg_listener_forward.7} parent=1 // pred_check
      _
    $region3: #{ecg_listener_forward.7} parent=1 // pred_check_branch
      %17 = sbr.rel (0) target = $region5
    $region4: #{ecg_listener_forward.7} parent=1 // pred_region
      _
    $region5: #{ecg_listener_forward.7} parent=1 // pred_fallthru
      _
    // Predicated region
    $region6: #{ecg_listener_forward.7} parent=1 // pred_check
      _
    $region7: #{ecg_listener_forward.7} parent=1 // pred_check_branch
      %19 = sbr.rel (0) target = $region9
    $region8: #{ecg_listener_forward.7} parent=1 // pred_region
      _
    $region9: #{ecg_listener_forward.7} parent=1 // pred_fallthru
      _
    // Predicated region
    $region10: #{ecg_listener_forward.7} parent=1 // pred_check
      _
    $region11: #{ecg_listener_forward.7} parent=1 // pred_check_branch
      %21 = sbr.rel (0) target = $region13
    $region12: #{ecg_listener_forward.7} parent=1 // pred_region
      _
    $region13: #{ecg_listener_forward.7} parent=1 // pred_fallthru
      _
    // Predicated region
    $region14: #{ecg_listener_forward.7} parent=1 // pred_check
      _
    $region15: #{ecg_listener_forward.7} parent=1 // pred_check_branch
      %23 = sbr.rel (0) target = $region17
    $region16: #{ecg_listener_forward.7} parent=1 // pred_region
      _
    $region17: #{ecg_listener_forward.7} parent=1 // pred_fallthru
      _
    // Predicated region
    $region18: #{ecg_listener_forward.7} parent=1 // pred_check
      _
    $region19: #{ecg_listener_forward.7} parent=1 // pred_check_branch
      %25 = sbr.rel (0) target = $region21
    $region20: #{ecg_listener_forward.7} parent=1 // pred_region
      _
    $region21: #{ecg_listener_forward.7} parent=1 // pred_fallthru
      _
    // Predicated region
    $region22: #{ecg_listener_forward.7} parent=1 // pred_check
      _
    $region23: #{ecg_listener_forward.7} parent=1 // pred_check_branch
      %27 = sbr.rel (0) target = $region25
    $region24: #{ecg_listener_forward.7} parent=1 // pred_region
      _
    $region25: #{ecg_listener_forward.7} parent=1 // pred_fallthru
      _
    // Predicated region
    $region26: #{ecg_listener_forward.7} parent=1 // pred_check
      _
    $region27: #{ecg_listener_forward.7} parent=1 // pred_check_branch
      %29 = sbr.rel (0) target = $region29
    $region28: #{ecg_listener_forward.7} parent=1 // pred_region
      _
    $region29: #{ecg_listener_forward.7} parent=1 // pred_fallthru
      _
    // Predicated region
    $region30: #{ecg_listener_forward.7} parent=1 // pred_check
      _
    $region31: #{ecg_listener_forward.7} parent=1 // pred_check_branch
      %31 = sbr.rel (0) target = $region33
    $region32: #{ecg_listener_forward.7} parent=1 // pred_region
      _
    $region33: #{ecg_listener_forward.7} parent=1 // pred_fallthru
      _
    // Predicated region
    $region34: #{ecg_listener_forward.7} parent=1 // pred_check
      _
    $region35: #{ecg_listener_forward.7} parent=1 // pred_check_branch
      %33 = sbr.rel (0) target = $region37
    $region36: #{ecg_listener_forward.7} parent=1 // pred_region
      _
    $region37: #{ecg_listener_forward.7} parent=1 // pred_fallthru
      _
    // Predicated region
    $region38: #{ecg_listener_forward.7} parent=1 // pred_check
      _
    $region39: #{ecg_listener_forward.7} parent=1 // pred_check_branch
      %35 = sbr.rel (0) target = $region41
    $region40: #{ecg_listener_forward.7} parent=1 // pred_region
      _
    $region41: #{ecg_listener_forward.7} parent=1 // pred_fallthru
      _
    %v37 = vld [vmem:[%s0] sm:$0xff]
    %v38 = vld [vmem:[%s0 + $0x8] sm:$0xf]
    %v39 = vld [vmem:[%s0 + $0xc] sm:$0xff]
    %v40 = vld [vmem:[%s0 + $0x14] sm:$0xf]
    %v41 = vld [vmem:[%s0 + $0x18] sm:$0xff]
    %v42 = vld [vmem:[%s0 + $0x20] sm:$0xf]
    %v43 = vld [vmem:[%s0 + $0x24] sm:$0xff]
    %v44 = vld [vmem:[%s0 + $0x2c] sm:$0xf]
    %v45 = vld [vmem:[%s1] sm:$0xf]
    %v46 = vld [vmem:[%s1 + $0x4] sm:$0xf]
    %v47 = vld [vmem:[%s1 + $0x8] sm:$0xf]
    %v48 = vld [vmem:[%s1 + $0xc] sm:$0xf]
    %v49 = vld [vmem:[%s1 + $0x10] sm:$0xf]
    %v50 = vld [vmem:[%s1 + $0x14] sm:$0xf]
    %v51 = vld [vmem:[%s1 + $0x18] sm:$0xf]
    %v52 = vld [vmem:[%s1 + $0x1c] sm:$0xf]
    %v53 = vld [vmem:[%s1 + $0x20] sm:$0xf]
    %v54 = vld [vmem:[%s1 + $0x24] sm:$0xf]
    %v55 = vld [vmem:[%s1 + $0x28] sm:$0xf]
    %v56 = vld [vmem:[%s1 + $0x2c] sm:$0xf]
    %v57 = vld [vmem:[%s1 + $0x30] sm:$0xf]
    %v58 = vld [vmem:[%s1 + $0x34] sm:$0xf]
    %v59 = vld [vmem:[%s1 + $0x38] sm:$0xf]
    %v60 = vld [vmem:[%s1 + $0x3c] sm:$0xf]
    %v61 = vld [vmem:[%s1 + $0x40] sm:$0xf]
    %v62 = vld [vmem:[%s1 + $0x44] sm:$0xf]
    %v63 = vld [vmem:[%s1 + $0x48] sm:$0xf]
    %v64 = vld [vmem:[%s1 + $0x4c] sm:$0xf]
    %v65 = vld [vmem:[%s1 + $0x50] sm:$0xf]
    %v66 = vld [vmem:[%s1 + $0x54] sm:$0xf]
    %v67 = vld [vmem:[%s1 + $0x58] sm:$0xf]
    %v68 = vld [vmem:[%s1 + $0x5c] sm:$0xf]
    %v69 = vld [vmem:[%s1 + $0x60] sm:$0xf]
    %v70 = vld [vmem:[%s1 + $0x64] sm:$0xf]
    %v71 = vld [vmem:[%s1 + $0x68] sm:$0xf]
    %v72 = vld [vmem:[%s1 + $0x6c] sm:$0xf]
    %v73 = vld [vmem:[%s1 + $0x70] sm:$0xf]
    %v74 = vld [vmem:[%s1 + $0x74] sm:$0xf]
    %v75 = vld [vmem:[%s1 + $0x78] sm:$0xf]
    %v76 = vld [vmem:[%s1 + $0x7c] sm:$0xf]
    %v77 = vld [vmem:[%s1 + $0x80] sm:$0xf]
    %v78 = vld [vmem:[%s1 + $0x84] sm:$0xf]
    %v79 = vld [vmem:[%s1 + $0x88] sm:$0xf]
    %v80 = vld [vmem:[%s1 + $0x8c] sm:$0xf]
    %v81 = vld [vmem:[%s2] sm:$0x1]
    %v83 = vlaneseq
    %v84 = vshrl.u32 %v83, 7
    %v85 = vsub.s32 0, %v84
    %v86 = vrot.slane %v81, %v85
    %v96 = vunpack.c.l.b16 %v37
    %v97 = vunpack.c.h.b16 %v37
    %v98 = vunpack.c.l.b16 %v38
    %v99 = vunpack.c.l.b16 %v39
    %v100 = vunpack.c.h.b16 %v39
    %v101 = vunpack.c.l.b16 %v40
    %v102 = vunpack.c.l.b16 %v41
    %v103 = vunpack.c.h.b16 %v41
    %v104 = vunpack.c.l.b16 %v42
    %v105 = vunpack.c.l.b16 %v43
    %v106 = vunpack.c.h.b16 %v43
    %v107 = vunpack.c.l.b16 %v44
    %v108 = vpack.c.b16 %v99, %v96
    %v109 = vpack.c.b16 %v100, %v97
    %v110 = vpack.c.b16 %v101, %v98
    %v111 = vpack.c.b16 %v105, %v102
    %v112 = vpack.c.b16 %v106, %v103
    %v113 = vpack.c.b16 %v107, %v104
    %v154 = vunpack.c.l.b16 %v45
    %v155 = vunpack.c.l.b16 %v46
    %v156 = vunpack.c.l.b16 %v47
    %v157 = vunpack.c.l.b16 %v48
    %v158 = vunpack.c.l.b16 %v49
    %v159 = vunpack.c.l.b16 %v50
    %v160 = vunpack.c.l.b16 %v51
    %v161 = vunpack.c.l.b16 %v52
    %v162 = vunpack.c.l.b16 %v53
    %v163 = vunpack.c.l.b16 %v54
    %v164 = vunpack.c.l.b16 %v55
    %v165 = vunpack.c.l.b16 %v56
    %v166 = vunpack.c.l.b16 %v57
    %v167 = vunpack.c.l.b16 %v58
    %v168 = vunpack.c.l.b16 %v59
    %v169 = vunpack.c.l.b16 %v60
    %v170 = vunpack.c.l.b16 %v61
    %v171 = vunpack.c.l.b16 %v62
    %v172 = vunpack.c.l.b16 %v63
    %v173 = vunpack.c.l.b16 %v64
    %v174 = vunpack.c.l.b16 %v65
    %v175 = vunpack.c.l.b16 %v66
    %v176 = vunpack.c.l.b16 %v67
    %v177 = vunpack.c.l.b16 %v68
    %v178 = vunpack.c.l.b16 %v69
    %v179 = vunpack.c.l.b16 %v70
    %v180 = vunpack.c.l.b16 %v71
    %v181 = vunpack.c.l.b16 %v72
    %v182 = vunpack.c.l.b16 %v73
    %v183 = vunpack.c.l.b16 %v74
    %v184 = vunpack.c.l.b16 %v75
    %v185 = vunpack.c.l.b16 %v76
    %v186 = vunpack.c.l.b16 %v77
    %v187 = vunpack.c.l.b16 %v78
    %v188 = vunpack.c.l.b16 %v79
    %v189 = vunpack.c.l.b16 %v80
    %v190 = vpack.c.b16 %v155, %v154
    %v191 = vpack.c.b16 %v157, %v156
    %v192 = vpack.c.b16 %v159, %v158
    %v193 = vpack.c.b16 %v161, %v160
    %v194 = vpack.c.b16 %v163, %v162
    %v195 = vpack.c.b16 %v165, %v164
    %v196 = vpack.c.b16 %v167, %v166
    %v197 = vpack.c.b16 %v169, %v168
    %v198 = vpack.c.b16 %v171, %v170
    %v199 = vpack.c.b16 %v173, %v172
    %v200 = vpack.c.b16 %v175, %v174
    %v201 = vpack.c.b16 %v177, %v176
    %v202 = vpack.c.b16 %v179, %v178
    %v203 = vpack.c.b16 %v181, %v180
    %v204 = vpack.c.b16 %v183, %v182
    %v205 = vpack.c.b16 %v185, %v184
    %v206 = vpack.c.b16 %v187, %v186
    %v207 = vpack.c.b16 %v189, %v188
    %vm226 = vcmask 261120
    %v228 = vsel %vm226, %v110, 0
    %v231 = vsel %vm226, %v113, 0
    %233 = vmatprep.subr.bf16.mxu0 0
    %234 = vmatpush1.bf16.msra.mxu0 %v190
    %235 = vmatprep.subr.bf16.mxu0 0
    %236 = vmatpush1.bf16.msra.mxu0 %v191
    %237 = vmatprep.subr.bf16.mxu0 0
    %238 = vmatpush1.bf16.msra.mxu0 %v192
    %239 = vmatprep.subr.bf16.mxu0 0
    %240 = vmatpush1.bf16.msra.mxu0 %v193
    %241 = vmatprep.subr.bf16.mxu0 0
    %242 = vmatpush1.bf16.msra.mxu0 %v194
    %243 = vmatprep.subr.bf16.mxu0 0
    %244 = vmatpush1.bf16.msra.mxu0 %v195
    %245 = vmatprep.subr.bf16.mxu0 0
    %246 = vmatpush1.bf16.msra.mxu0 %v196
    %247 = vmatprep.subr.bf16.mxu0 0
    %248 = vmatpush1.bf16.msra.mxu0 %v197
    %249 = vmatprep.subr.bf16.mxu0 0
    %250 = vmatpush1.bf16.msra.mxu0 %v198
    %251 = vmatprep.subr.bf16.mxu0 0
    %252 = vmatpush1.bf16.msra.mxu0 %v199
    %253 = vmatprep.subr.bf16.mxu0 0
    %254 = vmatpush1.bf16.msra.mxu0 %v200
    %255 = vmatprep.subr.bf16.mxu0 0
    %256 = vmatpush1.bf16.msra.mxu0 %v201
    %257 = vmatprep.subr.bf16.mxu0 0
    %258 = vmatpush1.bf16.msra.mxu0 %v202
    %259 = vmatprep.subr.bf16.mxu0 0
    %260 = vmatpush1.bf16.msra.mxu0 %v203
    %261 = vmatprep.subr.bf16.mxu0 0
    %262 = vmatpush1.bf16.msra.mxu0 %v204
    %263 = vmatprep.subr.bf16.mxu0 0
    %264 = vmatpush1.bf16.msra.mxu0 %v205
    %265 = vmatprep.mubr.bf16.mxu0 %v109
    %266 = vmatmul.mubr.bf16.gmra.mrb[0].mxu0 %v108
    %v267 = vpop.f32.mrb[0].mxu0
    %v268 = vadd.f32 %v86, %v267
    %v269 = vpop.f32.mrb[0].mxu0
    %v270 = vpop.f32.mrb[0].mxu0
    %v271 = vadd.f32 %v86, %v270
    %v272 = vpop.f32.mrb[0].mxu0
    %273 = vmatprep.mubr.bf16.mxu0 %v112
    %274 = vmatmul.mubr.bf16.gmra.mrb[0].mxu0 %v111
    %v275 = vpop.f32.mrb[0].mxu0
    %v276 = vadd.f32 %v86, %v275
    %v277 = vpop.f32.mrb[0].mxu0
    %v278 = vpop.f32.mrb[0].mxu0
    %v279 = vadd.f32 %v86, %v278
    %v280 = vpop.f32.mrb[0].mxu0
    %281 = vdwg.mxu0
    %282 = vmatprep.subr.bf16.mxu0 0
    %283 = vmatpush1.bf16.msra.mxu0 %v206
    %284 = vmatprep.subr.bf16.mxu0 0
    %285 = vmatpush1.bf16.msra.mxu0 %v207
    %286 = vmatprep.subr.bf16.mxu0 0
    %287 = vmatpush1.bf16.msra.mxu0 0
    %288 = vmatprep.subr.bf16.mxu0 0
    %289 = vmatpush1.bf16.msra.mxu0 0
    %290 = vmatprep.subr.bf16.mxu0 0
    %291 = vmatpush1.bf16.msra.mxu0 0
    %292 = vmatprep.subr.bf16.mxu0 0
    %293 = vmatpush1.bf16.msra.mxu0 0
    %294 = vmatprep.subr.bf16.mxu0 0
    %295 = vmatpush1.bf16.msra.mxu0 0
    %296 = vmatprep.subr.bf16.mxu0 0
    %297 = vmatpush1.bf16.msra.mxu0 0
    %298 = vmatprep.subr.bf16.mxu0 0
    %299 = vmatpush1.bf16.msra.mxu0 0
    %300 = vmatprep.subr.bf16.mxu0 0
    %301 = vmatpush1.bf16.msra.mxu0 0
    %302 = vmatprep.subr.bf16.mxu0 0
    %303 = vmatpush1.bf16.msra.mxu0 0
    %304 = vmatprep.subr.bf16.mxu0 0
    %305 = vmatpush1.bf16.msra.mxu0 0
    %306 = vmatprep.subr.bf16.mxu0 0
    %307 = vmatpush1.bf16.msra.mxu0 0
    %308 = vmatprep.subr.bf16.mxu0 0
    %309 = vmatpush1.bf16.msra.mxu0 0
    %310 = vmatprep.subr.bf16.mxu0 0
    %311 = vmatpush1.bf16.msra.mxu0 0
    %312 = vmatprep.subr.bf16.mxu0 0
    %313 = vmatpush1.bf16.msra.mxu0 0
    %314 = vmatprep.mubr.bf16.mxu0 0
    %315 = vmatmul.mubr.bf16.gmra.mrb[0].mxu0 %v228
    %v316 = vpop.f32.mrb[0].mxu0
    %v317 = vadd.f32 %v268, %v316
    %v318 = vpop.f32.mrb[0].mxu0
    %v319 = vpop.f32.mrb[0].mxu0
    %v320 = vadd.f32 %v271, %v319
    %v321 = vpop.f32.mrb[0].mxu0
    %322 = vmatprep.mubr.bf16.mxu0 0
    %323 = vmatmul.mubr.bf16.gmra.mrb[0].mxu0 %v231
    %v324 = vpop.f32.mrb[0].mxu0
    %v325 = vadd.f32 %v276, %v324
    %v326 = vpop.f32.mrb[0].mxu0
    %v327 = vpop.f32.mrb[0].mxu0
    %v328 = vadd.f32 %v279, %v327
    %v329 = vpop.f32.mrb[0].mxu0
    %330 = vdwg.mxu0
    %v331 = vmax.f32 %v317, 0.0
    %v332 = vmax.f32 %v320, 0.0
    %v333 = vmax.f32 %v325, 0.0
    %v334 = vmax.f32 %v328, 0.0
    %v335 = vmax.f32 %v331, %v332
    %v336 = vmax.f32 %v333, %v334
    %v337 = vmax.f32 %v335, %v336
    %v338 = vld [vmem:[%s3] sm:$0xf]
    %v339 = vld [vmem:[%s3 + $0x4] sm:$0xf]
    %v340 = vld [vmem:[%s5] sm:$0xf]
    %v341 = vld [vmem:[%s5 + $0x4] sm:$0xf]
    %v342 = vld [vmem:[%s7] sm:$0x1]
    %v344 = vlaneseq
    %v345 = vshrl.u32 %v344, 7
    %v346 = vsub.s32 0, %v345
    %v347 = vrot.slane %v342, %v346
    %v351 = vunpack.c.l.b16 %v338
    %v352 = vunpack.c.l.b16 %v339
    %v353 = vpack.c.b16 %v352, %v351
    %v356 = vunpack.c.l.b16 %v340
    %v357 = vunpack.c.l.b16 %v341
    %v358 = vpack.c.b16 %v357, %v356
    %vm360 = vcmask 130048
    %v362 = vsel %vm360, %v353, 0
    %364 = vmatprep.subr.bf16.mxu0 0
    %365 = vmatpush1.bf16.msra.mxu0 %v358
    %366 = vmatprep.subr.bf16.mxu0 0
    %367 = vmatpush1.bf16.msra.mxu0 0
    %368 = vmatprep.subr.bf16.mxu0 0
    %369 = vmatpush1.bf16.msra.mxu0 0
    %370 = vmatprep.subr.bf16.mxu0 0
    %371 = vmatpush1.bf16.msra.mxu0 0
    %372 = vmatprep.subr.bf16.mxu0 0
    %373 = vmatpush1.bf16.msra.mxu0 0
    %374 = vmatprep.subr.bf16.mxu0 0
    %375 = vmatpush1.bf16.msra.mxu0 0
    %376 = vmatprep.subr.bf16.mxu0 0
    %377 = vmatpush1.bf16.msra.mxu0 0
    %378 = vmatprep.subr.bf16.mxu0 0
    %379 = vmatpush1.bf16.msra.mxu0 0
    %380 = vmatprep.subr.bf16.mxu0 0
    %381 = vmatpush1.bf16.msra.mxu0 0
    %382 = vmatprep.subr.bf16.mxu0 0
    %383 = vmatpush1.bf16.msra.mxu0 0
    %384 = vmatprep.subr.bf16.mxu0 0
    %385 = vmatpush1.bf16.msra.mxu0 0
    %386 = vmatprep.subr.bf16.mxu0 0
    %387 = vmatpush1.bf16.msra.mxu0 0
    %388 = vmatprep.subr.bf16.mxu0 0
    %389 = vmatpush1.bf16.msra.mxu0 0
    %390 = vmatprep.subr.bf16.mxu0 0
    %391 = vmatpush1.bf16.msra.mxu0 0
    %392 = vmatprep.subr.bf16.mxu0 0
    %393 = vmatpush1.bf16.msra.mxu0 0
    %394 = vmatprep.subr.bf16.mxu0 0
    %395 = vmatpush1.bf16.msra.mxu0 0
    %396 = vmatprep.mubr.bf16.mxu0 0
    %397 = vmatmul.mubr.bf16.gmra.mrb[0].mxu0 %v362
    %v398 = vpop.f32.mrb[0].mxu0
    %v399 = vadd.f32 %v347, %v398
    %v400 = vpop.f32.mrb[0].mxu0
    %v401 = vpop.f32.mrb[0].mxu0
    %v402 = vadd.f32 %v347, %v401
    %v403 = vpop.f32.mrb[0].mxu0
    %404 = vdwg.mxu0
    %v407 = vcombine.high %v399, %v399
    %v409 = vunpack.c.l.s4 1983009808
    %v410 = vunpack.c.0.s8 %v409
    %v411 = vlaneseq
    %v412 = vshrl.u32 %v411, 7
    %v413 = vsub.s32 %v410, %v412
    %v414 = vrot.slane %v399, %v413
    %v416 = vunpack.c.l.s4 1983009808
    %v417 = vunpack.c.0.s8 %v416
    %v418 = vlaneseq
    %v419 = vshrl.u32 %v418, 7
    %v420 = vsub.s32 %v417, %v419
    %v421 = vrot.slane %v407, %v420
    %v422 = vcombine.high %v414, %v414
    %v423 = vcombine.high %v421, %v421
    %v424 = vcombine.high %v402, %v402
    %v426 = vunpack.c.l.s4 1983009808
    %v427 = vunpack.c.0.s8 %v426
    %v428 = vlaneseq
    %v429 = vshrl.u32 %v428, 7
    %v430 = vsub.s32 %v427, %v429
    %v431 = vrot.slane %v402, %v430
    %v433 = vunpack.c.l.s4 1983009808
    %v434 = vunpack.c.0.s8 %v433
    %v435 = vlaneseq
    %v436 = vshrl.u32 %v435, 7
    %v437 = vsub.s32 %v434, %v436
    %v438 = vrot.slane %v424, %v437
    %v439 = vcombine.high %v431, %v431
    %v440 = vcombine.high %v438, %v438
    %v449 = vld [vmem:[%s6] sm:$0xf]
    %v450 = vld [vmem:[%s6 + $0x4] sm:$0xf]
    %v451 = vld [vmem:[%s6 + $0x8] sm:$0xf]
    %v452 = vld [vmem:[%s6 + $0xc] sm:$0xf]
    %v453 = vld [vmem:[%s8] sm:$0x1]
    %v454 = vld [vmem:[%s4] sm:$0x3]
    %v456 = vlaneseq
    %v457 = vshrl.u32 %v456, 7
    %v458 = vsub.s32 0, %v457
    %v459 = vrot.slane %v453, %v458
    %v465 = vunpack.c.l.b16 %v449
    %v466 = vunpack.c.l.b16 %v450
    %v467 = vunpack.c.l.b16 %v451
    %v468 = vunpack.c.l.b16 %v452
    %v469 = vpack.c.b16 %v466, %v465
    %v470 = vpack.c.b16 %v468, %v467
    %v474 = vsel %vm226, 0, 0
    %476 = vmatprep.subr.bf16.mxu0 0
    %477 = vmatpush1.bf16.msra.mxu0 %v469
    %478 = vmatprep.subr.bf16.mxu0 0
    %479 = vmatpush1.bf16.msra.mxu0 %v470
    %480 = vmatprep.subr.bf16.mxu0 0
    %481 = vmatpush1.bf16.msra.mxu0 0
    %482 = vmatprep.subr.bf16.mxu0 0
    %483 = vmatpush1.bf16.msra.mxu0 0
    %484 = vmatprep.subr.bf16.mxu0 0
    %485 = vmatpush1.bf16.msra.mxu0 0
    %486 = vmatprep.subr.bf16.mxu0 0
    %487 = vmatpush1.bf16.msra.mxu0 0
    %488 = vmatprep.subr.bf16.mxu0 0
    %489 = vmatpush1.bf16.msra.mxu0 0
    %490 = vmatprep.subr.bf16.mxu0 0
    %491 = vmatpush1.bf16.msra.mxu0 0
    %492 = vmatprep.subr.bf16.mxu0 0
    %493 = vmatpush1.bf16.msra.mxu0 0
    %494 = vmatprep.subr.bf16.mxu0 0
    %495 = vmatpush1.bf16.msra.mxu0 0
    %496 = vmatprep.subr.bf16.mxu0 0
    %497 = vmatpush1.bf16.msra.mxu0 0
    %498 = vmatprep.subr.bf16.mxu0 0
    %499 = vmatpush1.bf16.msra.mxu0 0
    %500 = vmatprep.subr.bf16.mxu0 0
    %501 = vmatpush1.bf16.msra.mxu0 0
    %502 = vmatprep.subr.bf16.mxu0 0
    %503 = vmatpush1.bf16.msra.mxu0 0
    %504 = vmatprep.subr.bf16.mxu0 0
    %505 = vmatpush1.bf16.msra.mxu0 0
    %506 = vmatprep.subr.bf16.mxu0 0
    %507 = vmatpush1.bf16.msra.mxu0 0
    %508 = vmatprep.mubr.bf16.mxu0 0
    %509 = vmatmul.mubr.bf16.gmra.mrb[0].mxu0 %v474
    %v510 = vpop.f32.mrb[0].mxu0
    %v511 = vadd.f32 %v459, %v510
    %v512 = vpop.f32.mrb[0].mxu0
    %v513 = vpop.f32.mrb[0].mxu0
    %v514 = vpop.f32.mrb[0].mxu0
    %515 = vdwg.mxu0
    %v516 = vadd.f32 %v414, %v511
    %v517 = vxor.u32 %v516, 2147483648
    %v518 = vmul.f32 %v517, 1.442695
    %v519 = vpow.pop %v518
    %v520 = vadd.f32 %v519, 1.0
    %v521 = vrcp.pop %v520
    %v522 = vmul.f32 1.0, %v521
    %v525 = vunpack.c.l.s4 1983009808
    %v526 = vunpack.c.0.s8 %v525
    %v527 = vlaneseq
    %v528 = vshrl.u32 %v527, 7
    %v529 = vsub.s32 %v526, %v528
    %v530 = vrot.slane %v511, %v529
    %531 = vrot.lane.b32.xlu0 %v530, 64
    %v532 = vpop.permute.xlu0 %531
    %v534 = vmul.f32 %v522, %v532
    %536 = vrot.lane.b32.xlu0 %v534, 64
    %v537 = vpop.permute.xlu0 %536
    %v539 = vadd.f32 %v414, %v537
    %v540 = vtanh.pop %v539
    %v541 = vsub.f32 1.0, %v522
    %543 = vrot.lane.b32.xlu0 %v540, 96
    %v544 = vpop.permute.xlu0 %543
    %v546 = vmul.f32 %v541, %v544
    %v547 = vmul.f32 %v522, 0.0
    %v548 = vadd.f32 %v546, %v547
    %vm549 = vcmp.gt.s32.totalorder %v454, 0
    %v550 = vsel %vm549, 1, 0
    %551 = vset.pattern.permute.xlu0 0
    %552 = vperm.xlu0 %551, %v550
    %v553 = vpop.permute.xlu0 %552
    %vm554 = vcmp.eq.s32.totalorder %v553, 1
    %v557 = vunpack.c.l.s4 1983009808
    %v558 = vunpack.c.0.s8 %v557
    %v559 = vlaneseq
    %v560 = vshrl.u32 %v559, 7
    %v561 = vsub.s32 %v558, %v560
    %v562 = vrot.slane %v548, %v561
    %563 = vrot.lane.b32.xlu0 %v562, 96
    %v564 = vpop.permute.xlu0 %563
    %v566 = vsel %vm554, %v564, 0.0
    %v567 = vpack.c.bf16 %v566, %v566
    %v569 = vsel %vm226, %v567, 0
    %571 = vmatprep.subr.bf16.mxu0 0
    %572 = vmatpush1.bf16.msra.mxu0 %v469
    %573 = vmatprep.subr.bf16.mxu0 0
    %574 = vmatpush1.bf16.msra.mxu0 %v470
    %575 = vmatprep.subr.bf16.mxu0 0
    %576 = vmatpush1.bf16.msra.mxu0 0
    %577 = vmatprep.subr.bf16.mxu0 0
    %578 = vmatpush1.bf16.msra.mxu0 0
    %579 = vmatprep.subr.bf16.mxu0 0
    %580 = vmatpush1.bf16.msra.mxu0 0
    %581 = vmatprep.subr.bf16.mxu0 0
    %582 = vmatpush1.bf16.msra.mxu0 0
    %583 = vmatprep.subr.bf16.mxu0 0
    %584 = vmatpush1.bf16.msra.mxu0 0
    %585 = vmatprep.subr.bf16.mxu0 0
    %586 = vmatpush1.bf16.msra.mxu0 0
    %587 = vmatprep.subr.bf16.mxu0 0
    %588 = vmatpush1.bf16.msra.mxu0 0
    %589 = vmatprep.subr.bf16.mxu0 0
    %590 = vmatpush1.bf16.msra.mxu0 0
    %591 = vmatprep.subr.bf16.mxu0 0
    %592 = vmatpush1.bf16.msra.mxu0 0
    %593 = vmatprep.subr.bf16.mxu0 0
    %594 = vmatpush1.bf16.msra.mxu0 0
    %595 = vmatprep.subr.bf16.mxu0 0
    %596 = vmatpush1.bf16.msra.mxu0 0
    %597 = vmatprep.subr.bf16.mxu0 0
    %598 = vmatpush1.bf16.msra.mxu0 0
    %599 = vmatprep.subr.bf16.mxu0 0
    %600 = vmatpush1.bf16.msra.mxu0 0
    %601 = vmatprep.subr.bf16.mxu0 0
    %602 = vmatpush1.bf16.msra.mxu0 0
    %603 = vmatprep.mubr.bf16.mxu0 0
    %604 = vmatmul.mubr.bf16.gmra.mrb[0].mxu0 %v569
    %v605 = vpop.f32.mrb[0].mxu0
    %v606 = vadd.f32 %v459, %v605
    %v607 = vpop.f32.mrb[0].mxu0
    %v608 = vpop.f32.mrb[0].mxu0
    %v609 = vpop.f32.mrb[0].mxu0
    %610 = vdwg.mxu0
    %v611 = vadd.f32 %v422, %v606
    %v612 = vxor.u32 %v611, 2147483648
    %v613 = vmul.f32 %v612, 1.442695
    %v614 = vpow.pop %v613
    %v615 = vadd.f32 %v614, 1.0
    %v616 = vrcp.pop %v615
    %v617 = vmul.f32 1.0, %v616
    %v620 = vunpack.c.l.s4 1983009808
    %v621 = vunpack.c.0.s8 %v620
    %v622 = vlaneseq
    %v623 = vshrl.u32 %v622, 7
    %v624 = vsub.s32 %v621, %v623
    %v625 = vrot.slane %v606, %v624
    %626 = vrot.lane.b32.xlu0 %v625, 64
    %v627 = vpop.permute.xlu0 %626
    %v629 = vmul.f32 %v617, %v627
    %631 = vrot.lane.b32.xlu0 %v629, 64
    %v632 = vpop.permute.xlu0 %631
    %v634 = vadd.f32 %v422, %v632
    %v635 = vtanh.pop %v634
    %v636 = vsub.f32 1.0, %v617
    %638 = vrot.lane.b32.xlu0 %v635, 96
    %v639 = vpop.permute.xlu0 %638
    %v641 = vmul.f32 %v636, %v639
    %v644 = vunpack.c.l.s4 1983009808
    %v645 = vunpack.c.0.s8 %v644
    %v646 = vlaneseq
    %v647 = vshrl.u32 %v646, 7
    %v648 = vsub.s32 %v645, %v647
    %v649 = vrot.slane %v566, %v648
    %650 = vrot.lane.b32.xlu0 %v649, 32
    %v651 = vpop.permute.xlu0 %650
    %v653 = vmul.f32 %v617, %v651
    %v654 = vadd.f32 %v641, %v653
    %vm655 = vcmp.gt.s32.totalorder %v454, 1
    %v656 = vsel %vm655, 1, 0
    %657 = vset.pattern.permute.xlu0 0
    %658 = vperm.xlu0 %657, %v656
    %v659 = vpop.permute.xlu0 %658
    %vm660 = vcmp.eq.s32.totalorder %v659, 1
    %v663 = vunpack.c.l.s4 1983009808
    %v664 = vunpack.c.0.s8 %v663
    %v665 = vlaneseq
    %v666 = vshrl.u32 %v665, 7
    %v667 = vsub.s32 %v664, %v666
    %v668 = vrot.slane %v654, %v667
    %669 = vrot.lane.b32.xlu0 %v668, 96
    %v670 = vpop.permute.xlu0 %669
    %v672 = vsel %vm660, %v670, %v566
    %v673 = vpack.c.bf16 %v672, %v672
    %v675 = vsel %vm226, %v673, 0
    %677 = vmatprep.subr.bf16.mxu0 0
    %678 = vmatpush1.bf16.msra.mxu0 %v469
    %679 = vmatprep.subr.bf16.mxu0 0
    %680 = vmatpush1.bf16.msra.mxu0 %v470
    %681 = vmatprep.subr.bf16.mxu0 0
    %682 = vmatpush1.bf16.msra.mxu0 0
    %683 = vmatprep.subr.bf16.mxu0 0
    %684 = vmatpush1.bf16.msra.mxu0 0
    %685 = vmatprep.subr.bf16.mxu0 0
    %686 = vmatpush1.bf16.msra.mxu0 0
    %687 = vmatprep.subr.bf16.mxu0 0
    %688 = vmatpush1.bf16.msra.mxu0 0
    %689 = vmatprep.subr.bf16.mxu0 0
    %690 = vmatpush1.bf16.msra.mxu0 0
    %691 = vmatprep.subr.bf16.mxu0 0
    %692 = vmatpush1.bf16.msra.mxu0 0
    %693 = vmatprep.subr.bf16.mxu0 0
    %694 = vmatpush1.bf16.msra.mxu0 0
    %695 = vmatprep.subr.bf16.mxu0 0
    %696 = vmatpush1.bf16.msra.mxu0 0
    %697 = vmatprep.subr.bf16.mxu0 0
    %698 = vmatpush1.bf16.msra.mxu0 0
    %699 = vmatprep.subr.bf16.mxu0 0
    %700 = vmatpush1.bf16.msra.mxu0 0
    %701 = vmatprep.subr.bf16.mxu0 0
    %702 = vmatpush1.bf16.msra.mxu0 0
    %703 = vmatprep.subr.bf16.mxu0 0
    %704 = vmatpush1.bf16.msra.mxu0 0
    %705 = vmatprep.subr.bf16.mxu0 0
    %706 = vmatpush1.bf16.msra.mxu0 0
    %707 = vmatprep.subr.bf16.mxu0 0
    %708 = vmatpush1.bf16.msra.mxu0 0
    %709 = vmatprep.mubr.bf16.mxu0 0
    %710 = vmatmul.mubr.bf16.gmra.mrb[0].mxu0 %v675
    %v711 = vpop.f32.mrb[0].mxu0
    %v712 = vadd.f32 %v459, %v711
    %v713 = vpop.f32.mrb[0].mxu0
    %v714 = vpop.f32.mrb[0].mxu0
    %v715 = vpop.f32.mrb[0].mxu0
    %716 = vdwg.mxu0
    %v717 = vadd.f32 %v421, %v712
    %v718 = vxor.u32 %v717, 2147483648
    %v719 = vmul.f32 %v718, 1.442695
    %v720 = vpow.pop %v719
    %v721 = vadd.f32 %v720, 1.0
    %v722 = vrcp.pop %v721
    %v723 = vmul.f32 1.0, %v722
    %v726 = vunpack.c.l.s4 1983009808
    %v727 = vunpack.c.0.s8 %v726
    %v728 = vlaneseq
    %v729 = vshrl.u32 %v728, 7
    %v730 = vsub.s32 %v727, %v729
    %v731 = vrot.slane %v712, %v730
    %732 = vrot.lane.b32.xlu0 %v731, 64
    %v733 = vpop.permute.xlu0 %732
    %v735 = vmul.f32 %v723, %v733
    %737 = vrot.lane.b32.xlu0 %v735, 64
    %v738 = vpop.permute.xlu0 %737
    %v740 = vadd.f32 %v421, %v738
    %v741 = vtanh.pop %v740
    %v742 = vsub.f32 1.0, %v723
    %744 = vrot.lane.b32.xlu0 %v741, 96
    %v745 = vpop.permute.xlu0 %744
    %v747 = vmul.f32 %v742, %v745
    %v750 = vunpack.c.l.s4 1983009808
    %v751 = vunpack.c.0.s8 %v750
    %v752 = vlaneseq
    %v753 = vshrl.u32 %v752, 7
    %v754 = vsub.s32 %v751, %v753
    %v755 = vrot.slane %v672, %v754
    %756 = vrot.lane.b32.xlu0 %v755, 32
    %v757 = vpop.permute.xlu0 %756
    %v759 = vmul.f32 %v723, %v757
    %v760 = vadd.f32 %v747, %v759
    %vm761 = vcmp.gt.s32.totalorder %v454, 2
    %v762 = vsel %vm761, 1, 0
    %763 = vset.pattern.permute.xlu0 0
    %764 = vperm.xlu0 %763, %v762
    %v765 = vpop.permute.xlu0 %764
    %vm766 = vcmp.eq.s32.totalorder %v765, 1
    %v769 = vunpack.c.l.s4 1983009808
    %v770 = vunpack.c.0.s8 %v769
    %v771 = vlaneseq
    %v772 = vshrl.u32 %v771, 7
    %v773 = vsub.s32 %v770, %v772
    %v774 = vrot.slane %v760, %v773
    %775 = vrot.lane.b32.xlu0 %v774, 96
    %v776 = vpop.permute.xlu0 %775
    %v778 = vsel %vm766, %v776, %v672
    %v779 = vpack.c.bf16 %v778, %v778
    %v781 = vsel %vm226, %v779, 0
    %783 = vmatprep.subr.bf16.mxu0 0
    %784 = vmatpush1.bf16.msra.mxu0 %v469
    %785 = vmatprep.subr.bf16.mxu0 0
    %786 = vmatpush1.bf16.msra.mxu0 %v470
    %787 = vmatprep.subr.bf16.mxu0 0
    %788 = vmatpush1.bf16.msra.mxu0 0
    %789 = vmatprep.subr.bf16.mxu0 0
    %790 = vmatpush1.bf16.msra.mxu0 0
    %791 = vmatprep.subr.bf16.mxu0 0
    %792 = vmatpush1.bf16.msra.mxu0 0
    %793 = vmatprep.subr.bf16.mxu0 0
    %794 = vmatpush1.bf16.msra.mxu0 0
    %795 = vmatprep.subr.bf16.mxu0 0
    %796 = vmatpush1.bf16.msra.mxu0 0
    %797 = vmatprep.subr.bf16.mxu0 0
    %798 = vmatpush1.bf16.msra.mxu0 0
    %799 = vmatprep.subr.bf16.mxu0 0
    %800 = vmatpush1.bf16.msra.mxu0 0
    %801 = vmatprep.subr.bf16.mxu0 0
    %802 = vmatpush1.bf16.msra.mxu0 0
    %803 = vmatprep.subr.bf16.mxu0 0
    %804 = vmatpush1.bf16.msra.mxu0 0
    %805 = vmatprep.subr.bf16.mxu0 0
    %806 = vmatpush1.bf16.msra.mxu0 0
    %807 = vmatprep.subr.bf16.mxu0 0
    %808 = vmatpush1.bf16.msra.mxu0 0
    %809 = vmatprep.subr.bf16.mxu0 0
    %810 = vmatpush1.bf16.msra.mxu0 0
    %811 = vmatprep.subr.bf16.mxu0 0
    %812 = vmatpush1.bf16.msra.mxu0 0
    %813 = vmatprep.subr.bf16.mxu0 0
    %814 = vmatpush1.bf16.msra.mxu0 0
    %815 = vmatprep.mubr.bf16.mxu0 0
    %816 = vmatmul.mubr.bf16.gmra.mrb[0].mxu0 %v781
    %v817 = vpop.f32.mrb[0].mxu0
    %v818 = vadd.f32 %v459, %v817
    %v819 = vpop.f32.mrb[0].mxu0
    %v820 = vpop.f32.mrb[0].mxu0
    %v821 = vpop.f32.mrb[0].mxu0
    %822 = vdwg.mxu0
    %v823 = vadd.f32 %v423, %v818
    %v824 = vxor.u32 %v823, 2147483648
    %v825 = vmul.f32 %v824, 1.442695
    %v826 = vpow.pop %v825
    %v827 = vadd.f32 %v826, 1.0
    %v828 = vrcp.pop %v827
    %v829 = vmul.f32 1.0, %v828
    %v832 = vunpack.c.l.s4 1983009808
    %v833 = vunpack.c.0.s8 %v832
    %v834 = vlaneseq
    %v835 = vshrl.u32 %v834, 7
    %v836 = vsub.s32 %v833, %v835
    %v837 = vrot.slane %v818, %v836
    %838 = vrot.lane.b32.xlu0 %v837, 64
    %v839 = vpop.permute.xlu0 %838
    %v841 = vmul.f32 %v829, %v839
    %843 = vrot.lane.b32.xlu0 %v841, 64
    %v844 = vpop.permute.xlu0 %843
    %v846 = vadd.f32 %v423, %v844
    %v847 = vtanh.pop %v846
    %v848 = vsub.f32 1.0, %v829
    %850 = vrot.lane.b32.xlu0 %v847, 96
    %v851 = vpop.permute.xlu0 %850
    %v853 = vmul.f32 %v848, %v851
    %v856 = vunpack.c.l.s4 1983009808
    %v857 = vunpack.c.0.s8 %v856
    %v858 = vlaneseq
    %v859 = vshrl.u32 %v858, 7
    %v860 = vsub.s32 %v857, %v859
    %v861 = vrot.slane %v778, %v860
    %862 = vrot.lane.b32.xlu0 %v861, 32
    %v863 = vpop.permute.xlu0 %862
    %v865 = vmul.f32 %v829, %v863
    %v866 = vadd.f32 %v853, %v865
    %vm867 = vcmp.gt.s32.totalorder %v454, 3
    %v868 = vsel %vm867, 1, 0
    %869 = vset.pattern.permute.xlu0 0
    %870 = vperm.xlu0 %869, %v868
    %v871 = vpop.permute.xlu0 %870
    %vm872 = vcmp.eq.s32.totalorder %v871, 1
    %v875 = vunpack.c.l.s4 1983009808
    %v876 = vunpack.c.0.s8 %v875
    %v877 = vlaneseq
    %v878 = vshrl.u32 %v877, 7
    %v879 = vsub.s32 %v876, %v878
    %v880 = vrot.slane %v866, %v879
    %881 = vrot.lane.b32.xlu0 %v880, 96
    %v882 = vpop.permute.xlu0 %881
    %v884 = vsel %vm872, %v882, %v778
    %v885 = vpack.c.bf16 %v884, %v884
    %v887 = vsel %vm226, %v885, 0
    %889 = vmatprep.subr.bf16.mxu0 0
    %890 = vmatpush1.bf16.msra.mxu0 %v469
    %891 = vmatprep.subr.bf16.mxu0 0
    %892 = vmatpush1.bf16.msra.mxu0 %v470
    %893 = vmatprep.subr.bf16.mxu0 0
    %894 = vmatpush1.bf16.msra.mxu0 0
    %895 = vmatprep.subr.bf16.mxu0 0
    %896 = vmatpush1.bf16.msra.mxu0 0
    %897 = vmatprep.subr.bf16.mxu0 0
    %898 = vmatpush1.bf16.msra.mxu0 0
    %899 = vmatprep.subr.bf16.mxu0 0
    %900 = vmatpush1.bf16.msra.mxu0 0
    %901 = vmatprep.subr.bf16.mxu0 0
    %902 = vmatpush1.bf16.msra.mxu0 0
    %903 = vmatprep.subr.bf16.mxu0 0
    %904 = vmatpush1.bf16.msra.mxu0 0
    %905 = vmatprep.subr.bf16.mxu0 0
    %906 = vmatpush1.bf16.msra.mxu0 0
    %907 = vmatprep.subr.bf16.mxu0 0
    %908 = vmatpush1.bf16.msra.mxu0 0
    %909 = vmatprep.subr.bf16.mxu0 0
    %910 = vmatpush1.bf16.msra.mxu0 0
    %911 = vmatprep.subr.bf16.mxu0 0
    %912 = vmatpush1.bf16.msra.mxu0 0
    %913 = vmatprep.subr.bf16.mxu0 0
    %914 = vmatpush1.bf16.msra.mxu0 0
    %915 = vmatprep.subr.bf16.mxu0 0
    %916 = vmatpush1.bf16.msra.mxu0 0
    %917 = vmatprep.subr.bf16.mxu0 0
    %918 = vmatpush1.bf16.msra.mxu0 0
    %919 = vmatprep.subr.bf16.mxu0 0
    %920 = vmatpush1.bf16.msra.mxu0 0
    %921 = vmatprep.mubr.bf16.mxu0 0
    %922 = vmatmul.mubr.bf16.gmra.mrb[0].mxu0 %v887
    %v923 = vpop.f32.mrb[0].mxu0
    %v924 = vadd.f32 %v459, %v923
    %v925 = vpop.f32.mrb[0].mxu0
    %v926 = vpop.f32.mrb[0].mxu0
    %v927 = vpop.f32.mrb[0].mxu0
    %928 = vdwg.mxu0
    %v929 = vadd.f32 %v431, %v924
    %v930 = vxor.u32 %v929, 2147483648
    %v931 = vmul.f32 %v930, 1.442695
    %v932 = vpow.pop %v931
    %v933 = vadd.f32 %v932, 1.0
    %v934 = vrcp.pop %v933
    %v935 = vmul.f32 1.0, %v934
    %v938 = vunpack.c.l.s4 1983009808
    %v939 = vunpack.c.0.s8 %v938
    %v940 = vlaneseq
    %v941 = vshrl.u32 %v940, 7
    %v942 = vsub.s32 %v939, %v941
    %v943 = vrot.slane %v924, %v942
    %944 = vrot.lane.b32.xlu0 %v943, 64
    %v945 = vpop.permute.xlu0 %944
    %v947 = vmul.f32 %v935, %v945
    %949 = vrot.lane.b32.xlu0 %v947, 64
    %v950 = vpop.permute.xlu0 %949
    %v952 = vadd.f32 %v431, %v950
    %v953 = vtanh.pop %v952
    %v954 = vsub.f32 1.0, %v935
    %956 = vrot.lane.b32.xlu0 %v953, 96
    %v957 = vpop.permute.xlu0 %956
    %v959 = vmul.f32 %v954, %v957
    %v962 = vunpack.c.l.s4 1983009808
    %v963 = vunpack.c.0.s8 %v962
    %v964 = vlaneseq
    %v965 = vshrl.u32 %v964, 7
    %v966 = vsub.s32 %v963, %v965
    %v967 = vrot.slane %v884, %v966
    %968 = vrot.lane.b32.xlu0 %v967, 32
    %v969 = vpop.permute.xlu0 %968
    %v971 = vmul.f32 %v935, %v969
    %v972 = vadd.f32 %v959, %v971
    %vm973 = vcmp.gt.s32.totalorder %v454, 4
    %v974 = vsel %vm973, 1, 0
    %975 = vset.pattern.permute.xlu0 0
    %976 = vperm.xlu0 %975, %v974
    %v977 = vpop.permute.xlu0 %976
    %vm978 = vcmp.eq.s32.totalorder %v977, 1
    %v981 = vunpack.c.l.s4 1983009808
    %v982 = vunpack.c.0.s8 %v981
    %v983 = vlaneseq
    %v984 = vshrl.u32 %v983, 7
    %v985 = vsub.s32 %v982, %v984
    %v986 = vrot.slane %v972, %v985
    %987 = vrot.lane.b32.xlu0 %v986, 96
    %v988 = vpop.permute.xlu0 %987
    %v990 = vsel %vm978, %v988, %v884
    %v991 = vpack.c.bf16 %v990, %v990
    %v993 = vsel %vm226, %v991, 0
    %995 = vmatprep.subr.bf16.mxu0 0
    %996 = vmatpush1.bf16.msra.mxu0 %v469
    %997 = vmatprep.subr.bf16.mxu0 0
    %998 = vmatpush1.bf16.msra.mxu0 %v470
    %999 = vmatprep.subr.bf16.mxu0 0
    %1000 = vmatpush1.bf16.msra.mxu0 0
    %1001 = vmatprep.subr.bf16.mxu0 0
    %1002 = vmatpush1.bf16.msra.mxu0 0
    %1003 = vmatprep.subr.bf16.mxu0 0
    %1004 = vmatpush1.bf16.msra.mxu0 0
    %1005 = vmatprep.subr.bf16.mxu0 0
    %1006 = vmatpush1.bf16.msra.mxu0 0
    %1007 = vmatprep.subr.bf16.mxu0 0
    %1008 = vmatpush1.bf16.msra.mxu0 0
    %1009 = vmatprep.subr.bf16.mxu0 0
    %1010 = vmatpush1.bf16.msra.mxu0 0
    %1011 = vmatprep.subr.bf16.mxu0 0
    %1012 = vmatpush1.bf16.msra.mxu0 0
    %1013 = vmatprep.subr.bf16.mxu0 0
    %1014 = vmatpush1.bf16.msra.mxu0 0
    %1015 = vmatprep.subr.bf16.mxu0 0
    %1016 = vmatpush1.bf16.msra.mxu0 0
    %1017 = vmatprep.subr.bf16.mxu0 0
    %1018 = vmatpush1.bf16.msra.mxu0 0
    %1019 = vmatprep.subr.bf16.mxu0 0
    %1020 = vmatpush1.bf16.msra.mxu0 0
    %1021 = vmatprep.subr.bf16.mxu0 0
    %1022 = vmatpush1.bf16.msra.mxu0 0
    %1023 = vmatprep.subr.bf16.mxu0 0
    %1024 = vmatpush1.bf16.msra.mxu0 0
    %1025 = vmatprep.subr.bf16.mxu0 0
    %1026 = vmatpush1.bf16.msra.mxu0 0
    %1027 = vmatprep.mubr.bf16.mxu0 0
    %1028 = vmatmul.mubr.bf16.gmra.mrb[0].mxu0 %v993
    %v1029 = vpop.f32.mrb[0].mxu0
    %v1030 = vadd.f32 %v459, %v1029
    %v1031 = vpop.f32.mrb[0].mxu0
    %v1032 = vpop.f32.mrb[0].mxu0
    %v1033 = vpop.f32.mrb[0].mxu0
    %1034 = vdwg.mxu0
    %v1035 = vadd.f32 %v439, %v1030
    %v1036 = vxor.u32 %v1035, 2147483648
    %v1037 = vmul.f32 %v1036, 1.442695
    %v1038 = vpow.pop %v1037
    %v1039 = vadd.f32 %v1038, 1.0
    %v1040 = vrcp.pop %v1039
    %v1041 = vmul.f32 1.0, %v1040
    %v1044 = vunpack.c.l.s4 1983009808
    %v1045 = vunpack.c.0.s8 %v1044
    %v1046 = vlaneseq
    %v1047 = vshrl.u32 %v1046, 7
    %v1048 = vsub.s32 %v1045, %v1047
    %v1049 = vrot.slane %v1030, %v1048
    %1050 = vrot.lane.b32.xlu0 %v1049, 64
    %v1051 = vpop.permute.xlu0 %1050
    %v1053 = vmul.f32 %v1041, %v1051
    %1055 = vrot.lane.b32.xlu0 %v1053, 64
    %v1056 = vpop.permute.xlu0 %1055
    %v1058 = vadd.f32 %v439, %v1056
    %v1059 = vtanh.pop %v1058
    %v1060 = vsub.f32 1.0, %v1041
    %1062 = vrot.lane.b32.xlu0 %v1059, 96
    %v1063 = vpop.permute.xlu0 %1062
    %v1065 = vmul.f32 %v1060, %v1063
    %v1068 = vunpack.c.l.s4 1983009808
    %v1069 = vunpack.c.0.s8 %v1068
    %v1070 = vlaneseq
    %v1071 = vshrl.u32 %v1070, 7
    %v1072 = vsub.s32 %v1069, %v1071
    %v1073 = vrot.slane %v990, %v1072
    %1074 = vrot.lane.b32.xlu0 %v1073, 32
    %v1075 = vpop.permute.xlu0 %1074
    %v1077 = vmul.f32 %v1041, %v1075
    %v1078 = vadd.f32 %v1065, %v1077
    %vm1079 = vcmp.gt.s32.totalorder %v454, 5
    %v1080 = vsel %vm1079, 1, 0
    %1081 = vset.pattern.permute.xlu0 0
    %1082 = vperm.xlu0 %1081, %v1080
    %v1083 = vpop.permute.xlu0 %1082
    %vm1084 = vcmp.eq.s32.totalorder %v1083, 1
    %v1087 = vunpack.c.l.s4 1983009808
    %v1088 = vunpack.c.0.s8 %v1087
    %v1089 = vlaneseq
    %v1090 = vshrl.u32 %v1089, 7
    %v1091 = vsub.s32 %v1088, %v1090
    %v1092 = vrot.slane %v1078, %v1091
    %1093 = vrot.lane.b32.xlu0 %v1092, 96
    %v1094 = vpop.permute.xlu0 %1093
    %v1096 = vsel %vm1084, %v1094, %v990
    %v1097 = vpack.c.bf16 %v1096, %v1096
    %v1099 = vsel %vm226, %v1097, 0
    %1101 = vmatprep.subr.bf16.mxu0 0
    %1102 = vmatpush1.bf16.msra.mxu0 %v469
    %1103 = vmatprep.subr.bf16.mxu0 0
    %1104 = vmatpush1.bf16.msra.mxu0 %v470
    %1105 = vmatprep.subr.bf16.mxu0 0
    %1106 = vmatpush1.bf16.msra.mxu0 0
    %1107 = vmatprep.subr.bf16.mxu0 0
    %1108 = vmatpush1.bf16.msra.mxu0 0
    %1109 = vmatprep.subr.bf16.mxu0 0
    %1110 = vmatpush1.bf16.msra.mxu0 0
    %1111 = vmatprep.subr.bf16.mxu0 0
    %1112 = vmatpush1.bf16.msra.mxu0 0
    %1113 = vmatprep.subr.bf16.mxu0 0
    %1114 = vmatpush1.bf16.msra.mxu0 0
    %1115 = vmatprep.subr.bf16.mxu0 0
    %1116 = vmatpush1.bf16.msra.mxu0 0
    %1117 = vmatprep.subr.bf16.mxu0 0
    %1118 = vmatpush1.bf16.msra.mxu0 0
    %1119 = vmatprep.subr.bf16.mxu0 0
    %1120 = vmatpush1.bf16.msra.mxu0 0
    %1121 = vmatprep.subr.bf16.mxu0 0
    %1122 = vmatpush1.bf16.msra.mxu0 0
    %1123 = vmatprep.subr.bf16.mxu0 0
    %1124 = vmatpush1.bf16.msra.mxu0 0
    %1125 = vmatprep.subr.bf16.mxu0 0
    %1126 = vmatpush1.bf16.msra.mxu0 0
    %1127 = vmatprep.subr.bf16.mxu0 0
    %1128 = vmatpush1.bf16.msra.mxu0 0
    %1129 = vmatprep.subr.bf16.mxu0 0
    %1130 = vmatpush1.bf16.msra.mxu0 0
    %1131 = vmatprep.subr.bf16.mxu0 0
    %1132 = vmatpush1.bf16.msra.mxu0 0
    %1133 = vmatprep.mubr.bf16.mxu0 0
    %1134 = vmatmul.mubr.bf16.gmra.mrb[0].mxu0 %v1099
    %v1135 = vpop.f32.mrb[0].mxu0
    %v1136 = vadd.f32 %v459, %v1135
    %v1137 = vpop.f32.mrb[0].mxu0
    %v1138 = vpop.f32.mrb[0].mxu0
    %v1139 = vpop.f32.mrb[0].mxu0
    %1140 = vdwg.mxu0
    %v1141 = vadd.f32 %v438, %v1136
    %v1142 = vxor.u32 %v1141, 2147483648
    %v1143 = vmul.f32 %v1142, 1.442695
    %v1144 = vpow.pop %v1143
    %v1145 = vadd.f32 %v1144, 1.0
    %v1146 = vrcp.pop %v1145
    %v1147 = vmul.f32 1.0, %v1146
    %v1150 = vunpack.c.l.s4 1983009808
    %v1151 = vunpack.c.0.s8 %v1150
    %v1152 = vlaneseq
    %v1153 = vshrl.u32 %v1152, 7
    %v1154 = vsub.s32 %v1151, %v1153
    %v1155 = vrot.slane %v1136, %v1154
    %1156 = vrot.lane.b32.xlu0 %v1155, 64
    %v1157 = vpop.permute.xlu0 %1156
    %v1159 = vmul.f32 %v1147, %v1157
    %1161 = vrot.lane.b32.xlu0 %v1159, 64
    %v1162 = vpop.permute.xlu0 %1161
    %v1164 = vadd.f32 %v438, %v1162
    %v1165 = vtanh.pop %v1164
    %v1166 = vsub.f32 1.0, %v1147
    %1168 = vrot.lane.b32.xlu0 %v1165, 96
    %v1169 = vpop.permute.xlu0 %1168
    %v1171 = vmul.f32 %v1166, %v1169
    %v1174 = vunpack.c.l.s4 1983009808
    %v1175 = vunpack.c.0.s8 %v1174
    %v1176 = vlaneseq
    %v1177 = vshrl.u32 %v1176, 7
    %v1178 = vsub.s32 %v1175, %v1177
    %v1179 = vrot.slane %v1096, %v1178
    %1180 = vrot.lane.b32.xlu0 %v1179, 32
    %v1181 = vpop.permute.xlu0 %1180
    %v1183 = vmul.f32 %v1147, %v1181
    %v1184 = vadd.f32 %v1171, %v1183
    %vm1185 = vcmp.gt.s32.totalorder %v454, 6
    %v1186 = vsel %vm1185, 1, 0
    %1187 = vset.pattern.permute.xlu0 0
    %1188 = vperm.xlu0 %1187, %v1186
    %v1189 = vpop.permute.xlu0 %1188
    %vm1190 = vcmp.eq.s32.totalorder %v1189, 1
    %v1193 = vunpack.c.l.s4 1983009808
    %v1194 = vunpack.c.0.s8 %v1193
    %v1195 = vlaneseq
    %v1196 = vshrl.u32 %v1195, 7
    %v1197 = vsub.s32 %v1194, %v1196
    %v1198 = vrot.slane %v1184, %v1197
    %1199 = vrot.lane.b32.xlu0 %v1198, 96
    %v1200 = vpop.permute.xlu0 %1199
    %v1202 = vsel %vm1190, %v1200, %v1096
    %v1203 = vpack.c.bf16 %v1202, %v1202
    %v1205 = vsel %vm226, %v1203, 0
    %1207 = vmatprep.subr.bf16.mxu0 0
    %1208 = vmatpush1.bf16.msra.mxu0 %v469
    %1209 = vmatprep.subr.bf16.mxu0 0
    %1210 = vmatpush1.bf16.msra.mxu0 %v470
    %1211 = vmatprep.subr.bf16.mxu0 0
    %1212 = vmatpush1.bf16.msra.mxu0 0
    %1213 = vmatprep.subr.bf16.mxu0 0
    %1214 = vmatpush1.bf16.msra.mxu0 0
    %1215 = vmatprep.subr.bf16.mxu0 0
    %1216 = vmatpush1.bf16.msra.mxu0 0
    %1217 = vmatprep.subr.bf16.mxu0 0
    %1218 = vmatpush1.bf16.msra.mxu0 0
    %1219 = vmatprep.subr.bf16.mxu0 0
    %1220 = vmatpush1.bf16.msra.mxu0 0
    %1221 = vmatprep.subr.bf16.mxu0 0
    %1222 = vmatpush1.bf16.msra.mxu0 0
    %1223 = vmatprep.subr.bf16.mxu0 0
    %1224 = vmatpush1.bf16.msra.mxu0 0
    %1225 = vmatprep.subr.bf16.mxu0 0
    %1226 = vmatpush1.bf16.msra.mxu0 0
    %1227 = vmatprep.subr.bf16.mxu0 0
    %1228 = vmatpush1.bf16.msra.mxu0 0
    %1229 = vmatprep.subr.bf16.mxu0 0
    %1230 = vmatpush1.bf16.msra.mxu0 0
    %1231 = vmatprep.subr.bf16.mxu0 0
    %1232 = vmatpush1.bf16.msra.mxu0 0
    %1233 = vmatprep.subr.bf16.mxu0 0
    %1234 = vmatpush1.bf16.msra.mxu0 0
    %1235 = vmatprep.subr.bf16.mxu0 0
    %1236 = vmatpush1.bf16.msra.mxu0 0
    %1237 = vmatprep.subr.bf16.mxu0 0
    %1238 = vmatpush1.bf16.msra.mxu0 0
    %1239 = vmatprep.mubr.bf16.mxu0 0
    %1240 = vmatmul.mubr.bf16.gmra.mrb[0].mxu0 %v1205
    %v1241 = vpop.f32.mrb[0].mxu0
    %v1242 = vadd.f32 %v459, %v1241
    %v1243 = vpop.f32.mrb[0].mxu0
    %v1244 = vpop.f32.mrb[0].mxu0
    %v1245 = vpop.f32.mrb[0].mxu0
    %1246 = vdwg.mxu0
    %v1247 = vadd.f32 %v440, %v1242
    %v1248 = vxor.u32 %v1247, 2147483648
    %v1249 = vmul.f32 %v1248, 1.442695
    %v1250 = vpow.pop %v1249
    %v1251 = vadd.f32 %v1250, 1.0
    %v1252 = vrcp.pop %v1251
    %v1253 = vmul.f32 1.0, %v1252
    %v1256 = vunpack.c.l.s4 1983009808
    %v1257 = vunpack.c.0.s8 %v1256
    %v1258 = vlaneseq
    %v1259 = vshrl.u32 %v1258, 7
    %v1260 = vsub.s32 %v1257, %v1259
    %v1261 = vrot.slane %v1242, %v1260
    %1262 = vrot.lane.b32.xlu0 %v1261, 64
    %v1263 = vpop.permute.xlu0 %1262
    %v1265 = vmul.f32 %v1253, %v1263
    %1267 = vrot.lane.b32.xlu0 %v1265, 64
    %v1268 = vpop.permute.xlu0 %1267
    %v1270 = vadd.f32 %v440, %v1268
    %v1271 = vtanh.pop %v1270
    %v1272 = vsub.f32 1.0, %v1253
    %1274 = vrot.lane.b32.xlu0 %v1271, 96
    %v1275 = vpop.permute.xlu0 %1274
    %v1277 = vmul.f32 %v1272, %v1275
    %v1280 = vunpack.c.l.s4 1983009808
    %v1281 = vunpack.c.0.s8 %v1280
    %v1282 = vlaneseq
    %v1283 = vshrl.u32 %v1282, 7
    %v1284 = vsub.s32 %v1281, %v1283
    %v1285 = vrot.slane %v1202, %v1284
    %1286 = vrot.lane.b32.xlu0 %v1285, 32
    %v1287 = vpop.permute.xlu0 %1286
    %v1289 = vmul.f32 %v1253, %v1287
    %v1290 = vadd.f32 %v1277, %v1289
    %vm1291 = vcmp.gt.s32.totalorder %v454, 7
    %v1292 = vsel %vm1291, 1, 0
    %1293 = vset.pattern.permute.xlu0 0
    %1294 = vperm.xlu0 %1293, %v1292
    %v1295 = vpop.permute.xlu0 %1294
    %vm1296 = vcmp.eq.s32.totalorder %v1295, 1
    %v1299 = vunpack.c.l.s4 1983009808
    %v1300 = vunpack.c.0.s8 %v1299
    %v1301 = vlaneseq
    %v1302 = vshrl.u32 %v1301, 7
    %v1303 = vsub.s32 %v1300, %v1302
    %v1304 = vrot.slane %v1290, %v1303
    %1305 = vrot.lane.b32.xlu0 %v1304, 96
    %v1306 = vpop.permute.xlu0 %1305
    %v1308 = vsel %vm1296, %v1306, %v1202
    %v1309 = vpack.c.bf16 %v1308, %v1308
    %v1310 = vld [vmem:[%s9] sm:$0xf]
    %v1311 = vld [vmem:[%s9 + $0x4] sm:$0xf]
    %v1312 = vld [vmem:[%s9 + $0x8] sm:$0xf]
    %v1313 = vld [vmem:[%s9 + $0xc] sm:$0xf]
    %v1318 = vunpack.c.l.b16 %v1310
    %v1319 = vunpack.c.l.b16 %v1311
    %v1320 = vunpack.c.l.b16 %v1312
    %v1321 = vunpack.c.l.b16 %v1313
    %v1322 = vpack.c.b16 %v1319, %v1318
    %v1323 = vpack.c.b16 %v1321, %v1320
    %v1327 = vsel %vm226, %v1309, 0
    %1329 = vmatprep.subr.bf16.mxu0 0
    %1330 = vmatpush1.bf16.msra.mxu0 %v1322
    %1331 = vmatprep.subr.bf16.mxu0 0
    %1332 = vmatpush1.bf16.msra.mxu0 %v1323
    %1333 = vmatprep.subr.bf16.mxu0 0
    %1334 = vmatpush1.bf16.msra.mxu0 0
    %1335 = vmatprep.subr.bf16.mxu0 0
    %1336 = vmatpush1.bf16.msra.mxu0 0
    %1337 = vmatprep.subr.bf16.mxu0 0
    %1338 = vmatpush1.bf16.msra.mxu0 0
    %1339 = vmatprep.subr.bf16.mxu0 0
    %1340 = vmatpush1.bf16.msra.mxu0 0
    %1341 = vmatprep.subr.bf16.mxu0 0
    %1342 = vmatpush1.bf16.msra.mxu0 0
    %1343 = vmatprep.subr.bf16.mxu0 0
    %1344 = vmatpush1.bf16.msra.mxu0 0
    %1345 = vmatprep.subr.bf16.mxu0 0
    %1346 = vmatpush1.bf16.msra.mxu0 0
    %1347 = vmatprep.subr.bf16.mxu0 0
    %1348 = vmatpush1.bf16.msra.mxu0 0
    %1349 = vmatprep.subr.bf16.mxu0 0
    %1350 = vmatpush1.bf16.msra.mxu0 0
    %1351 = vmatprep.subr.bf16.mxu0 0
    %1352 = vmatpush1.bf16.msra.mxu0 0
    %1353 = vmatprep.subr.bf16.mxu0 0
    %1354 = vmatpush1.bf16.msra.mxu0 0
    %1355 = vmatprep.subr.bf16.mxu0 0
    %1356 = vmatpush1.bf16.msra.mxu0 0
    %1357 = vmatprep.subr.bf16.mxu0 0
    %1358 = vmatpush1.bf16.msra.mxu0 0
    %1359 = vmatprep.subr.bf16.mxu0 0
    %1360 = vmatpush1.bf16.msra.mxu0 0
    %1361 = vmatprep.mubr.bf16.mxu0 0
    %1362 = vmatmul.mubr.bf16.gmra.mrb[0].mxu0 %v1327
    %v1363 = vpop.f32.mrb[0].mxu0
    %v1364 = vadd.f32 0.0, %v1363
    %v1365 = vpop.f32.mrb[0].mxu0
    %v1366 = vpop.f32.mrb[0].mxu0
    %v1367 = vpop.f32.mrb[0].mxu0
    %1368 = vdwg.mxu0
    %v1370 = vcombine.high %v337, %v337
    %v1374 = vunpack.c.l.s4 1966171168
    %v1375 = vunpack.c.0.s8 %v1374
    %v1376 = vlaneseq
    %v1377 = vshrl.u32 %v1376, 7
    %v1378 = vsub.s32 %v1375, %v1377
    %v1379 = vrot.slane %v1364, %v1378
    %v1380 = vcombine.high %v1379, %v1379
    %v1382 = vunpack.c.l.s4 1966171168
    %v1383 = vunpack.c.0.s8 %v1382
    %v1384 = vlaneseq
    %v1385 = vshrl.u32 %v1384, 7
    %v1386 = vsub.s32 %v1383, %v1385
    %v1387 = vrot.slane %v1379, %v1386
    %v1389 = vunpack.c.l.s4 1966171168
    %v1390 = vunpack.c.0.s8 %v1389
    %v1391 = vlaneseq
    %v1392 = vshrl.u32 %v1391, 7
    %v1393 = vsub.s32 %v1390, %v1392
    %v1394 = vrot.slane %v1380, %v1393
    %v1395 = vlaneseq
    %v1396 = vshrl.u32 %v1395, 7
    %v1397 = vsub.s32 0, %v1396
    %v1398 = vrot.slane %v1387, %v1397
    %v1399 = vlaneseq
    %v1400 = vshrl.u32 %v1399, 7
    %v1401 = vsub.s32 0, %v1400
    %v1402 = vrot.slane %v1394, %v1401
    %v1405 = vmul.f32 %v337, %v1398
    %v1406 = vmul.f32 %v1370, %v1402
    %vm1407 = vcmask 257024
    %v1408 = vsel %vm1407, %v1405, 0.0
    %1409 = vadd.xlane.f32.xlu0 %v1408
    %v1410 = vpop.xlane.xlu0 %1409
    %v1411 = vsel %vm1407, %v1406, 0.0
    %1412 = vadd.xlane.f32.xlu0 %v1411
    %v1413 = vpop.xlane.xlu0 %1412
    %v1416 = vlaneseq
    %v1417 = vand.u32 %v1416, 127
    %v1418 = vlaneseq
    %v1419 = vshrl.u32 %v1418, 7
    %v1420 = vsub.s32 %v1417, %v1419
    %v1421 = vrot.slane %v1410, %v1420
    %v1422 = vlaneseq
    %v1423 = vshrl.u32 %v1422, 7
    %v1424 = vsub.s32 %v1417, %v1423
    %v1425 = vrot.slane %v1413, %v1424
    %vm1426 = vcmask 1041409
    %v1427 = vsel %vm1426, %v1425, %v1421
    %vm1429 = vcmask 25600
    %1430 = vst.msk [vmem:[#allocation2] sm:$0x3] %vm1429, %v1427
    // Predicated region
    $region42: #{ecg_listener_forward.7} parent=1 // pred_check
      _
    $region43: #{ecg_listener_forward.7} parent=1 // pred_check_branch
      %1432 = sbr.rel (0) target = $region45
    $region44: #{ecg_listener_forward.7} parent=1 // pred_region
      %s1434 = ssub.s32 32, 32
      %1435 = vsyncadd [#allocation3], %s1434
      %s1437 = sshll.u32 [#allocation2], 4
      %s1438 = int_to_ptr.vmem [resolvable:$true] %s1437
      %1440 = dma.vmem_to_hbm [thread:$0]  %s1438, 32, %s10, [#allocation3]
    $region45: #{ecg_listener_forward.7} parent=1 // pred_fallthru
      _
    // Predicated region
    $region46: #{ecg_listener_forward.7} parent=1 // pred_check
      _
    $region47: #{ecg_listener_forward.7} parent=1 // pred_check_branch
      %1442 = sbr.rel (0) target = $region49
    $region48: #{ecg_listener_forward.7} parent=1 // pred_region
      %1443 = dma.done [#allocation3], 32
    $region49: #{ecg_listener_forward.7} parent=1 // pred_fallthru
      _
    %1444 = vsyncpa [#allocation3], 1

</llo_original>
